<compile_context>
chip_gen: v7x
topology: tpu7x:2x2x1
jax: 0.10.0
libtpu: 0.0.40
codegen_flags: <defaults>
</compile_context>

<pallas_src>
import functools

import jax
import jax.numpy as jnp
from jax.experimental import pallas as pl
from jax.experimental.pallas import tpu as pltpu


# ----------------------------------------------------------------------------
# Fused kernel: full ST_MDN forward for `Bb` samples per grid step
# ----------------------------------------------------------------------------
def _st_mdn_fused_kernel(
    xl_ref, xr_ref, a_ref,
    tc1_wt, tc1_bt, tc2_wt, tc2_bt, tc3_wt, tc3_bt, tmdn_wt, tmdn_bt,
    sc1_w, sc1_b, sc2_w, sc2_b, sc3_w, sc3_b, smdn_w, smdn_b,
    pi_ref, pg_ref, mg_ref, sg_ref,
    *, N, T, K, Bb):

    def dot(a, b):
        return jnp.dot(a, b, preferred_element_type=jnp.float32)

    def relu(v):
        return jnp.maximum(v, 0.0)

    def softplus(v):  # numerically stable softplus
        return jnp.maximum(v, 0.0) + jnp.log1p(jnp.exp(-jnp.abs(v)))

    def sigmoid(v):   # numerically stable; approx reciprocal -> EUP slot (otherwise idle)
        e = jnp.exp(-jnp.abs(v))
        r = pl.reciprocal(1.0 + e, approx=True)
        return jnp.where(v >= 0.0, r, e * r)

    def lane_cat(parts):
        return parts[0] if len(parts) == 1 else jnp.concatenate(parts, axis=1)

    def row_cat(parts):
        return parts[0] if len(parts) == 1 else jnp.concatenate(parts, axis=0)

    x_lanes = xl_ref[0]                                 # (N, Bb*T)   samples along lanes
    x_rows = xr_ref[0]                                  # (Bb*N, T)   samples along rows
    a_stack = a_ref[...]                                # (2N, N)  = [A_q ; A_h]

    # ---- temporal path: TC1 -> TC2 -> TC3 -> fused TMDN head, lane-batched over Bb ------
    g = relu(dot(tc1_wt[...], x_lanes) + tc1_bt[...])   # (hid_t, Bb*T)
    g = relu(dot(tc2_wt[...], g) + tc2_bt[...])         # (rank_t, Bb*T) == temporal_factors^T
    g = relu(dot(tc3_wt[...], g) + tc3_bt[...])         # (hid_t, Bb*T)
    head_t = dot(tmdn_wt[...], g) + tmdn_bt[...]        # (N*(1+3K), Bb*T)

    # ---- spatial path: SC1 -> SC2 -> SC3 -> fused SMDN head, row-batched over Bb ---------
    def gconv(s, w_ref, b_ref):
        # relu( [s | Aq s | Ah s] @ [T0;T1;T2] + b ), 2 matmuls for all Bb samples.
        cin = s.shape[-1]
        sb = [s[b * N:(b + 1) * N, :] for b in range(Bb)]        # per-sample (N, cin)
        prop = dot(a_stack, lane_cat(sb))                        # (2N, Bb*cin)
        rows = []
        for b in range(Bb):
            c0 = b * cin
            rows.append(lane_cat([sb[b],
                                  prop[0:N, c0:c0 + cin],
                                  prop[N:2 * N, c0:c0 + cin]]))  # (N, 3*cin)
        feat = row_cat(rows)                                     # (Bb*N, 3*cin)
        return relu(dot(feat, w_ref[...]) + b_ref[...])          # (Bb*N, cout)

    s = gconv(x_rows, sc1_w, sc1_b)                     # (Bb*N, hid_s)
    s = gconv(s, sc2_w, sc2_b)                          # (Bb*N, rank_s) == space_factors
    s = gconv(s, sc3_w, sc3_b)                          # (Bb*N, hid_s)
    head_s = dot(s, smdn_w[...]) + smdn_b[...]          # (Bb*N, T*(1+3K))

    # ---- ST fusion ------------------------------------------------------------------------
    # head_t rows / head_s cols ordered [pi | pi_g (k-major) | mu_g | sigma_g].
    # Common fused layout: rows = (k, n), lanes = (b, t).  t-side slabs are contiguous row
    # slices; s-side tiles are gathered once; each output ref gets ONE store.
    def t_tiles(sec):                                   # K x (N, Bb*T), free row slices
        off = N * (1 + sec * K)
        return [head_t[off + k * N: off + (k + 1) * N, :] for k in range(K)]

    def s_tiles(sec):                                   # K x (N, Bb*T)
        off = T * (1 + sec * K)
        return [lane_cat([head_s[b * N:(b + 1) * N, off + k * T: off + (k + 1) * T]
                          for b in range(Bb)]) for k in range(K)]

    s_pi = lane_cat([head_s[b * N:(b + 1) * N, 0:T] for b in range(Bb)])   # (N, Bb*T)
    pi_ref[0] = sigmoid(head_t[0:N, :] * s_pi)

    # softmax over the K mixture components of pi_g_t * pi_g_s
    tp, sp = t_tiles(0), s_tiles(0)
    pg = [tp[k] * sp[k] for k in range(K)]
    pmax = pg[0]
    for k in range(1, K):
        pmax = jnp.maximum(pmax, pg[k])
    pexp = [jnp.exp(p - pmax) for p in pg]
    den = pexp[0]
    for k in range(1, K):
        den = den + pexp[k]
    inv_den = pl.reciprocal(den)                        # exact: keeps sum_k == 1
    pg_ref[0] = row_cat([p * inv_den for p in pexp])    # (K*N, Bb*T), single store

    tm, sm = t_tiles(1), s_tiles(1)
    mg_ref[0] = row_cat([tm[k] * sm[k] for k in range(K)])

    ts, ss = t_tiles(2), s_tiles(2)
    # 1e-6 floor keeps sigma strictly positive (review correctness concern).
    sg_ref[0] = row_cat([softplus(ts[k]) * softplus(ss[k]) + 1e-6 for k in range(K)])


# ----------------------------------------------------------------------------
# ST_MDN forward (one pallas_call)
# ----------------------------------------------------------------------------
def st_mdn_forward(params, X, A_q, A_h, *, block_b=None):
    # X: (B, num_nodes, num_timesteps, 1) — consistent with how the PyTorch forward
    # actually uses it (X[:,:,:,0] feeds graph convs with A of shape (N,N)).
    X0 = X[:, :, :, 0]                                  # (B, N, T)
    B, N, T = X0.shape
    K = (params["tmdn_wt"].shape[0] // N - 1) // 3

    if block_b is None:
        # Default: keep 2 grid steps when possible (both v7x TensorCores fed) while still
        # batching block_b samples per step.  On single-TC v5e/v6e pass block_b=B.
        block_b = B // 2 if (B >= 2 and B % 2 == 0) else 1
    assert B % block_b == 0
    nb = B // block_b
    BT = block_b * T

    # Wrapper-side layout plumbing on tiny tensors: two views of X.
    Xb = X0.reshape(nb, block_b, N, T)
    x_rows = Xb.reshape(nb, block_b * N, T)                           # samples along rows
    x_lanes = jnp.transpose(Xb, (0, 2, 1, 3)).reshape(nb, N, BT)      # samples along lanes
    a_stack = jnp.concatenate([A_q, A_h], axis=0)                     # (2N, N)

    weight_names = ("tc1_wt", "tc1_bt", "tc2_wt", "tc2_bt", "tc3_wt", "tc3_bt",
                    "tmdn_wt", "tmdn_bt",
                    "sc1_w", "sc1_b", "sc2_w", "sc2_b", "sc3_w", "sc3_b",
                    "smdn_w", "smdn_b")
    weights = [params[n] for n in weight_names]

    def full_spec(arr):                                 # grid-shared operand, full block
        nd = arr.ndim
        return pl.BlockSpec(arr.shape, lambda i, _nd=nd: (0,) * _nd)

    in_specs = ([pl.BlockSpec((1, N, BT), lambda i: (i, 0, 0)),
                 pl.BlockSpec((1, block_b * N, T), lambda i: (i, 0, 0)),
                 full_spec(a_stack)]
                + [full_spec(w) for w in weights])

    out_shape = (jax.ShapeDtypeStruct((nb, N, BT), jnp.float32),
                 jax.ShapeDtypeStruct((nb, K * N, BT), jnp.float32),
                 jax.ShapeDtypeStruct((nb, K * N, BT), jnp.float32),
                 jax.ShapeDtypeStruct((nb, K * N, BT), jnp.float32))
    out_specs = (pl.BlockSpec((1, N, BT), lambda i: (i, 0, 0)),
                 pl.BlockSpec((1, K * N, BT), lambda i: (i, 0, 0)),
                 pl.BlockSpec((1, K * N, BT), lambda i: (i, 0, 0)),
                 pl.BlockSpec((1, K * N, BT), lambda i: (i, 0, 0)))

    # Advisory cost estimate so XLA can schedule surrounding ops around this tiny call.
    hid_t, rank_t = params["tc1_wt"].shape[0], params["tc2_wt"].shape[0]
    hid_s, rank_s = params["sc1_w"].shape[1], params["sc2_w"].shape[1]
    head_t_rows, head_s_cols = params["tmdn_wt"].shape[0], params["smdn_w"].shape[1]
    flops = 2 * B * T * (hid_t * N + rank_t * hid_t + hid_t * rank_t + head_t_rows * hid_t)
    for cin, cout in ((T, hid_s), (hid_s, rank_s), (rank_s, hid_s)):
        flops += 2 * B * (2 * N * N * cin + N * 3 * cin * cout)
    flops += 2 * B * N * hid_s * head_s_cols
    transcendentals = B * N * T * (1 + 3 * K)
    bytes_accessed = 4 * (2 * B * N * T + a_stack.size
                          + sum(int(w.size) for w in weights)
                          + B * N * T * (1 + 3 * K))

    pi_raw, pg_raw, mg_raw, sg_raw = pl.pallas_call(
        functools.partial(_st_mdn_fused_kernel, N=N, T=T, K=K, Bb=block_b),
        out_shape=out_shape,
        grid=(nb,),
        in_specs=in_specs,
        out_specs=out_specs,
        compiler_params=pltpu.CompilerParams(
            dimension_semantics=("parallel",),
            vmem_limit_bytes=32 * 1024 * 1024),
        cost_estimate=pl.CostEstimate(flops=int(flops),
                                      transcendentals=int(transcendentals),
                                      bytes_accessed=int(bytes_accessed)),
    )(x_lanes, x_rows, a_stack, *weights)

    # Un-batch kernel layout -> module output layout (wrapper-side, ~KB-sized tensors).
    pi = pi_raw.reshape(nb, N, block_b, T).transpose(0, 2, 1, 3).reshape(B, N, T)

    def unbatch(y):  # (nb, K*N, block_b*T) -> (B, N, T, K)
        return (y.reshape(nb, K, N, block_b, T)
                 .transpose(0, 3, 2, 4, 1)
                 .reshape(B, N, T, K))

    return pi, unbatch(pg_raw), unbatch(mg_raw), unbatch(sg_raw)


# ----------------------------------------------------------------------------
# Pure-JAX reference (same synthetic submodules) for correctness checking
# ----------------------------------------------------------------------------
def st_mdn_reference(params, X, A_q, A_h):
    X0 = X[:, :, :, 0]
    B, N, T = X0.shape
    K = (params["tmdn_wt"].shape[0] // N - 1) // 3
    relu = lambda v: jnp.maximum(v, 0.0)
    softplus = lambda v: jnp.maximum(v, 0.0) + jnp.log1p(jnp.exp(-jnp.abs(v)))

    def tlayer(w, b, g):
        return relu(jnp.einsum('oc,bct->bot', w, g) + b[None])

    g = tlayer(params["tc1_wt"], params["tc1_bt"], X0)
    g = tlayer(params["tc2_wt"], params["tc2_bt"], g)
    g = tlayer(params["tc3_wt"], params["tc3_bt"], g)
    head_t = jnp.einsum('oc,bct->bot', params["tmdn_wt"], g) + params["tmdn_bt"][None]

    def gconv(s, w, b):
        cin = s.shape[-1]
        y = (jnp.einsum('bnc,co->bno', s, w[0:cin])
             + jnp.einsum('nm,bmc,co->bno', A_q, s, w[cin:2 * cin])
             + jnp.einsum('nm,bmc,co->bno', A_h, s, w[2 * cin:3 * cin])
             + b[None])
        return relu(y)

    s = gconv(X0, params["sc1_w"], params["sc1_b"])
    s = gconv(s, params["sc2_w"], params["sc2_b"])
    s = gconv(s, params["sc3_w"], params["sc3_b"])
    head_s = jnp.einsum('bnh,ho->bno', s, params["smdn_w"]) + params["smdn_b"][None]

    def t_blk(sec, k):
        off = N * (1 + sec * K) + k * N
        return head_t[:, off:off + N, :]

    def s_blk(sec, k):
        off = T * (1 + sec * K) + k * T
        return head_s[:, :, off:off + T]

    pi = jax.nn.sigmoid(head_t[:, 0:N, :] * head_s[:, :, 0:T])
    pig = jnp.stack([t_blk(0, k) * s_blk(0, k) for k in range(K)], axis=-1)
    pig = jax.nn.softmax(pig, axis=-1)
    mug = jnp.stack([t_blk(1, k) * s_blk(1, k) for k in range(K)], axis=-1)
    sig = jnp.stack([softplus(t_blk(2, k)) * softplus(s_blk(2, k)) + 1e-6
                     for k in range(K)], axis=-1)
    return pi, pig, mug, sig


# ----------------------------------------------------------------------------
# Deterministic synthetic parameter init (submodules are constructor-injected)
# ----------------------------------------------------------------------------
def init_params(key, N, T, hid_t, rank_t, hid_s, rank_s, K):
    keys = iter(jax.random.split(key, 32))

    def w(shape, scale=0.1):
        return (scale * jax.random.normal(next(keys), shape)).astype(jnp.float32)

    return dict(
        # temporal path — weights stored pre-transposed: y^T = W^T x^T + b^T
        tc1_wt=w((hid_t, N)),        tc1_bt=w((hid_t, 1)),
        tc2_wt=w((rank_t, hid_t)),   tc2_bt=w((rank_t, 1)),
        tc3_wt=w((hid_t, rank_t)),   tc3_bt=w((hid_t, 1)),
        # fused TMDN head, rows ordered [pi(N) | pi_g(K*N, k-major) | mu_g(K*N) | sigma_g(K*N)]
        tmdn_wt=w((N * (1 + 3 * K), hid_t)), tmdn_bt=w((N * (1 + 3 * K), 1)),
        # spatial path — diffusion graph convs, [T0; T1; T2] stacked along rows
        sc1_w=w((3 * T, hid_s)),      sc1_b=w((1, hid_s)),
        sc2_w=w((3 * hid_s, rank_s)), sc2_b=w((1, rank_s)),
        sc3_w=w((3 * rank_s, hid_s)), sc3_b=w((1, hid_s)),
        # fused SMDN head, cols ordered [pi(T) | pi_g(K*T, k-major) | mu_g(K*T) | sigma_g(K*T)]
        smdn_w=w((hid_s, T * (1 + 3 * K))), smdn_b=w((1, T * (1 + 3 * K))),
    )


# ----------------------------------------------------------------------------
if __name__ == "__main__":
    # B=4 exercises both levers: 2 "parallel" grid steps (v7x) x 2 lane-batched samples/step.
    B, N, T = 4, 16, 8
    hid_t, rank_t = 32, 16
    hid_s, rank_s = 32, 16
    K = 4

    root = jax.random.PRNGKey(0)
    k_param, k_x, k_aq, k_ah = jax.random.split(root, 4)

    params = init_params(k_param, N, T, hid_t, rank_t, hid_s, rank_s, K)

    X = jax.random.normal(k_x, (B, N, T, 1), dtype=jnp.float32)
    A_q = jax.random.uniform(k_aq, (N, N), dtype=jnp.float32)
    A_q = A_q / jnp.sum(A_q, axis=-1, keepdims=True)   # row-normalized random-walk matrix
    A_h = jax.random.uniform(k_ah, (N, N), dtype=jnp.float32)
    A_h = A_h / jnp.sum(A_h, axis=-1, keepdims=True)

    fwd = jax.jit(st_mdn_forward)
    pi_res, pi_g_res, mu_g_res, sigma_g_res = fwd(params, X, A_q, A_h)
    jax.block_until_ready((pi_res, pi_g_res, mu_g_res, sigma_g_res))

    assert pi_res.shape == (B, N, T)
    assert pi_g_res.shape == (B, N, T, K)
    assert mu_g_res.shape == (B, N, T, K)
    assert sigma_g_res.shape == (B, N, T, K)
    # mixture weights are a softmax over K; sigma is strictly positive
    assert bool(jnp.allclose(jnp.sum(pi_g_res, axis=-1), 1.0, atol=1e-5))
    assert bool(jnp.all(sigma_g_res > 0.0))

    # pure-JAX reference check (loose tolerance: kernel sigmoid uses approx EUP reciprocal)
    refs = st_mdn_reference(params, X, A_q, A_h)
    for got, ref in zip((pi_res, pi_g_res, mu_g_res, sigma_g_res), refs):
        assert bool(jnp.allclose(got, ref, atol=2e-3, rtol=2e-3))

    print("KERNEL_OK")
</pallas_src>

<mosaic_0001>
module attributes {stable_mosaic.version = 11 : i64} {
  func.func @_st_mdn_fused_kernel(%arg0: i32, %arg1: memref<1x16x16xf32, #tpu.memory_space<vmem>>, %arg2: memref<1x32x8xf32, #tpu.memory_space<vmem>>, %arg3: memref<32x16xf32, #tpu.memory_space<vmem>>, %arg4: memref<32x16xf32, #tpu.memory_space<vmem>>, %arg5: memref<32x1xf32, #tpu.memory_space<vmem>>, %arg6: memref<16x32xf32, #tpu.memory_space<vmem>>, %arg7: memref<16x1xf32, #tpu.memory_space<vmem>>, %arg8: memref<32x16xf32, #tpu.memory_space<vmem>>, %arg9: memref<32x1xf32, #tpu.memory_space<vmem>>, %arg10: memref<208x32xf32, #tpu.memory_space<vmem>>, %arg11: memref<208x1xf32, #tpu.memory_space<vmem>>, %arg12: memref<24x32xf32, #tpu.memory_space<vmem>>, %arg13: memref<1x32xf32, #tpu.memory_space<vmem>>, %arg14: memref<96x16xf32, #tpu.memory_space<vmem>>, %arg15: memref<1x16xf32, #tpu.memory_space<vmem>>, %arg16: memref<48x32xf32, #tpu.memory_space<vmem>>, %arg17: memref<1x32xf32, #tpu.memory_space<vmem>>, %arg18: memref<32x104xf32, #tpu.memory_space<vmem>>, %arg19: memref<1x104xf32, #tpu.memory_space<vmem>>, %arg20: memref<1x16x16xf32, #tpu.memory_space<vmem>>, %arg21: memref<1x64x16xf32, #tpu.memory_space<vmem>>, %arg22: memref<1x64x16xf32, #tpu.memory_space<vmem>>, %arg23: memref<1x64x16xf32, #tpu.memory_space<vmem>>) attributes {dimension_semantics = [#tpu.dimension_semantics<parallel>], iteration_bounds = array<i64: 2>, scalar_prefetch = 0 : i64, scratch_operands = 0 : i64, tpu.core_type = #tpu.core_type<tc>, window_params = [{transform_indices = @transform_0, window_bounds = array<i64: 1, 16, 16>}, {transform_indices = @transform_1, window_bounds = array<i64: 1, 32, 8>}, {pipeline_mode = #tpu.pipeline_mode<synchronous>, transform_indices = @transform_2, window_bounds = array<i64: 32, 16>}, {pipeline_mode = #tpu.pipeline_mode<synchronous>, transform_indices = @transform_3, window_bounds = array<i64: 32, 16>}, {pipeline_mode = #tpu.pipeline_mode<synchronous>, transform_indices = @transform_4, window_bounds = array<i64: 32, 1>}, {pipeline_mode = #tpu.pipeline_mode<synchronous>, transform_indices = @transform_5, window_bounds = array<i64: 16, 32>}, {pipeline_mode = #tpu.pipeline_mode<synchronous>, transform_indices = @transform_6, window_bounds = array<i64: 16, 1>}, {pipeline_mode = #tpu.pipeline_mode<synchronous>, transform_indices = @transform_7, window_bounds = array<i64: 32, 16>}, {pipeline_mode = #tpu.pipeline_mode<synchronous>, transform_indices = @transform_8, window_bounds = array<i64: 32, 1>}, {pipeline_mode = #tpu.pipeline_mode<synchronous>, transform_indices = @transform_9, window_bounds = array<i64: 208, 32>}, {pipeline_mode = #tpu.pipeline_mode<synchronous>, transform_indices = @transform_10, window_bounds = array<i64: 208, 1>}, {pipeline_mode = #tpu.pipeline_mode<synchronous>, transform_indices = @transform_11, window_bounds = array<i64: 24, 32>}, {pipeline_mode = #tpu.pipeline_mode<synchronous>, transform_indices = @transform_12, window_bounds = array<i64: 1, 32>}, {pipeline_mode = #tpu.pipeline_mode<synchronous>, transform_indices = @transform_13, window_bounds = array<i64: 96, 16>}, {pipeline_mode = #tpu.pipeline_mode<synchronous>, transform_indices = @transform_14, window_bounds = array<i64: 1, 16>}, {pipeline_mode = #tpu.pipeline_mode<synchronous>, transform_indices = @transform_15, window_bounds = array<i64: 48, 32>}, {pipeline_mode = #tpu.pipeline_mode<synchronous>, transform_indices = @transform_16, window_bounds = array<i64: 1, 32>}, {pipeline_mode = #tpu.pipeline_mode<synchronous>, transform_indices = @transform_17, window_bounds = array<i64: 32, 104>}, {pipeline_mode = #tpu.pipeline_mode<synchronous>, transform_indices = @transform_18, window_bounds = array<i64: 1, 104>}, {transform_indices = @transform_19, window_bounds = array<i64: 1, 16, 16>}, {transform_indices = @transform_20, window_bounds = array<i64: 1, 64, 16>}, {transform_indices = @transform_21, window_bounds = array<i64: 1, 64, 16>}, {transform_indices = @transform_22, window_bounds = array<i64: 1, 64, 16>}]} {
    %c0 = arith.constant 0 : index
    %c0_0 = arith.constant 0 : index
    %c0_1 = arith.constant 0 : index
    %0 = vector.load %arg1[%c0, %c0_0, %c0_1] : memref<1x16x16xf32, #tpu.memory_space<vmem>>, vector<1x16x16xf32>
    %1 = vector.shape_cast %0 : vector<1x16x16xf32> to vector<16x16xf32>
    %c0_2 = arith.constant 0 : index
    %c0_3 = arith.constant 0 : index
    %c0_4 = arith.constant 0 : index
    %2 = vector.load %arg2[%c0_2, %c0_3, %c0_4] : memref<1x32x8xf32, #tpu.memory_space<vmem>>, vector<1x32x8xf32>
    %3 = vector.shape_cast %2 : vector<1x32x8xf32> to vector<32x8xf32>
    %c0_5 = arith.constant 0 : index
    %c0_6 = arith.constant 0 : index
    %4 = vector.load %arg3[%c0_5, %c0_6] : memref<32x16xf32, #tpu.memory_space<vmem>>, vector<32x16xf32>
    %c0_7 = arith.constant 0 : index
    %c0_8 = arith.constant 0 : index
    %5 = vector.load %arg4[%c0_7, %c0_8] : memref<32x16xf32, #tpu.memory_space<vmem>>, vector<32x16xf32>
    %cst = arith.constant dense<0.000000e+00> : vector<32x16xf32>
    %6 = tpu.matmul %5, %1, %cst {dimension_numbers = #tpu.dot_dimension_numbers<[1], [0], [0], [1], [0, 0, 1, 1], [], []>} : vector<32x16xf32>, vector<16x16xf32>, vector<32x16xf32> -> vector<32x16xf32>
    %c0_9 = arith.constant 0 : index
    %c0_10 = arith.constant 0 : index
    %7 = vector.load %arg5[%c0_9, %c0_10] : memref<32x1xf32, #tpu.memory_space<vmem>>, vector<32x1xf32>
    %8 = vector.broadcast %7 : vector<32x1xf32> to vector<32x16xf32>
    %9 = arith.addf %6, %8 : vector<32x16xf32>
    %cst_11 = arith.constant 0.000000e+00 : f32
    %10 = vector.broadcast %cst_11 : f32 to vector<32x16xf32>
    %11 = arith.maximumf %9, %10 : vector<32x16xf32>
    %c0_12 = arith.constant 0 : index
    %c0_13 = arith.constant 0 : index
    %12 = vector.load %arg6[%c0_12, %c0_13] : memref<16x32xf32, #tpu.memory_space<vmem>>, vector<16x32xf32>
    %cst_14 = arith.constant dense<0.000000e+00> : vector<16x16xf32>
    %13 = tpu.matmul %12, %11, %cst_14 {dimension_numbers = #tpu.dot_dimension_numbers<[1], [0], [0], [1], [0, 0, 1, 1], [], []>} : vector<16x32xf32>, vector<32x16xf32>, vector<16x16xf32> -> vector<16x16xf32>
    %c0_15 = arith.constant 0 : index
    %c0_16 = arith.constant 0 : index
    %14 = vector.load %arg7[%c0_15, %c0_16] : memref<16x1xf32, #tpu.memory_space<vmem>>, vector<16x1xf32>
    %15 = vector.broadcast %14 : vector<16x1xf32> to vector<16x16xf32>
    %16 = arith.addf %13, %15 : vector<16x16xf32>
    %cst_17 = arith.constant 0.000000e+00 : f32
    %17 = vector.broadcast %cst_17 : f32 to vector<16x16xf32>
    %18 = arith.maximumf %16, %17 : vector<16x16xf32>
    %c0_18 = arith.constant 0 : index
    %c0_19 = arith.constant 0 : index
    %19 = vector.load %arg8[%c0_18, %c0_19] : memref<32x16xf32, #tpu.memory_space<vmem>>, vector<32x16xf32>
    %cst_20 = arith.constant dense<0.000000e+00> : vector<32x16xf32>
    %20 = tpu.matmul %19, %18, %cst_20 {dimension_numbers = #tpu.dot_dimension_numbers<[1], [0], [0], [1], [0, 0, 1, 1], [], []>} : vector<32x16xf32>, vector<16x16xf32>, vector<32x16xf32> -> vector<32x16xf32>
    %c0_21 = arith.constant 0 : index
    %c0_22 = arith.constant 0 : index
    %21 = vector.load %arg9[%c0_21, %c0_22] : memref<32x1xf32, #tpu.memory_space<vmem>>, vector<32x1xf32>
    %22 = vector.broadcast %21 : vector<32x1xf32> to vector<32x16xf32>
    %23 = arith.addf %20, %22 : vector<32x16xf32>
    %cst_23 = arith.constant 0.000000e+00 : f32
    %24 = vector.broadcast %cst_23 : f32 to vector<32x16xf32>
    %25 = arith.maximumf %23, %24 : vector<32x16xf32>
    %c0_24 = arith.constant 0 : index
    %c0_25 = arith.constant 0 : index
    %26 = vector.load %arg10[%c0_24, %c0_25] : memref<208x32xf32, #tpu.memory_space<vmem>>, vector<208x32xf32>
    %cst_26 = arith.constant dense<0.000000e+00> : vector<208x16xf32>
    %27 = tpu.matmul %26, %25, %cst_26 {dimension_numbers = #tpu.dot_dimension_numbers<[1], [0], [0], [1], [0, 0, 1, 1], [], []>} : vector<208x32xf32>, vector<32x16xf32>, vector<208x16xf32> -> vector<208x16xf32>
    %c0_27 = arith.constant 0 : index
    %c0_28 = arith.constant 0 : index
    %28 = vector.load %arg11[%c0_27, %c0_28] : memref<208x1xf32, #tpu.memory_space<vmem>>, vector<208x1xf32>
    %29 = vector.broadcast %28 : vector<208x1xf32> to vector<208x16xf32>
    %30 = arith.addf %27, %29 : vector<208x16xf32>
    %31 = vector.extract_strided_slice %3 {offsets = [0, 0], sizes = [16, 8], strides = [1, 1]} : vector<32x8xf32> to vector<16x8xf32>
    %32 = vector.extract_strided_slice %3 {offsets = [16, 0], sizes = [16, 8], strides = [1, 1]} : vector<32x8xf32> to vector<16x8xf32>
    %33 = tpu.concatenate %31, %32 in 1 : vector<16x8xf32>, vector<16x8xf32> -> vector<16x16xf32>
    %cst_29 = arith.constant dense<0.000000e+00> : vector<32x16xf32>
    %34 = tpu.matmul %4, %33, %cst_29 {dimension_numbers = #tpu.dot_dimension_numbers<[1], [0], [0], [1], [0, 0, 1, 1], [], []>} : vector<32x16xf32>, vector<16x16xf32>, vector<32x16xf32> -> vector<32x16xf32>
    %35 = vector.extract_strided_slice %34 {offsets = [0, 0], sizes = [16, 8], strides = [1, 1]} : vector<32x16xf32> to vector<16x8xf32>
    %36 = vector.extract_strided_slice %34 {offsets = [16, 0], sizes = [16, 8], strides = [1, 1]} : vector<32x16xf32> to vector<16x8xf32>
    %37 = tpu.concatenate %31, %35, %36 in 1 : vector<16x8xf32>, vector<16x8xf32>, vector<16x8xf32> -> vector<16x24xf32>
    %38 = vector.extract_strided_slice %34 {offsets = [0, 8], sizes = [16, 8], strides = [1, 1]} : vector<32x16xf32> to vector<16x8xf32>
    %39 = vector.extract_strided_slice %34 {offsets = [16, 8], sizes = [16, 8], strides = [1, 1]} : vector<32x16xf32> to vector<16x8xf32>
    %40 = tpu.concatenate %32, %38, %39 in 1 : vector<16x8xf32>, vector<16x8xf32>, vector<16x8xf32> -> vector<16x24xf32>
    %41 = tpu.concatenate %37, %40 in 0 : vector<16x24xf32>, vector<16x24xf32> -> vector<32x24xf32>
    %c0_30 = arith.constant 0 : index
    %c0_31 = arith.constant 0 : index
    %42 = vector.load %arg12[%c0_30, %c0_31] : memref<24x32xf32, #tpu.memory_space<vmem>>, vector<24x32xf32>
    %cst_32 = arith.constant dense<0.000000e+00> : vector<32x32xf32>
    %43 = tpu.matmul %41, %42, %cst_32 {dimension_numbers = #tpu.dot_dimension_numbers<[1], [0], [0], [1], [0, 0, 1, 1], [], []>} : vector<32x24xf32>, vector<24x32xf32>, vector<32x32xf32> -> vector<32x32xf32>
    %c0_33 = arith.constant 0 : index
    %c0_34 = arith.constant 0 : index
    %44 = vector.load %arg13[%c0_33, %c0_34] : memref<1x32xf32, #tpu.memory_space<vmem>>, vector<1x32xf32>
    %45 = vector.broadcast %44 : vector<1x32xf32> to vector<32x32xf32>
    %46 = arith.addf %43, %45 : vector<32x32xf32>
    %cst_35 = arith.constant 0.000000e+00 : f32
    %47 = vector.broadcast %cst_35 : f32 to vector<32x32xf32>
    %48 = arith.maximumf %46, %47 : vector<32x32xf32>
    %49 = vector.extract_strided_slice %48 {offsets = [0, 0], sizes = [16, 32], strides = [1, 1]} : vector<32x32xf32> to vector<16x32xf32>
    %50 = vector.extract_strided_slice %48 {offsets = [16, 0], sizes = [16, 32], strides = [1, 1]} : vector<32x32xf32> to vector<16x32xf32>
    %51 = tpu.concatenate %49, %50 in 1 : vector<16x32xf32>, vector<16x32xf32> -> vector<16x64xf32>
    %cst_36 = arith.constant dense<0.000000e+00> : vector<32x64xf32>
    %52 = tpu.matmul %4, %51, %cst_36 {dimension_numbers = #tpu.dot_dimension_numbers<[1], [0], [0], [1], [0, 0, 1, 1], [], []>} : vector<32x16xf32>, vector<16x64xf32>, vector<32x64xf32> -> vector<32x64xf32>
    %53 = vector.extract_strided_slice %52 {offsets = [0, 0], sizes = [16, 32], strides = [1, 1]} : vector<32x64xf32> to vector<16x32xf32>
    %54 = vector.extract_strided_slice %52 {offsets = [16, 0], sizes = [16, 32], strides = [1, 1]} : vector<32x64xf32> to vector<16x32xf32>
    %55 = tpu.concatenate %49, %53, %54 in 1 : vector<16x32xf32>, vector<16x32xf32>, vector<16x32xf32> -> vector<16x96xf32>
    %56 = vector.extract_strided_slice %52 {offsets = [0, 32], sizes = [16, 32], strides = [1, 1]} : vector<32x64xf32> to vector<16x32xf32>
    %57 = vector.extract_strided_slice %52 {offsets = [16, 32], sizes = [16, 32], strides = [1, 1]} : vector<32x64xf32> to vector<16x32xf32>
    %58 = tpu.concatenate %50, %56, %57 in 1 : vector<16x32xf32>, vector<16x32xf32>, vector<16x32xf32> -> vector<16x96xf32>
    %59 = tpu.concatenate %55, %58 in 0 : vector<16x96xf32>, vector<16x96xf32> -> vector<32x96xf32>
    %c0_37 = arith.constant 0 : index
    %c0_38 = arith.constant 0 : index
    %60 = vector.load %arg14[%c0_37, %c0_38] : memref<96x16xf32, #tpu.memory_space<vmem>>, vector<96x16xf32>
    %cst_39 = arith.constant dense<0.000000e+00> : vector<32x16xf32>
    %61 = tpu.matmul %59, %60, %cst_39 {dimension_numbers = #tpu.dot_dimension_numbers<[1], [0], [0], [1], [0, 0, 1, 1], [], []>} : vector<32x96xf32>, vector<96x16xf32>, vector<32x16xf32> -> vector<32x16xf32>
    %c0_40 = arith.constant 0 : index
    %c0_41 = arith.constant 0 : index
    %62 = vector.load %arg15[%c0_40, %c0_41] : memref<1x16xf32, #tpu.memory_space<vmem>>, vector<1x16xf32>
    %63 = vector.broadcast %62 : vector<1x16xf32> to vector<32x16xf32>
    %64 = arith.addf %61, %63 : vector<32x16xf32>
    %cst_42 = arith.constant 0.000000e+00 : f32
    %65 = vector.broadcast %cst_42 : f32 to vector<32x16xf32>
    %66 = arith.maximumf %64, %65 : vector<32x16xf32>
    %67 = vector.extract_strided_slice %66 {offsets = [0, 0], sizes = [16, 16], strides = [1, 1]} : vector<32x16xf32> to vector<16x16xf32>
    %68 = vector.extract_strided_slice %66 {offsets = [16, 0], sizes = [16, 16], strides = [1, 1]} : vector<32x16xf32> to vector<16x16xf32>
    %69 = tpu.concatenate %67, %68 in 1 : vector<16x16xf32>, vector<16x16xf32> -> vector<16x32xf32>
    %cst_43 = arith.constant dense<0.000000e+00> : vector<32x32xf32>
    %70 = tpu.matmul %4, %69, %cst_43 {dimension_numbers = #tpu.dot_dimension_numbers<[1], [0], [0], [1], [0, 0, 1, 1], [], []>} : vector<32x16xf32>, vector<16x32xf32>, vector<32x32xf32> -> vector<32x32xf32>
    %71 = vector.extract_strided_slice %70 {offsets = [0, 0], sizes = [16, 16], strides = [1, 1]} : vector<32x32xf32> to vector<16x16xf32>
    %72 = vector.extract_strided_slice %70 {offsets = [16, 0], sizes = [16, 16], strides = [1, 1]} : vector<32x32xf32> to vector<16x16xf32>
    %73 = tpu.concatenate %67, %71, %72 in 1 : vector<16x16xf32>, vector<16x16xf32>, vector<16x16xf32> -> vector<16x48xf32>
    %74 = vector.extract_strided_slice %70 {offsets = [0, 16], sizes = [16, 16], strides = [1, 1]} : vector<32x32xf32> to vector<16x16xf32>
    %75 = vector.extract_strided_slice %70 {offsets = [16, 16], sizes = [16, 16], strides = [1, 1]} : vector<32x32xf32> to vector<16x16xf32>
    %76 = tpu.concatenate %68, %74, %75 in 1 : vector<16x16xf32>, vector<16x16xf32>, vector<16x16xf32> -> vector<16x48xf32>
    %77 = tpu.concatenate %73, %76 in 0 : vector<16x48xf32>, vector<16x48xf32> -> vector<32x48xf32>
    %c0_44 = arith.constant 0 : index
    %c0_45 = arith.constant 0 : index
    %78 = vector.load %arg16[%c0_44, %c0_45] : memref<48x32xf32, #tpu.memory_space<vmem>>, vector<48x32xf32>
    %cst_46 = arith.constant dense<0.000000e+00> : vector<32x32xf32>
    %79 = tpu.matmul %77, %78, %cst_46 {dimension_numbers = #tpu.dot_dimension_numbers<[1], [0], [0], [1], [0, 0, 1, 1], [], []>} : vector<32x48xf32>, vector<48x32xf32>, vector<32x32xf32> -> vector<32x32xf32>
    %c0_47 = arith.constant 0 : index
    %c0_48 = arith.constant 0 : index
    %80 = vector.load %arg17[%c0_47, %c0_48] : memref<1x32xf32, #tpu.memory_space<vmem>>, vector<1x32xf32>
    %81 = vector.broadcast %80 : vector<1x32xf32> to vector<32x32xf32>
    %82 = arith.addf %79, %81 : vector<32x32xf32>
    %cst_49 = arith.constant 0.000000e+00 : f32
    %83 = vector.broadcast %cst_49 : f32 to vector<32x32xf32>
    %84 = arith.maximumf %82, %83 : vector<32x32xf32>
    %c0_50 = arith.constant 0 : index
    %c0_51 = arith.constant 0 : index
    %85 = vector.load %arg18[%c0_50, %c0_51] : memref<32x104xf32, #tpu.memory_space<vmem>>, vector<32x104xf32>
    %cst_52 = arith.constant dense<0.000000e+00> : vector<32x104xf32>
    %86 = tpu.matmul %84, %85, %cst_52 {dimension_numbers = #tpu.dot_dimension_numbers<[1], [0], [0], [1], [0, 0, 1, 1], [], []>} : vector<32x32xf32>, vector<32x104xf32>, vector<32x104xf32> -> vector<32x104xf32>
    %c0_53 = arith.constant 0 : index
    %c0_54 = arith.constant 0 : index
    %87 = vector.load %arg19[%c0_53, %c0_54] : memref<1x104xf32, #tpu.memory_space<vmem>>, vector<1x104xf32>
    %88 = vector.broadcast %87 : vector<1x104xf32> to vector<32x104xf32>
    %89 = arith.addf %86, %88 : vector<32x104xf32>
    %90 = vector.extract_strided_slice %89 {offsets = [0, 0], sizes = [16, 8], strides = [1, 1]} : vector<32x104xf32> to vector<16x8xf32>
    %91 = vector.extract_strided_slice %89 {offsets = [16, 0], sizes = [16, 8], strides = [1, 1]} : vector<32x104xf32> to vector<16x8xf32>
    %92 = tpu.concatenate %90, %91 in 1 : vector<16x8xf32>, vector<16x8xf32> -> vector<16x16xf32>
    %93 = vector.extract_strided_slice %30 {offsets = [0, 0], sizes = [16, 16], strides = [1, 1]} : vector<208x16xf32> to vector<16x16xf32>
    %94 = arith.mulf %93, %92 : vector<16x16xf32>
    %95 = math.absf %94 : vector<16x16xf32>
    %cst_55 = arith.constant 0.000000e+00 : f32
    %96 = vector.broadcast %cst_55 : f32 to vector<16x16xf32>
    %97 = arith.subf %96, %95 : vector<16x16xf32>
    %98 = math.exp %97 : vector<16x16xf32>
    %cst_56 = arith.constant 1.000000e+00 : f32
    %99 = vector.broadcast %cst_56 : f32 to vector<16x16xf32>
    %100 = arith.addf %99, %98 : vector<16x16xf32>
    %101 = tpu.reciprocal %100 {approx = true} : vector<16x16xf32> -> vector<16x16xf32>
    %cst_57 = arith.constant 0.000000e+00 : f32
    %102 = vector.broadcast %cst_57 : f32 to vector<16x16xf32>
    %103 = arith.cmpf oge, %94, %102 : vector<16x16xf32>
    %104 = arith.mulf %98, %101 : vector<16x16xf32>
    %105 = arith.select %103, %101, %104 : vector<16x16xi1>, vector<16x16xf32>
    %c0_58 = arith.constant 0 : index
    %c0_59 = arith.constant 0 : index
    %c0_60 = arith.constant 0 : index
    %106 = vector.load %arg20[%c0_58, %c0_59, %c0_60] : memref<1x16x16xf32, #tpu.memory_space<vmem>>, vector<1x16x16xf32>
    %107 = vector.shape_cast %106 : vector<1x16x16xf32> to vector<16x16xf32>
    %108 = vector.shape_cast %105 : vector<16x16xf32> to vector<1x16x16xf32>
    tpu.vector_store %arg20[%c0_58, %c0_59, %c0_60], %108 {strides = array<i32>} : memref<1x16x16xf32, #tpu.memory_space<vmem>>, vector<1x16x16xf32>,
    %109 = vector.extract_strided_slice %30 {offsets = [16, 0], sizes = [16, 16], strides = [1, 1]} : vector<208x16xf32> to vector<16x16xf32>
    %110 = vector.extract_strided_slice %30 {offsets = [32, 0], sizes = [16, 16], strides = [1, 1]} : vector<208x16xf32> to vector<16x16xf32>
    %111 = vector.extract_strided_slice %30 {offsets = [48, 0], sizes = [16, 16], strides = [1, 1]} : vector<208x16xf32> to vector<16x16xf32>
    %112 = vector.extract_strided_slice %30 {offsets = [64, 0], sizes = [16, 16], strides = [1, 1]} : vector<208x16xf32> to vector<16x16xf32>
    %113 = vector.extract_strided_slice %89 {offsets = [0, 8], sizes = [16, 8], strides = [1, 1]} : vector<32x104xf32> to vector<16x8xf32>
    %114 = vector.extract_strided_slice %89 {offsets = [16, 8], sizes = [16, 8], strides = [1, 1]} : vector<32x104xf32> to vector<16x8xf32>
    %115 = tpu.concatenate %113, %114 in 1 : vector<16x8xf32>, vector<16x8xf32> -> vector<16x16xf32>
    %116 = vector.extract_strided_slice %89 {offsets = [0, 16], sizes = [16, 8], strides = [1, 1]} : vector<32x104xf32> to vector<16x8xf32>
    %117 = vector.extract_strided_slice %89 {offsets = [16, 16], sizes = [16, 8], strides = [1, 1]} : vector<32x104xf32> to vector<16x8xf32>
    %118 = tpu.concatenate %116, %117 in 1 : vector<16x8xf32>, vector<16x8xf32> -> vector<16x16xf32>
    %119 = vector.extract_strided_slice %89 {offsets = [0, 24], sizes = [16, 8], strides = [1, 1]} : vector<32x104xf32> to vector<16x8xf32>
    %120 = vector.extract_strided_slice %89 {offsets = [16, 24], sizes = [16, 8], strides = [1, 1]} : vector<32x104xf32> to vector<16x8xf32>
    %121 = tpu.concatenate %119, %120 in 1 : vector<16x8xf32>, vector<16x8xf32> -> vector<16x16xf32>
    %122 = vector.extract_strided_slice %89 {offsets = [0, 32], sizes = [16, 8], strides = [1, 1]} : vector<32x104xf32> to vector<16x8xf32>
    %123 = vector.extract_strided_slice %89 {offsets = [16, 32], sizes = [16, 8], strides = [1, 1]} : vector<32x104xf32> to vector<16x8xf32>
    %124 = tpu.concatenate %122, %123 in 1 : vector<16x8xf32>, vector<16x8xf32> -> vector<16x16xf32>
    %125 = arith.mulf %109, %115 : vector<16x16xf32>
    %126 = arith.mulf %110, %118 : vector<16x16xf32>
    %127 = arith.mulf %111, %121 : vector<16x16xf32>
    %128 = arith.mulf %112, %124 : vector<16x16xf32>
    %129 = arith.maximumf %125, %126 : vector<16x16xf32>
    %130 = arith.maximumf %129, %127 : vector<16x16xf32>
    %131 = arith.maximumf %130, %128 : vector<16x16xf32>
    %132 = arith.subf %125, %131 : vector<16x16xf32>
    %133 = math.exp %132 : vector<16x16xf32>
    %134 = arith.subf %126, %131 : vector<16x16xf32>
    %135 = math.exp %134 : vector<16x16xf32>
    %136 = arith.subf %127, %131 : vector<16x16xf32>
    %137 = math.exp %136 : vector<16x16xf32>
    %138 = arith.subf %128, %131 : vector<16x16xf32>
    %139 = math.exp %138 : vector<16x16xf32>
    %140 = arith.addf %133, %135 : vector<16x16xf32>
    %141 = arith.addf %140, %137 : vector<16x16xf32>
    %142 = arith.addf %141, %139 : vector<16x16xf32>
    %143 = tpu.reciprocal %142 : vector<16x16xf32> -> vector<16x16xf32>
    %144 = arith.mulf %133, %143 : vector<16x16xf32>
    %145 = arith.mulf %135, %143 : vector<16x16xf32>
    %146 = arith.mulf %137, %143 : vector<16x16xf32>
    %147 = arith.mulf %139, %143 : vector<16x16xf32>
    %148 = tpu.concatenate %144, %145, %146, %147 in 0 : vector<16x16xf32>, vector<16x16xf32>, vector<16x16xf32>, vector<16x16xf32> -> vector<64x16xf32>
    %c0_61 = arith.constant 0 : index
    %c0_62 = arith.constant 0 : index
    %c0_63 = arith.constant 0 : index
    %149 = vector.load %arg21[%c0_61, %c0_62, %c0_63] : memref<1x64x16xf32, #tpu.memory_space<vmem>>, vector<1x64x16xf32>
    %150 = vector.shape_cast %149 : vector<1x64x16xf32> to vector<64x16xf32>
    %151 = vector.shape_cast %148 : vector<64x16xf32> to vector<1x64x16xf32>
    tpu.vector_store %arg21[%c0_61, %c0_62, %c0_63], %151 {strides = array<i32>} : memref<1x64x16xf32, #tpu.memory_space<vmem>>, vector<1x64x16xf32>,
    %152 = vector.extract_strided_slice %30 {offsets = [80, 0], sizes = [16, 16], strides = [1, 1]} : vector<208x16xf32> to vector<16x16xf32>
    %153 = vector.extract_strided_slice %30 {offsets = [96, 0], sizes = [16, 16], strides = [1, 1]} : vector<208x16xf32> to vector<16x16xf32>
    %154 = vector.extract_strided_slice %30 {offsets = [112, 0], sizes = [16, 16], strides = [1, 1]} : vector<208x16xf32> to vector<16x16xf32>
    %155 = vector.extract_strided_slice %30 {offsets = [128, 0], sizes = [16, 16], strides = [1, 1]} : vector<208x16xf32> to vector<16x16xf32>
    %156 = vector.extract_strided_slice %89 {offsets = [0, 40], sizes = [16, 8], strides = [1, 1]} : vector<32x104xf32> to vector<16x8xf32>
    %157 = vector.extract_strided_slice %89 {offsets = [16, 40], sizes = [16, 8], strides = [1, 1]} : vector<32x104xf32> to vector<16x8xf32>
    %158 = tpu.concatenate %156, %157 in 1 : vector<16x8xf32>, vector<16x8xf32> -> vector<16x16xf32>
    %159 = vector.extract_strided_slice %89 {offsets = [0, 48], sizes = [16, 8], strides = [1, 1]} : vector<32x104xf32> to vector<16x8xf32>
    %160 = vector.extract_strided_slice %89 {offsets = [16, 48], sizes = [16, 8], strides = [1, 1]} : vector<32x104xf32> to vector<16x8xf32>
    %161 = tpu.concatenate %159, %160 in 1 : vector<16x8xf32>, vector<16x8xf32> -> vector<16x16xf32>
    %162 = vector.extract_strided_slice %89 {offsets = [0, 56], sizes = [16, 8], strides = [1, 1]} : vector<32x104xf32> to vector<16x8xf32>
    %163 = vector.extract_strided_slice %89 {offsets = [16, 56], sizes = [16, 8], strides = [1, 1]} : vector<32x104xf32> to vector<16x8xf32>
    %164 = tpu.concatenate %162, %163 in 1 : vector<16x8xf32>, vector<16x8xf32> -> vector<16x16xf32>
    %165 = vector.extract_strided_slice %89 {offsets = [0, 64], sizes = [16, 8], strides = [1, 1]} : vector<32x104xf32> to vector<16x8xf32>
    %166 = vector.extract_strided_slice %89 {offsets = [16, 64], sizes = [16, 8], strides = [1, 1]} : vector<32x104xf32> to vector<16x8xf32>
    %167 = tpu.concatenate %165, %166 in 1 : vector<16x8xf32>, vector<16x8xf32> -> vector<16x16xf32>
    %168 = arith.mulf %152, %158 : vector<16x16xf32>
    %169 = arith.mulf %153, %161 : vector<16x16xf32>
    %170 = arith.mulf %154, %164 : vector<16x16xf32>
    %171 = arith.mulf %155, %167 : vector<16x16xf32>
    %172 = tpu.concatenate %168, %169, %170, %171 in 0 : vector<16x16xf32>, vector<16x16xf32>, vector<16x16xf32>, vector<16x16xf32> -> vector<64x16xf32>
    %c0_64 = arith.constant 0 : index
    %c0_65 = arith.constant 0 : index
    %c0_66 = arith.constant 0 : index
    %173 = vector.load %arg22[%c0_64, %c0_65, %c0_66] : memref<1x64x16xf32, #tpu.memory_space<vmem>>, vector<1x64x16xf32>
    %174 = vector.shape_cast %173 : vector<1x64x16xf32> to vector<64x16xf32>
    %175 = vector.shape_cast %172 : vector<64x16xf32> to vector<1x64x16xf32>
    tpu.vector_store %arg22[%c0_64, %c0_65, %c0_66], %175 {strides = array<i32>} : memref<1x64x16xf32, #tpu.memory_space<vmem>>, vector<1x64x16xf32>,
    %176 = vector.extract_strided_slice %30 {offsets = [144, 0], sizes = [16, 16], strides = [1, 1]} : vector<208x16xf32> to vector<16x16xf32>
    %177 = vector.extract_strided_slice %30 {offsets = [160, 0], sizes = [16, 16], strides = [1, 1]} : vector<208x16xf32> to vector<16x16xf32>
    %178 = vector.extract_strided_slice %30 {offsets = [176, 0], sizes = [16, 16], strides = [1, 1]} : vector<208x16xf32> to vector<16x16xf32>
    %179 = vector.extract_strided_slice %30 {offsets = [192, 0], sizes = [16, 16], strides = [1, 1]} : vector<208x16xf32> to vector<16x16xf32>
    %180 = vector.extract_strided_slice %89 {offsets = [0, 72], sizes = [16, 8], strides = [1, 1]} : vector<32x104xf32> to vector<16x8xf32>
    %181 = vector.extract_strided_slice %89 {offsets = [16, 72], sizes = [16, 8], strides = [1, 1]} : vector<32x104xf32> to vector<16x8xf32>
    %182 = tpu.concatenate %180, %181 in 1 : vector<16x8xf32>, vector<16x8xf32> -> vector<16x16xf32>
    %183 = vector.extract_strided_slice %89 {offsets = [0, 80], sizes = [16, 8], strides = [1, 1]} : vector<32x104xf32> to vector<16x8xf32>
    %184 = vector.extract_strided_slice %89 {offsets = [16, 80], sizes = [16, 8], strides = [1, 1]} : vector<32x104xf32> to vector<16x8xf32>
    %185 = tpu.concatenate %183, %184 in 1 : vector<16x8xf32>, vector<16x8xf32> -> vector<16x16xf32>
    %186 = vector.extract_strided_slice %89 {offsets = [0, 88], sizes = [16, 8], strides = [1, 1]} : vector<32x104xf32> to vector<16x8xf32>
    %187 = vector.extract_strided_slice %89 {offsets = [16, 88], sizes = [16, 8], strides = [1, 1]} : vector<32x104xf32> to vector<16x8xf32>
    %188 = tpu.concatenate %186, %187 in 1 : vector<16x8xf32>, vector<16x8xf32> -> vector<16x16xf32>
    %189 = vector.extract_strided_slice %89 {offsets = [0, 96], sizes = [16, 8], strides = [1, 1]} : vector<32x104xf32> to vector<16x8xf32>
    %190 = vector.extract_strided_slice %89 {offsets = [16, 96], sizes = [16, 8], strides = [1, 1]} : vector<32x104xf32> to vector<16x8xf32>
    %191 = tpu.concatenate %189, %190 in 1 : vector<16x8xf32>, vector<16x8xf32> -> vector<16x16xf32>
    %cst_67 = arith.constant 0.000000e+00 : f32
    %192 = vector.broadcast %cst_67 : f32 to vector<16x16xf32>
    %193 = arith.maximumf %176, %192 : vector<16x16xf32>
    %194 = math.absf %176 : vector<16x16xf32>
    %cst_68 = arith.constant 0.000000e+00 : f32
    %195 = vector.broadcast %cst_68 : f32 to vector<16x16xf32>
    %196 = arith.subf %195, %194 : vector<16x16xf32>
    %197 = math.exp %196 : vector<16x16xf32>
    %198 = math.log1p %197 : vector<16x16xf32>
    %199 = arith.addf %193, %198 : vector<16x16xf32>
    %cst_69 = arith.constant 0.000000e+00 : f32
    %200 = vector.broadcast %cst_69 : f32 to vector<16x16xf32>
    %201 = arith.maximumf %182, %200 : vector<16x16xf32>
    %202 = math.absf %182 : vector<16x16xf32>
    %cst_70 = arith.constant 0.000000e+00 : f32
    %203 = vector.broadcast %cst_70 : f32 to vector<16x16xf32>
    %204 = arith.subf %203, %202 : vector<16x16xf32>
    %205 = math.exp %204 : vector<16x16xf32>
    %206 = math.log1p %205 : vector<16x16xf32>
    %207 = arith.addf %201, %206 : vector<16x16xf32>
    %208 = arith.mulf %199, %207 : vector<16x16xf32>
    %cst_71 = arith.constant 9.99999997E-7 : f32
    %209 = vector.broadcast %cst_71 : f32 to vector<16x16xf32>
    %210 = arith.addf %208, %209 : vector<16x16xf32>
    %cst_72 = arith.constant 0.000000e+00 : f32
    %211 = vector.broadcast %cst_72 : f32 to vector<16x16xf32>
    %212 = arith.maximumf %177, %211 : vector<16x16xf32>
    %213 = math.absf %177 : vector<16x16xf32>
    %cst_73 = arith.constant 0.000000e+00 : f32
    %214 = vector.broadcast %cst_73 : f32 to vector<16x16xf32>
    %215 = arith.subf %214, %213 : vector<16x16xf32>
    %216 = math.exp %215 : vector<16x16xf32>
    %217 = math.log1p %216 : vector<16x16xf32>
    %218 = arith.addf %212, %217 : vector<16x16xf32>
    %cst_74 = arith.constant 0.000000e+00 : f32
    %219 = vector.broadcast %cst_74 : f32 to vector<16x16xf32>
    %220 = arith.maximumf %185, %219 : vector<16x16xf32>
    %221 = math.absf %185 : vector<16x16xf32>
    %cst_75 = arith.constant 0.000000e+00 : f32
    %222 = vector.broadcast %cst_75 : f32 to vector<16x16xf32>
    %223 = arith.subf %222, %221 : vector<16x16xf32>
    %224 = math.exp %223 : vector<16x16xf32>
    %225 = math.log1p %224 : vector<16x16xf32>
    %226 = arith.addf %220, %225 : vector<16x16xf32>
    %227 = arith.mulf %218, %226 : vector<16x16xf32>
    %cst_76 = arith.constant 9.99999997E-7 : f32
    %228 = vector.broadcast %cst_76 : f32 to vector<16x16xf32>
    %229 = arith.addf %227, %228 : vector<16x16xf32>
    %cst_77 = arith.constant 0.000000e+00 : f32
    %230 = vector.broadcast %cst_77 : f32 to vector<16x16xf32>
    %231 = arith.maximumf %178, %230 : vector<16x16xf32>
    %232 = math.absf %178 : vector<16x16xf32>
    %cst_78 = arith.constant 0.000000e+00 : f32
    %233 = vector.broadcast %cst_78 : f32 to vector<16x16xf32>
    %234 = arith.subf %233, %232 : vector<16x16xf32>
    %235 = math.exp %234 : vector<16x16xf32>
    %236 = math.log1p %235 : vector<16x16xf32>
    %237 = arith.addf %231, %236 : vector<16x16xf32>
    %cst_79 = arith.constant 0.000000e+00 : f32
    %238 = vector.broadcast %cst_79 : f32 to vector<16x16xf32>
    %239 = arith.maximumf %188, %238 : vector<16x16xf32>
    %240 = math.absf %188 : vector<16x16xf32>
    %cst_80 = arith.constant 0.000000e+00 : f32
    %241 = vector.broadcast %cst_80 : f32 to vector<16x16xf32>
    %242 = arith.subf %241, %240 : vector<16x16xf32>
    %243 = math.exp %242 : vector<16x16xf32>
    %244 = math.log1p %243 : vector<16x16xf32>
    %245 = arith.addf %239, %244 : vector<16x16xf32>
    %246 = arith.mulf %237, %245 : vector<16x16xf32>
    %cst_81 = arith.constant 9.99999997E-7 : f32
    %247 = vector.broadcast %cst_81 : f32 to vector<16x16xf32>
    %248 = arith.addf %246, %247 : vector<16x16xf32>
    %cst_82 = arith.constant 0.000000e+00 : f32
    %249 = vector.broadcast %cst_82 : f32 to vector<16x16xf32>
    %250 = arith.maximumf %179, %249 : vector<16x16xf32>
    %251 = math.absf %179 : vector<16x16xf32>
    %cst_83 = arith.constant 0.000000e+00 : f32
    %252 = vector.broadcast %cst_83 : f32 to vector<16x16xf32>
    %253 = arith.subf %252, %251 : vector<16x16xf32>
    %254 = math.exp %253 : vector<16x16xf32>
    %255 = math.log1p %254 : vector<16x16xf32>
    %256 = arith.addf %250, %255 : vector<16x16xf32>
    %cst_84 = arith.constant 0.000000e+00 : f32
    %257 = vector.broadcast %cst_84 : f32 to vector<16x16xf32>
    %258 = arith.maximumf %191, %257 : vector<16x16xf32>
    %259 = math.absf %191 : vector<16x16xf32>
    %cst_85 = arith.constant 0.000000e+00 : f32
    %260 = vector.broadcast %cst_85 : f32 to vector<16x16xf32>
    %261 = arith.subf %260, %259 : vector<16x16xf32>
    %262 = math.exp %261 : vector<16x16xf32>
    %263 = math.log1p %262 : vector<16x16xf32>
    %264 = arith.addf %258, %263 : vector<16x16xf32>
    %265 = arith.mulf %256, %264 : vector<16x16xf32>
    %cst_86 = arith.constant 9.99999997E-7 : f32
    %266 = vector.broadcast %cst_86 : f32 to vector<16x16xf32>
    %267 = arith.addf %265, %266 : vector<16x16xf32>
    %268 = tpu.concatenate %210, %229, %248, %267 in 0 : vector<16x16xf32>, vector<16x16xf32>, vector<16x16xf32>, vector<16x16xf32> -> vector<64x16xf32>
    %c0_87 = arith.constant 0 : index
    %c0_88 = arith.constant 0 : index
    %c0_89 = arith.constant 0 : index
    %269 = vector.load %arg23[%c0_87, %c0_88, %c0_89] : memref<1x64x16xf32, #tpu.memory_space<vmem>>, vector<1x64x16xf32>
    %270 = vector.shape_cast %269 : vector<1x64x16xf32> to vector<64x16xf32>
    %271 = vector.shape_cast %268 : vector<64x16xf32> to vector<1x64x16xf32>
    tpu.vector_store %arg23[%c0_87, %c0_88, %c0_89], %271 {strides = array<i32>} : memref<1x64x16xf32, #tpu.memory_space<vmem>>, vector<1x64x16xf32>,
    return
  }
  func.func @transform_0(%arg0: i32) -> (i32, i32, i32) {
    %c0_i32 = arith.constant 0 : i32
    %c0_i32_0 = arith.constant 0 : i32
    %c0_i32_1 = arith.constant 0 : i32
    return %arg0, %c0_i32, %c0_i32_0 : i32, i32, i32
  }
  func.func @transform_1(%arg0: i32) -> (i32, i32, i32) {
    %c0_i32 = arith.constant 0 : i32
    %c0_i32_0 = arith.constant 0 : i32
    %c0_i32_1 = arith.constant 0 : i32
    return %arg0, %c0_i32, %c0_i32_0 : i32, i32, i32
  }
  func.func @transform_2(%arg0: i32) -> (i32, i32) {
    %c0_i32 = arith.constant 0 : i32
    %c0_i32_0 = arith.constant 0 : i32
    %c0_i32_1 = arith.constant 0 : i32
    return %c0_i32, %c0_i32_0 : i32, i32
  }
  func.func @transform_3(%arg0: i32) -> (i32, i32) {
    %c0_i32 = arith.constant 0 : i32
    %c0_i32_0 = arith.constant 0 : i32
    %c0_i32_1 = arith.constant 0 : i32
    return %c0_i32, %c0_i32_0 : i32, i32
  }
  func.func @transform_4(%arg0: i32) -> (i32, i32) {
    %c0_i32 = arith.constant 0 : i32
    %c0_i32_0 = arith.constant 0 : i32
    %c0_i32_1 = arith.constant 0 : i32
    return %c0_i32, %c0_i32_0 : i32, i32
  }
  func.func @transform_5(%arg0: i32) -> (i32, i32) {
    %c0_i32 = arith.constant 0 : i32
    %c0_i32_0 = arith.constant 0 : i32
    %c0_i32_1 = arith.constant 0 : i32
    return %c0_i32, %c0_i32_0 : i32, i32
  }
  func.func @transform_6(%arg0: i32) -> (i32, i32) {
    %c0_i32 = arith.constant 0 : i32
    %c0_i32_0 = arith.constant 0 : i32
    %c0_i32_1 = arith.constant 0 : i32
    return %c0_i32, %c0_i32_0 : i32, i32
  }
  func.func @transform_7(%arg0: i32) -> (i32, i32) {
    %c0_i32 = arith.constant 0 : i32
    %c0_i32_0 = arith.constant 0 : i32
    %c0_i32_1 = arith.constant 0 : i32
    return %c0_i32, %c0_i32_0 : i32, i32
  }
  func.func @transform_8(%arg0: i32) -> (i32, i32) {
    %c0_i32 = arith.constant 0 : i32
    %c0_i32_0 = arith.constant 0 : i32
    %c0_i32_1 = arith.constant 0 : i32
    return %c0_i32, %c0_i32_0 : i32, i32
  }
  func.func @transform_9(%arg0: i32) -> (i32, i32) {
    %c0_i32 = arith.constant 0 : i32
    %c0_i32_0 = arith.constant 0 : i32
    %c0_i32_1 = arith.constant 0 : i32
    return %c0_i32, %c0_i32_0 : i32, i32
  }
  func.func @transform_10(%arg0: i32) -> (i32, i32) {
    %c0_i32 = arith.constant 0 : i32
    %c0_i32_0 = arith.constant 0 : i32
    %c0_i32_1 = arith.constant 0 : i32
    return %c0_i32, %c0_i32_0 : i32, i32
  }
  func.func @transform_11(%arg0: i32) -> (i32, i32) {
    %c0_i32 = arith.constant 0 : i32
    %c0_i32_0 = arith.constant 0 : i32
    %c0_i32_1 = arith.constant 0 : i32
    return %c0_i32, %c0_i32_0 : i32, i32
  }
  func.func @transform_12(%arg0: i32) -> (i32, i32) {
    %c0_i32 = arith.constant 0 : i32
    %c0_i32_0 = arith.constant 0 : i32
    %c0_i32_1 = arith.constant 0 : i32
    return %c0_i32, %c0_i32_0 : i32, i32
  }
  func.func @transform_13(%arg0: i32) -> (i32, i32) {
    %c0_i32 = arith.constant 0 : i32
    %c0_i32_0 = arith.constant 0 : i32
    %c0_i32_1 = arith.constant 0 : i32
    return %c0_i32, %c0_i32_0 : i32, i32
  }
  func.func @transform_14(%arg0: i32) -> (i32, i32) {
    %c0_i32 = arith.constant 0 : i32
    %c0_i32_0 = arith.constant 0 : i32
    %c0_i32_1 = arith.constant 0 : i32
    return %c0_i32, %c0_i32_0 : i32, i32
  }
  func.func @transform_15(%arg0: i32) -> (i32, i32) {
    %c0_i32 = arith.constant 0 : i32
    %c0_i32_0 = arith.constant 0 : i32
    %c0_i32_1 = arith.constant 0 : i32
    return %c0_i32, %c0_i32_0 : i32, i32
  }
  func.func @transform_16(%arg0: i32) -> (i32, i32) {
    %c0_i32 = arith.constant 0 : i32
    %c0_i32_0 = arith.constant 0 : i32
    %c0_i32_1 = arith.constant 0 : i32
    return %c0_i32, %c0_i32_0 : i32, i32
  }
  func.func @transform_17(%arg0: i32) -> (i32, i32) {
    %c0_i32 = arith.constant 0 : i32
    %c0_i32_0 = arith.constant 0 : i32
    %c0_i32_1 = arith.constant 0 : i32
    return %c0_i32, %c0_i32_0 : i32, i32
  }
  func.func @transform_18(%arg0: i32) -> (i32, i32) {
    %c0_i32 = arith.constant 0 : i32
    %c0_i32_0 = arith.constant 0 : i32
    %c0_i32_1 = arith.constant 0 : i32
    return %c0_i32, %c0_i32_0 : i32, i32
  }
  func.func @transform_19(%arg0: i32) -> (i32, i32, i32) {
    %c0_i32 = arith.constant 0 : i32
    %c0_i32_0 = arith.constant 0 : i32
    %c0_i32_1 = arith.constant 0 : i32
    return %arg0, %c0_i32, %c0_i32_0 : i32, i32, i32
  }
  func.func @transform_20(%arg0: i32) -> (i32, i32, i32) {
    %c0_i32 = arith.constant 0 : i32
    %c0_i32_0 = arith.constant 0 : i32
    %c0_i32_1 = arith.constant 0 : i32
    return %arg0, %c0_i32, %c0_i32_0 : i32, i32, i32
  }
  func.func @transform_21(%arg0: i32) -> (i32, i32, i32) {
    %c0_i32 = arith.constant 0 : i32
    %c0_i32_0 = arith.constant 0 : i32
    %c0_i32_1 = arith.constant 0 : i32
    return %arg0, %c0_i32, %c0_i32_0 : i32, i32, i32
  }
  func.func @transform_22(%arg0: i32) -> (i32, i32, i32) {
    %c0_i32 = arith.constant 0 : i32
    %c0_i32_0 = arith.constant 0 : i32
    %c0_i32_1 = arith.constant 0 : i32
    return %arg0, %c0_i32, %c0_i32_0 : i32, i32, i32
  }
}

</mosaic_0001>

<llo_original>
// kernel: st_mdn_forward.1
$region0: #{st_mdn_forward.1}
  #allocation0 [shape = 'u32[]', space=smem, size = 0x4, offset = 0x4, fixed_abs, tag = 'smem constant byte address 0x4 - core index']
  #allocation1 [shape = 'u32[144,128]{1,0:T(1,128)}', space=vmem, size = 0x12000, scoped, tag = 'internal scratch']
  %s0 = inlined_call_operand.vmem [shape: f32[2,16,16], index: 0, kind: input, shape index: {}]
  %s1 = inlined_call_operand.vmem [shape: f32[2,32,8], index: 1, kind: input, shape index: {}]
  %s2 = inlined_call_operand.vmem [shape: f32[32,16], index: 2, kind: input, shape index: {}]
  %s3 = inlined_call_operand.vmem [shape: f32[32,16], index: 3, kind: input, shape index: {}]
  %s4 = inlined_call_operand.vmem [shape: f32[32,1], index: 4, kind: input, shape index: {}]
  %s5 = inlined_call_operand.vmem [shape: f32[16,32], index: 5, kind: input, shape index: {}]
  %s6 = inlined_call_operand.vmem [shape: f32[16,1], index: 6, kind: input, shape index: {}]
  %s7 = inlined_call_operand.vmem [shape: f32[32,16], index: 7, kind: input, shape index: {}]
  %s8 = inlined_call_operand.vmem [shape: f32[32,1], index: 8, kind: input, shape index: {}]
  %s9 = inlined_call_operand.vmem [shape: f32[208,32], index: 9, kind: input, shape index: {}]
  %s10 = inlined_call_operand.vmem [shape: f32[208,1], index: 10, kind: input, shape index: {}]
  %s11 = inlined_call_operand.vmem [shape: f32[24,32], index: 11, kind: input, shape index: {}]
  %s12 = inlined_call_operand.vmem [shape: f32[1,32], index: 12, kind: input, shape index: {}]
  %s13 = inlined_call_operand.vmem [shape: f32[96,16], index: 13, kind: input, shape index: {}]
  %s14 = inlined_call_operand.vmem [shape: f32[1,16], index: 14, kind: input, shape index: {}]
  %s15 = inlined_call_operand.vmem [shape: f32[48,32], index: 15, kind: input, shape index: {}]
  %s16 = inlined_call_operand.vmem [shape: f32[1,32], index: 16, kind: input, shape index: {}]
  %s17 = inlined_call_operand.vmem [shape: f32[32,104], index: 17, kind: input, shape index: {}]
  %s18 = inlined_call_operand.vmem [shape: f32[1,104], index: 18, kind: input, shape index: {}]
  %s19 = inlined_call_operand.vmem [shape: f32[2,16,16], index: 19, kind: output, shape index: {0}]
  %s20 = inlined_call_operand.vmem [shape: f32[2,64,16], index: 20, kind: output, shape index: {1}]
  %s21 = inlined_call_operand.vmem [shape: f32[2,64,16], index: 21, kind: output, shape index: {2}]
  %s22 = inlined_call_operand.vmem [shape: f32[2,64,16], index: 22, kind: output, shape index: {3}]
  %23 = xla_tuple %s19, %s20, %s21, %s22
  %s24 = sld [smem:[#allocation0]]
  $region133: #{st_mdn_forward.1} parent=0
    _
  %s26 = ssub.s32 1, %s24
  %s27 = scalar_select 0, %s26, %s24
  loop: start=0, step=1, limit=4
  $region2: #{st_mdn_forward.1} parent=0 // loop_pre_header
    _
  $region3: #{st_mdn_forward.1} parent=0 // loop_header
    %s29 = sphi 0, %s33
    %p30 = scmp.ge.s32.totalorder %s29, 4
    %s39 = sphi 0, %s41
    %s42 = sphi 0, %s39
    %s43 = sphi 0, %s42
    %s59 = sphi 0, %s43
    %s65 = sphi 0, %s67
    %s68 = sphi 0, %s65
    %s69 = sphi 0, %s68
    %s85 = sphi 0, %s69
    %s89 = sphi 0, %s89
    %s91 = sphi 0, %s89
    %s92 = sphi 0, %s91
    %s106 = sphi 0, %s92
    %s110 = sphi 0, %s110
    %s112 = sphi 0, %s110
    %s113 = sphi 0, %s112
    %s127 = sphi 0, %s113
    %s131 = sphi 0, %s131
    %s133 = sphi 0, %s131
    %s134 = sphi 0, %s133
    %s148 = sphi 0, %s134
    %s152 = sphi 0, %s152
    %s154 = sphi 0, %s152
    %s155 = sphi 0, %s154
    %s169 = sphi 0, %s155
    %s173 = sphi 0, %s173
    %s175 = sphi 0, %s173
    %s176 = sphi 0, %s175
    %s190 = sphi 0, %s176
    %s194 = sphi 0, %s194
    %s196 = sphi 0, %s194
    %s197 = sphi 0, %s196
    %s211 = sphi 0, %s197
    %s215 = sphi 0, %s215
    %s217 = sphi 0, %s215
    %s218 = sphi 0, %s217
    %s232 = sphi 0, %s218
    %s236 = sphi 0, %s236
    %s238 = sphi 0, %s236
    %s239 = sphi 0, %s238
    %s253 = sphi 0, %s239
    %s257 = sphi 0, %s257
    %s259 = sphi 0, %s257
    %s260 = sphi 0, %s259
    %s274 = sphi 0, %s260
    %s278 = sphi 0, %s278
    %s280 = sphi 0, %s278
    %s281 = sphi 0, %s280
    %s295 = sphi 0, %s281
    %s299 = sphi 0, %s299
    %s301 = sphi 0, %s299
    %s302 = sphi 0, %s301
    %s316 = sphi 0, %s302
    %s320 = sphi 0, %s320
    %s322 = sphi 0, %s320
    %s323 = sphi 0, %s322
    %s337 = sphi 0, %s323
    %s341 = sphi 0, %s341
    %s343 = sphi 0, %s341
    %s344 = sphi 0, %s343
    %s358 = sphi 0, %s344
    %s362 = sphi 0, %s362
    %s364 = sphi 0, %s362
    %s365 = sphi 0, %s364
    %s379 = sphi 0, %s365
    %s383 = sphi 0, %s383
    %s385 = sphi 0, %s383
    %s386 = sphi 0, %s385
    %s400 = sphi 0, %s386
    %s404 = sphi 0, %s404
    %s406 = sphi 0, %s404
    %s407 = sphi 0, %s406
    %s421 = sphi 0, %s407
    %s425 = sphi 0, %s425
    %s427 = sphi 0, %s425
    %s428 = sphi 0, %s427
    %s442 = sphi 0, %s428
    %s448 = sphi 0, %s450
    %s451 = sphi 0, %s448
    %s452 = sphi 0, %s451
    %s468 = sphi 0, %s452
    %s474 = sphi 0, %s476
    %s477 = sphi 0, %s474
    %s478 = sphi 0, %s477
    %s494 = sphi 0, %s478
    %s500 = sphi 0, %s502
    %s503 = sphi 0, %s500
    %s504 = sphi 0, %s503
    %s520 = sphi 0, %s504
    %s526 = sphi 0, %s528
    %s529 = sphi 0, %s526
    %s530 = sphi 0, %s529
    %s546 = sphi 0, %s530
  $region4: #{st_mdn_forward.1} parent=0 // loop_header_branch
    %32 = sbr.rel (%p30) target = $region8
  $region5: #{st_mdn_forward.1} parent=0 // loop_body
    %s34 = ssub.s32 %s29, 1
    %s35 = ssub.s32 %s29, 2
    %s36 = sadd.s32 %s29, 1
    %s37 = ssub.s32 %s29, %s36
    %p38 = scmp.eq.s32.totalorder %s37, 0
    %s40 = sadd.s32 %s39, 1
    %s41 = scalar_select %p38, %s39, %s40
    %p44 = pneg %p38
    %p45 = scmp.eq.s32.totalorder %s29, 1
    %p46 = por %p44, %p45
    %p47 = scmp.ne.s32.totalorder %s39, %s42
    %p48 = scmp.eq.s32.totalorder %s29, 0
    %p49 = por %p47, %p48
    %p50 = scmp.ne.s32.totalorder %s39, %s42
    %p51 = scmp.eq.s32.totalorder %s34, 1
    %p52 = por %p50, %p51
    %p53 = scmp.ne.s32.totalorder %s42, %s43
    %p54 = scmp.eq.s32.totalorder %s34, 0
    %p55 = por %p53, %p54
    %p56 = scmp.ne.s32.totalorder %s42, %s43
    %p57 = scmp.eq.s32.totalorder %s35, 1
    %p58 = por %p56, %p57
    %p60 = scmp.ne.s32.totalorder %s43, %s59
    %p61 = scmp.eq.s32.totalorder %s35, 0
    %p62 = por %p60, %p61
    %s63 = ssub.s32 %s29, %s36
    %p64 = scmp.eq.s32.totalorder %s63, 0
    %s66 = sadd.s32 %s65, 1
    %s67 = scalar_select %p64, %s65, %s66
    %p70 = pneg %p64
    %p71 = scmp.eq.s32.totalorder %s29, 1
    %p72 = por %p70, %p71
    %p73 = scmp.ne.s32.totalorder %s65, %s68
    %p74 = scmp.eq.s32.totalorder %s29, 0
    %p75 = por %p73, %p74
    %p76 = scmp.ne.s32.totalorder %s65, %s68
    %p77 = scmp.eq.s32.totalorder %s34, 1
    %p78 = por %p76, %p77
    %p79 = scmp.ne.s32.totalorder %s68, %s69
    %p80 = scmp.eq.s32.totalorder %s34, 0
    %p81 = por %p79, %p80
    %p82 = scmp.ne.s32.totalorder %s68, %s69
    %p83 = scmp.eq.s32.totalorder %s35, 1
    %p84 = por %p82, %p83
    %p86 = scmp.ne.s32.totalorder %s69, %s85
    %p87 = scmp.eq.s32.totalorder %s35, 0
    %p88 = por %p86, %p87
    %s90 = sadd.s32 %s89, 1
    %p93 = scmp.eq.s32.totalorder %s29, 1
    %p94 = scmp.ne.s32.totalorder %s89, %s91
    %p95 = scmp.eq.s32.totalorder %s29, 0
    %p96 = por %p94, %p95
    %p97 = scmp.ne.s32.totalorder %s89, %s91
    %p98 = scmp.eq.s32.totalorder %s34, 1
    %p99 = por %p97, %p98
    %p100 = scmp.ne.s32.totalorder %s91, %s92
    %p101 = scmp.eq.s32.totalorder %s34, 0
    %p102 = por %p100, %p101
    %p103 = scmp.ne.s32.totalorder %s91, %s92
    %p104 = scmp.eq.s32.totalorder %s35, 1
    %p105 = por %p103, %p104
    %p107 = scmp.ne.s32.totalorder %s92, %s106
    %p108 = scmp.eq.s32.totalorder %s35, 0
    %p109 = por %p107, %p108
    %s111 = sadd.s32 %s110, 1
    %p114 = scmp.eq.s32.totalorder %s29, 1
    %p115 = scmp.ne.s32.totalorder %s110, %s112
    %p116 = scmp.eq.s32.totalorder %s29, 0
    %p117 = por %p115, %p116
    %p118 = scmp.ne.s32.totalorder %s110, %s112
    %p119 = scmp.eq.s32.totalorder %s34, 1
    %p120 = por %p118, %p119
    %p121 = scmp.ne.s32.totalorder %s112, %s113
    %p122 = scmp.eq.s32.totalorder %s34, 0
    %p123 = por %p121, %p122
    %p124 = scmp.ne.s32.totalorder %s112, %s113
    %p125 = scmp.eq.s32.totalorder %s35, 1
    %p126 = por %p124, %p125
    %p128 = scmp.ne.s32.totalorder %s113, %s127
    %p129 = scmp.eq.s32.totalorder %s35, 0
    %p130 = por %p128, %p129
    %s132 = sadd.s32 %s131, 1
    %p135 = scmp.eq.s32.totalorder %s29, 1
    %p136 = scmp.ne.s32.totalorder %s131, %s133
    %p137 = scmp.eq.s32.totalorder %s29, 0
    %p138 = por %p136, %p137
    %p139 = scmp.ne.s32.totalorder %s131, %s133
    %p140 = scmp.eq.s32.totalorder %s34, 1
    %p141 = por %p139, %p140
    %p142 = scmp.ne.s32.totalorder %s133, %s134
    %p143 = scmp.eq.s32.totalorder %s34, 0
    %p144 = por %p142, %p143
    %p145 = scmp.ne.s32.totalorder %s133, %s134
    %p146 = scmp.eq.s32.totalorder %s35, 1
    %p147 = por %p145, %p146
    %p149 = scmp.ne.s32.totalorder %s134, %s148
    %p150 = scmp.eq.s32.totalorder %s35, 0
    %p151 = por %p149, %p150
    %s153 = sadd.s32 %s152, 1
    %p156 = scmp.eq.s32.totalorder %s29, 1
    %p157 = scmp.ne.s32.totalorder %s152, %s154
    %p158 = scmp.eq.s32.totalorder %s29, 0
    %p159 = por %p157, %p158
    %p160 = scmp.ne.s32.totalorder %s152, %s154
    %p161 = scmp.eq.s32.totalorder %s34, 1
    %p162 = por %p160, %p161
    %p163 = scmp.ne.s32.totalorder %s154, %s155
    %p164 = scmp.eq.s32.totalorder %s34, 0
    %p165 = por %p163, %p164
    %p166 = scmp.ne.s32.totalorder %s154, %s155
    %p167 = scmp.eq.s32.totalorder %s35, 1
    %p168 = por %p166, %p167
    %p170 = scmp.ne.s32.totalorder %s155, %s169
    %p171 = scmp.eq.s32.totalorder %s35, 0
    %p172 = por %p170, %p171
    %s174 = sadd.s32 %s173, 1
    %p177 = scmp.eq.s32.totalorder %s29, 1
    %p178 = scmp.ne.s32.totalorder %s173, %s175
    %p179 = scmp.eq.s32.totalorder %s29, 0
    %p180 = por %p178, %p179
    %p181 = scmp.ne.s32.totalorder %s173, %s175
    %p182 = scmp.eq.s32.totalorder %s34, 1
    %p183 = por %p181, %p182
    %p184 = scmp.ne.s32.totalorder %s175, %s176
    %p185 = scmp.eq.s32.totalorder %s34, 0
    %p186 = por %p184, %p185
    %p187 = scmp.ne.s32.totalorder %s175, %s176
    %p188 = scmp.eq.s32.totalorder %s35, 1
    %p189 = por %p187, %p188
    %p191 = scmp.ne.s32.totalorder %s176, %s190
    %p192 = scmp.eq.s32.totalorder %s35, 0
    %p193 = por %p191, %p192
    %s195 = sadd.s32 %s194, 1
    %p198 = scmp.eq.s32.totalorder %s29, 1
    %p199 = scmp.ne.s32.totalorder %s194, %s196
    %p200 = scmp.eq.s32.totalorder %s29, 0
    %p201 = por %p199, %p200
    %p202 = scmp.ne.s32.totalorder %s194, %s196
    %p203 = scmp.eq.s32.totalorder %s34, 1
    %p204 = por %p202, %p203
    %p205 = scmp.ne.s32.totalorder %s196, %s197
    %p206 = scmp.eq.s32.totalorder %s34, 0
    %p207 = por %p205, %p206
    %p208 = scmp.ne.s32.totalorder %s196, %s197
    %p209 = scmp.eq.s32.totalorder %s35, 1
    %p210 = por %p208, %p209
    %p212 = scmp.ne.s32.totalorder %s197, %s211
    %p213 = scmp.eq.s32.totalorder %s35, 0
    %p214 = por %p212, %p213
    %s216 = sadd.s32 %s215, 1
    %p219 = scmp.eq.s32.totalorder %s29, 1
    %p220 = scmp.ne.s32.totalorder %s215, %s217
    %p221 = scmp.eq.s32.totalorder %s29, 0
    %p222 = por %p220, %p221
    %p223 = scmp.ne.s32.totalorder %s215, %s217
    %p224 = scmp.eq.s32.totalorder %s34, 1
    %p225 = por %p223, %p224
    %p226 = scmp.ne.s32.totalorder %s217, %s218
    %p227 = scmp.eq.s32.totalorder %s34, 0
    %p228 = por %p226, %p227
    %p229 = scmp.ne.s32.totalorder %s217, %s218
    %p230 = scmp.eq.s32.totalorder %s35, 1
    %p231 = por %p229, %p230
    %p233 = scmp.ne.s32.totalorder %s218, %s232
    %p234 = scmp.eq.s32.totalorder %s35, 0
    %p235 = por %p233, %p234
    %s237 = sadd.s32 %s236, 1
    %p240 = scmp.eq.s32.totalorder %s29, 1
    %p241 = scmp.ne.s32.totalorder %s236, %s238
    %p242 = scmp.eq.s32.totalorder %s29, 0
    %p243 = por %p241, %p242
    %p244 = scmp.ne.s32.totalorder %s236, %s238
    %p245 = scmp.eq.s32.totalorder %s34, 1
    %p246 = por %p244, %p245
    %p247 = scmp.ne.s32.totalorder %s238, %s239
    %p248 = scmp.eq.s32.totalorder %s34, 0
    %p249 = por %p247, %p248
    %p250 = scmp.ne.s32.totalorder %s238, %s239
    %p251 = scmp.eq.s32.totalorder %s35, 1
    %p252 = por %p250, %p251
    %p254 = scmp.ne.s32.totalorder %s239, %s253
    %p255 = scmp.eq.s32.totalorder %s35, 0
    %p256 = por %p254, %p255
    %s258 = sadd.s32 %s257, 1
    %p261 = scmp.eq.s32.totalorder %s29, 1
    %p262 = scmp.ne.s32.totalorder %s257, %s259
    %p263 = scmp.eq.s32.totalorder %s29, 0
    %p264 = por %p262, %p263
    %p265 = scmp.ne.s32.totalorder %s257, %s259
    %p266 = scmp.eq.s32.totalorder %s34, 1
    %p267 = por %p265, %p266
    %p268 = scmp.ne.s32.totalorder %s259, %s260
    %p269 = scmp.eq.s32.totalorder %s34, 0
    %p270 = por %p268, %p269
    %p271 = scmp.ne.s32.totalorder %s259, %s260
    %p272 = scmp.eq.s32.totalorder %s35, 1
    %p273 = por %p271, %p272
    %p275 = scmp.ne.s32.totalorder %s260, %s274
    %p276 = scmp.eq.s32.totalorder %s35, 0
    %p277 = por %p275, %p276
    %s279 = sadd.s32 %s278, 1
    %p282 = scmp.eq.s32.totalorder %s29, 1
    %p283 = scmp.ne.s32.totalorder %s278, %s280
    %p284 = scmp.eq.s32.totalorder %s29, 0
    %p285 = por %p283, %p284
    %p286 = scmp.ne.s32.totalorder %s278, %s280
    %p287 = scmp.eq.s32.totalorder %s34, 1
    %p288 = por %p286, %p287
    %p289 = scmp.ne.s32.totalorder %s280, %s281
    %p290 = scmp.eq.s32.totalorder %s34, 0
    %p291 = por %p289, %p290
    %p292 = scmp.ne.s32.totalorder %s280, %s281
    %p293 = scmp.eq.s32.totalorder %s35, 1
    %p294 = por %p292, %p293
    %p296 = scmp.ne.s32.totalorder %s281, %s295
    %p297 = scmp.eq.s32.totalorder %s35, 0
    %p298 = por %p296, %p297
    %s300 = sadd.s32 %s299, 1
    %p303 = scmp.eq.s32.totalorder %s29, 1
    %p304 = scmp.ne.s32.totalorder %s299, %s301
    %p305 = scmp.eq.s32.totalorder %s29, 0
    %p306 = por %p304, %p305
    %p307 = scmp.ne.s32.totalorder %s299, %s301
    %p308 = scmp.eq.s32.totalorder %s34, 1
    %p309 = por %p307, %p308
    %p310 = scmp.ne.s32.totalorder %s301, %s302
    %p311 = scmp.eq.s32.totalorder %s34, 0
    %p312 = por %p310, %p311
    %p313 = scmp.ne.s32.totalorder %s301, %s302
    %p314 = scmp.eq.s32.totalorder %s35, 1
    %p315 = por %p313, %p314
    %p317 = scmp.ne.s32.totalorder %s302, %s316
    %p318 = scmp.eq.s32.totalorder %s35, 0
    %p319 = por %p317, %p318
    %s321 = sadd.s32 %s320, 1
    %p324 = scmp.eq.s32.totalorder %s29, 1
    %p325 = scmp.ne.s32.totalorder %s320, %s322
    %p326 = scmp.eq.s32.totalorder %s29, 0
    %p327 = por %p325, %p326
    %p328 = scmp.ne.s32.totalorder %s320, %s322
    %p329 = scmp.eq.s32.totalorder %s34, 1
    %p330 = por %p328, %p329
    %p331 = scmp.ne.s32.totalorder %s322, %s323
    %p332 = scmp.eq.s32.totalorder %s34, 0
    %p333 = por %p331, %p332
    %p334 = scmp.ne.s32.totalorder %s322, %s323
    %p335 = scmp.eq.s32.totalorder %s35, 1
    %p336 = por %p334, %p335
    %p338 = scmp.ne.s32.totalorder %s323, %s337
    %p339 = scmp.eq.s32.totalorder %s35, 0
    %p340 = por %p338, %p339
    %s342 = sadd.s32 %s341, 1
    %p345 = scmp.eq.s32.totalorder %s29, 1
    %p346 = scmp.ne.s32.totalorder %s341, %s343
    %p347 = scmp.eq.s32.totalorder %s29, 0
    %p348 = por %p346, %p347
    %p349 = scmp.ne.s32.totalorder %s341, %s343
    %p350 = scmp.eq.s32.totalorder %s34, 1
    %p351 = por %p349, %p350
    %p352 = scmp.ne.s32.totalorder %s343, %s344
    %p353 = scmp.eq.s32.totalorder %s34, 0
    %p354 = por %p352, %p353
    %p355 = scmp.ne.s32.totalorder %s343, %s344
    %p356 = scmp.eq.s32.totalorder %s35, 1
    %p357 = por %p355, %p356
    %p359 = scmp.ne.s32.totalorder %s344, %s358
    %p360 = scmp.eq.s32.totalorder %s35, 0
    %p361 = por %p359, %p360
    %s363 = sadd.s32 %s362, 1
    %p366 = scmp.eq.s32.totalorder %s29, 1
    %p367 = scmp.ne.s32.totalorder %s362, %s364
    %p368 = scmp.eq.s32.totalorder %s29, 0
    %p369 = por %p367, %p368
    %p370 = scmp.ne.s32.totalorder %s362, %s364
    %p371 = scmp.eq.s32.totalorder %s34, 1
    %p372 = por %p370, %p371
    %p373 = scmp.ne.s32.totalorder %s364, %s365
    %p374 = scmp.eq.s32.totalorder %s34, 0
    %p375 = por %p373, %p374
    %p376 = scmp.ne.s32.totalorder %s364, %s365
    %p377 = scmp.eq.s32.totalorder %s35, 1
    %p378 = por %p376, %p377
    %p380 = scmp.ne.s32.totalorder %s365, %s379
    %p381 = scmp.eq.s32.totalorder %s35, 0
    %p382 = por %p380, %p381
    %s384 = sadd.s32 %s383, 1
    %p387 = scmp.eq.s32.totalorder %s29, 1
    %p388 = scmp.ne.s32.totalorder %s383, %s385
    %p389 = scmp.eq.s32.totalorder %s29, 0
    %p390 = por %p388, %p389
    %p391 = scmp.ne.s32.totalorder %s383, %s385
    %p392 = scmp.eq.s32.totalorder %s34, 1
    %p393 = por %p391, %p392
    %p394 = scmp.ne.s32.totalorder %s385, %s386
    %p395 = scmp.eq.s32.totalorder %s34, 0
    %p396 = por %p394, %p395
    %p397 = scmp.ne.s32.totalorder %s385, %s386
    %p398 = scmp.eq.s32.totalorder %s35, 1
    %p399 = por %p397, %p398
    %p401 = scmp.ne.s32.totalorder %s386, %s400
    %p402 = scmp.eq.s32.totalorder %s35, 0
    %p403 = por %p401, %p402
    %s405 = sadd.s32 %s404, 1
    %p408 = scmp.eq.s32.totalorder %s29, 1
    %p409 = scmp.ne.s32.totalorder %s404, %s406
    %p410 = scmp.eq.s32.totalorder %s29, 0
    %p411 = por %p409, %p410
    %p412 = scmp.ne.s32.totalorder %s404, %s406
    %p413 = scmp.eq.s32.totalorder %s34, 1
    %p414 = por %p412, %p413
    %p415 = scmp.ne.s32.totalorder %s406, %s407
    %p416 = scmp.eq.s32.totalorder %s34, 0
    %p417 = por %p415, %p416
    %p418 = scmp.ne.s32.totalorder %s406, %s407
    %p419 = scmp.eq.s32.totalorder %s35, 1
    %p420 = por %p418, %p419
    %p422 = scmp.ne.s32.totalorder %s407, %s421
    %p423 = scmp.eq.s32.totalorder %s35, 0
    %p424 = por %p422, %p423
    %s426 = sadd.s32 %s425, 1
    %p429 = scmp.eq.s32.totalorder %s29, 1
    %p430 = scmp.ne.s32.totalorder %s425, %s427
    %p431 = scmp.eq.s32.totalorder %s29, 0
    %p432 = por %p430, %p431
    %p433 = scmp.ne.s32.totalorder %s425, %s427
    %p434 = scmp.eq.s32.totalorder %s34, 1
    %p435 = por %p433, %p434
    %p436 = scmp.ne.s32.totalorder %s427, %s428
    %p437 = scmp.eq.s32.totalorder %s34, 0
    %p438 = por %p436, %p437
    %p439 = scmp.ne.s32.totalorder %s427, %s428
    %p440 = scmp.eq.s32.totalorder %s35, 1
    %p441 = por %p439, %p440
    %p443 = scmp.ne.s32.totalorder %s428, %s442
    %p444 = scmp.eq.s32.totalorder %s35, 0
    %p445 = por %p443, %p444
    %s446 = ssub.s32 %s29, %s36
    %p447 = scmp.eq.s32.totalorder %s446, 0
    %s449 = sadd.s32 %s448, 1
    %s450 = scalar_select %p447, %s448, %s449
    %p453 = pneg %p447
    %p454 = scmp.eq.s32.totalorder %s29, 1
    %p455 = por %p453, %p454
    %p456 = scmp.ne.s32.totalorder %s448, %s451
    %p457 = scmp.eq.s32.totalorder %s29, 0
    %p458 = por %p456, %p457
    %p459 = scmp.ne.s32.totalorder %s448, %s451
    %p460 = scmp.eq.s32.totalorder %s34, 1
    %p461 = por %p459, %p460
    %p462 = scmp.ne.s32.totalorder %s451, %s452
    %p463 = scmp.eq.s32.totalorder %s34, 0
    %p464 = por %p462, %p463
    %p465 = scmp.ne.s32.totalorder %s451, %s452
    %p466 = scmp.eq.s32.totalorder %s35, 1
    %p467 = por %p465, %p466
    %p469 = scmp.ne.s32.totalorder %s452, %s468
    %p470 = scmp.eq.s32.totalorder %s35, 0
    %p471 = por %p469, %p470
    %s472 = ssub.s32 %s29, %s36
    %p473 = scmp.eq.s32.totalorder %s472, 0
    %s475 = sadd.s32 %s474, 1
    %s476 = scalar_select %p473, %s474, %s475
    %p479 = pneg %p473
    %p480 = scmp.eq.s32.totalorder %s29, 1
    %p481 = por %p479, %p480
    %p482 = scmp.ne.s32.totalorder %s474, %s477
    %p483 = scmp.eq.s32.totalorder %s29, 0
    %p484 = por %p482, %p483
    %p485 = scmp.ne.s32.totalorder %s474, %s477
    %p486 = scmp.eq.s32.totalorder %s34, 1
    %p487 = por %p485, %p486
    %p488 = scmp.ne.s32.totalorder %s477, %s478
    %p489 = scmp.eq.s32.totalorder %s34, 0
    %p490 = por %p488, %p489
    %p491 = scmp.ne.s32.totalorder %s477, %s478
    %p492 = scmp.eq.s32.totalorder %s35, 1
    %p493 = por %p491, %p492
    %p495 = scmp.ne.s32.totalorder %s478, %s494
    %p496 = scmp.eq.s32.totalorder %s35, 0
    %p497 = por %p495, %p496
    %s498 = ssub.s32 %s29, %s36
    %p499 = scmp.eq.s32.totalorder %s498, 0
    %s501 = sadd.s32 %s500, 1
    %s502 = scalar_select %p499, %s500, %s501
    %p505 = pneg %p499
    %p506 = scmp.eq.s32.totalorder %s29, 1
    %p507 = por %p505, %p506
    %p508 = scmp.ne.s32.totalorder %s500, %s503
    %p509 = scmp.eq.s32.totalorder %s29, 0
    %p510 = por %p508, %p509
    %p511 = scmp.ne.s32.totalorder %s500, %s503
    %p512 = scmp.eq.s32.totalorder %s34, 1
    %p513 = por %p511, %p512
    %p514 = scmp.ne.s32.totalorder %s503, %s504
    %p515 = scmp.eq.s32.totalorder %s34, 0
    %p516 = por %p514, %p515
    %p517 = scmp.ne.s32.totalorder %s503, %s504
    %p518 = scmp.eq.s32.totalorder %s35, 1
    %p519 = por %p517, %p518
    %p521 = scmp.ne.s32.totalorder %s504, %s520
    %p522 = scmp.eq.s32.totalorder %s35, 0
    %p523 = por %p521, %p522
    %s524 = ssub.s32 %s29, %s36
    %p525 = scmp.eq.s32.totalorder %s524, 0
    %s527 = sadd.s32 %s526, 1
    %s528 = scalar_select %p525, %s526, %s527
    %p531 = pneg %p525
    %p532 = scmp.eq.s32.totalorder %s29, 1
    %p533 = por %p531, %p532
    %p534 = scmp.ne.s32.totalorder %s526, %s529
    %p535 = scmp.eq.s32.totalorder %s29, 0
    %p536 = por %p534, %p535
    %p537 = scmp.ne.s32.totalorder %s526, %s529
    %p538 = scmp.eq.s32.totalorder %s34, 1
    %p539 = por %p537, %p538
    %p540 = scmp.ne.s32.totalorder %s529, %s530
    %p541 = scmp.eq.s32.totalorder %s34, 0
    %p542 = por %p540, %p541
    %p543 = scmp.ne.s32.totalorder %s529, %s530
    %p544 = scmp.eq.s32.totalorder %s35, 1
    %p545 = por %p543, %p544
    %p547 = scmp.ne.s32.totalorder %s530, %s546
    %p548 = scmp.eq.s32.totalorder %s35, 0
    %p549 = por %p547, %p548
    %p550 = scmp.le.s32.totalorder 1, %s29
    %p551 = scmp.lt.s32.totalorder %s29, 3
    %p552 = pnand %p550, %p551
    %p553 = pneg %p552
    // Predicated region
    $region9: #{st_mdn_forward.1} parent=5 // pred_check
      _
    $region10: #{st_mdn_forward.1} parent=5 // pred_check_branch
      %555 = sbr.rel (%p552) target = $region12
    $region11: #{st_mdn_forward.1} parent=5 // pred_region
      %s556 = ssub.s32 %s29, 1
      // Predicated region
      $region13: #{st_mdn_forward.1} parent=11 // pred_check
        %p557 = pneg %p102
      $region14: #{st_mdn_forward.1} parent=11 // pred_check_branch
        %559 = sbr.rel (%p557) target = $region16
      $region15: #{st_mdn_forward.1} parent=11 // pred_region
        _
      $region16: #{st_mdn_forward.1} parent=11 // pred_fallthru
        _
      // Predicated region
      $region17: #{st_mdn_forward.1} parent=11 // pred_check
        %p560 = pneg %p123
      $region18: #{st_mdn_forward.1} parent=11 // pred_check_branch
        %562 = sbr.rel (%p560) target = $region20
      $region19: #{st_mdn_forward.1} parent=11 // pred_region
        _
      $region20: #{st_mdn_forward.1} parent=11 // pred_fallthru
        _
      // Predicated region
      $region21: #{st_mdn_forward.1} parent=11 // pred_check
        %p563 = pneg %p144
      $region22: #{st_mdn_forward.1} parent=11 // pred_check_branch
        %565 = sbr.rel (%p563) target = $region24
      $region23: #{st_mdn_forward.1} parent=11 // pred_region
        _
      $region24: #{st_mdn_forward.1} parent=11 // pred_fallthru
        _
      // Predicated region
      $region25: #{st_mdn_forward.1} parent=11 // pred_check
        %p566 = pneg %p165
      $region26: #{st_mdn_forward.1} parent=11 // pred_check_branch
        %568 = sbr.rel (%p566) target = $region28
      $region27: #{st_mdn_forward.1} parent=11 // pred_region
        _
      $region28: #{st_mdn_forward.1} parent=11 // pred_fallthru
        _
      // Predicated region
      $region29: #{st_mdn_forward.1} parent=11 // pred_check
        %p569 = pneg %p186
      $region30: #{st_mdn_forward.1} parent=11 // pred_check_branch
        %571 = sbr.rel (%p569) target = $region32
      $region31: #{st_mdn_forward.1} parent=11 // pred_region
        _
      $region32: #{st_mdn_forward.1} parent=11 // pred_fallthru
        _
      // Predicated region
      $region33: #{st_mdn_forward.1} parent=11 // pred_check
        %p572 = pneg %p207
      $region34: #{st_mdn_forward.1} parent=11 // pred_check_branch
        %574 = sbr.rel (%p572) target = $region36
      $region35: #{st_mdn_forward.1} parent=11 // pred_region
        _
      $region36: #{st_mdn_forward.1} parent=11 // pred_fallthru
        _
      // Predicated region
      $region37: #{st_mdn_forward.1} parent=11 // pred_check
        %p575 = pneg %p228
      $region38: #{st_mdn_forward.1} parent=11 // pred_check_branch
        %577 = sbr.rel (%p575) target = $region40
      $region39: #{st_mdn_forward.1} parent=11 // pred_region
        _
      $region40: #{st_mdn_forward.1} parent=11 // pred_fallthru
        _
      // Predicated region
      $region41: #{st_mdn_forward.1} parent=11 // pred_check
        %p578 = pneg %p249
      $region42: #{st_mdn_forward.1} parent=11 // pred_check_branch
        %580 = sbr.rel (%p578) target = $region44
      $region43: #{st_mdn_forward.1} parent=11 // pred_region
        _
      $region44: #{st_mdn_forward.1} parent=11 // pred_fallthru
        _
      // Predicated region
      $region45: #{st_mdn_forward.1} parent=11 // pred_check
        %p581 = pneg %p270
      $region46: #{st_mdn_forward.1} parent=11 // pred_check_branch
        %583 = sbr.rel (%p581) target = $region48
      $region47: #{st_mdn_forward.1} parent=11 // pred_region
        _
      $region48: #{st_mdn_forward.1} parent=11 // pred_fallthru
        _
      // Predicated region
      $region49: #{st_mdn_forward.1} parent=11 // pred_check
        %p584 = pneg %p291
      $region50: #{st_mdn_forward.1} parent=11 // pred_check_branch
        %586 = sbr.rel (%p584) target = $region52
      $region51: #{st_mdn_forward.1} parent=11 // pred_region
        _
      $region52: #{st_mdn_forward.1} parent=11 // pred_fallthru
        _
      // Predicated region
      $region53: #{st_mdn_forward.1} parent=11 // pred_check
        %p587 = pneg %p312
      $region54: #{st_mdn_forward.1} parent=11 // pred_check_branch
        %589 = sbr.rel (%p587) target = $region56
      $region55: #{st_mdn_forward.1} parent=11 // pred_region
        _
      $region56: #{st_mdn_forward.1} parent=11 // pred_fallthru
        _
      // Predicated region
      $region57: #{st_mdn_forward.1} parent=11 // pred_check
        %p590 = pneg %p333
      $region58: #{st_mdn_forward.1} parent=11 // pred_check_branch
        %592 = sbr.rel (%p590) target = $region60
      $region59: #{st_mdn_forward.1} parent=11 // pred_region
        _
      $region60: #{st_mdn_forward.1} parent=11 // pred_fallthru
        _
      // Predicated region
      $region61: #{st_mdn_forward.1} parent=11 // pred_check
        %p593 = pneg %p354
      $region62: #{st_mdn_forward.1} parent=11 // pred_check_branch
        %595 = sbr.rel (%p593) target = $region64
      $region63: #{st_mdn_forward.1} parent=11 // pred_region
        _
      $region64: #{st_mdn_forward.1} parent=11 // pred_fallthru
        _
      // Predicated region
      $region65: #{st_mdn_forward.1} parent=11 // pred_check
        %p596 = pneg %p375
      $region66: #{st_mdn_forward.1} parent=11 // pred_check_branch
        %598 = sbr.rel (%p596) target = $region68
      $region67: #{st_mdn_forward.1} parent=11 // pred_region
        _
      $region68: #{st_mdn_forward.1} parent=11 // pred_fallthru
        _
      // Predicated region
      $region69: #{st_mdn_forward.1} parent=11 // pred_check
        %p599 = pneg %p396
      $region70: #{st_mdn_forward.1} parent=11 // pred_check_branch
        %601 = sbr.rel (%p599) target = $region72
      $region71: #{st_mdn_forward.1} parent=11 // pred_region
        _
      $region72: #{st_mdn_forward.1} parent=11 // pred_fallthru
        _
      // Predicated region
      $region73: #{st_mdn_forward.1} parent=11 // pred_check
        %p602 = pneg %p417
      $region74: #{st_mdn_forward.1} parent=11 // pred_check_branch
        %604 = sbr.rel (%p602) target = $region76
      $region75: #{st_mdn_forward.1} parent=11 // pred_region
        _
      $region76: #{st_mdn_forward.1} parent=11 // pred_fallthru
        _
      // Predicated region
      $region77: #{st_mdn_forward.1} parent=11 // pred_check
        %p605 = pneg %p438
      $region78: #{st_mdn_forward.1} parent=11 // pred_check_branch
        %607 = sbr.rel (%p605) target = $region80
      $region79: #{st_mdn_forward.1} parent=11 // pred_region
        _
      $region80: #{st_mdn_forward.1} parent=11 // pred_fallthru
        _
    $region12: #{st_mdn_forward.1} parent=5 // pred_fallthru
      _
    %p608 = scmp.lt.s32.totalorder %s29, 2
    // Predicated region
    $region81: #{st_mdn_forward.1} parent=5 // pred_check
      %p609 = pneg %p608
    $region82: #{st_mdn_forward.1} parent=5 // pred_check_branch
      %611 = sbr.rel (%p609) target = $region84
    $region83: #{st_mdn_forward.1} parent=5 // pred_region
      // Predicated region
      $region85: #{st_mdn_forward.1} parent=83 // pred_check
        %p612 = pneg %p49
      $region86: #{st_mdn_forward.1} parent=83 // pred_check_branch
        %614 = sbr.rel (%p612) target = $region88
      $region87: #{st_mdn_forward.1} parent=83 // pred_region
        %p615 = scmp.lt.s32.totalorder %s29, 1
        %s616 = scalar_select %p615, %s29, 1
        %s617 = smul.addr %s616, 2
        %s618 = smul.addr %s617, 8
        %s619 = scalar_lea.vmem %s0, %s618
      $region88: #{st_mdn_forward.1} parent=83 // pred_fallthru
        _
      // Predicated region
      $region89: #{st_mdn_forward.1} parent=83 // pred_check
        %p620 = pneg %p75
      $region90: #{st_mdn_forward.1} parent=83 // pred_check_branch
        %622 = sbr.rel (%p620) target = $region92
      $region91: #{st_mdn_forward.1} parent=83 // pred_region
        %p623 = scmp.lt.s32.totalorder %s29, 1
        %s624 = scalar_select %p623, %s29, 1
        %s625 = smul.addr %s624, 4
        %s626 = smul.addr %s625, 8
        %s627 = scalar_lea.vmem %s1, %s626
      $region92: #{st_mdn_forward.1} parent=83 // pred_fallthru
        _
    $region84: #{st_mdn_forward.1} parent=5 // pred_fallthru
      _
    %p628 = scmp.le.s32.totalorder 1, %s29
    %p629 = scmp.lt.s32.totalorder %s29, 3
    %p630 = pnand %p628, %p629
    %p631 = pneg %p630
    // Predicated region
    $region93: #{st_mdn_forward.1} parent=5 // pred_check
      _
    $region94: #{st_mdn_forward.1} parent=5 // pred_check_branch
      %633 = sbr.rel (%p630) target = $region96
    $region95: #{st_mdn_forward.1} parent=5 // pred_region
      %s634 = ssub.s32 %s29, 1
      %p635 = scmp.lt.s32.totalorder %s34, 1
      %s636 = scalar_select %p635, %s34, 1
      %s637 = smul.addr %s636, 2
      %s638 = smul.addr %s637, 8
      %s639 = scalar_lea.vmem %s0, %s638
      %p640 = pneg %p55
      %p641 = pneg %p52
      %p642 = scmp.lt.s32.totalorder %s34, 1
      %s643 = scalar_select %p642, %s34, 1
      %s644 = smul.addr %s643, 4
      %s645 = smul.addr %s644, 8
      %s646 = scalar_lea.vmem %s1, %s645
      %p647 = pneg %p81
      %p648 = pneg %p78
      %p649 = pneg %p102
      %p650 = pneg %p99
      %p651 = pneg %p123
      %p652 = pneg %p120
      %p653 = pneg %p144
      %p654 = pneg %p141
      %p655 = pneg %p165
      %p656 = pneg %p162
      %p657 = pneg %p186
      %p658 = pneg %p183
      %p659 = pneg %p207
      %p660 = pneg %p204
      %p661 = pneg %p228
      %p662 = pneg %p225
      %p663 = pneg %p249
      %p664 = pneg %p246
      %p665 = pneg %p270
      %p666 = pneg %p267
      %p667 = pneg %p291
      %p668 = pneg %p288
      %p669 = pneg %p312
      %p670 = pneg %p309
      %p671 = pneg %p333
      %p672 = pneg %p330
      %p673 = pneg %p354
      %p674 = pneg %p351
      %p675 = pneg %p375
      %p676 = pneg %p372
      %p677 = pneg %p396
      %p678 = pneg %p393
      %p679 = pneg %p417
      %p680 = pneg %p414
      %p681 = pneg %p438
      %p682 = pneg %p435
      %p683 = pneg %p464
      %p684 = pneg %p461
      %p685 = scmp.lt.s32.totalorder %s34, 1
      %s686 = scalar_select %p685, %s34, 1
      %s687 = smul.addr %s686, 2
      %s688 = smul.addr %s687, 8
      %s689 = scalar_lea.vmem %s19, %s688
      %p690 = pneg %p490
      %p691 = pneg %p487
      %p692 = scmp.lt.s32.totalorder %s34, 1
      %s693 = scalar_select %p692, %s34, 1
      %s694 = smul.addr %s693, 8
      %s695 = smul.addr %s694, 8
      %s696 = scalar_lea.vmem %s20, %s695
      %p697 = pneg %p516
      %p698 = pneg %p513
      %p699 = scmp.lt.s32.totalorder %s34, 1
      %s700 = scalar_select %p699, %s34, 1
      %s701 = smul.addr %s700, 8
      %s702 = smul.addr %s701, 8
      %s703 = scalar_lea.vmem %s21, %s702
      %p704 = pneg %p542
      %p705 = pneg %p539
      %p706 = scmp.lt.s32.totalorder %s34, 1
      %s707 = scalar_select %p706, %s34, 1
      %s708 = smul.addr %s707, 8
      %s709 = smul.addr %s708, 8
      %s710 = scalar_lea.vmem %s22, %s709
      %p711 = scmp.lt.s32.totalorder %s34, 1
      %s712 = scalar_select %p711, %s34, 1
      %s713 = smul.addr %s712, 2
      %s714 = smul.addr %s713, 8
      %s715 = scalar_lea.vmem %s0, %s714
      %p716 = scmp.lt.s32.totalorder %s34, 1
      %s717 = scalar_select %p716, %s34, 1
      %s718 = smul.addr %s717, 4
      %s719 = smul.addr %s718, 8
      %s720 = scalar_lea.vmem %s1, %s719
      %p721 = scmp.lt.s32.totalorder %s34, 1
      %s722 = scalar_select %p721, %s34, 1
      %s723 = smul.addr %s722, 2
      %s724 = smul.addr %s723, 8
      %s725 = scalar_lea.vmem %s19, %s724
      %p726 = scmp.lt.s32.totalorder %s34, 1
      %s727 = scalar_select %p726, %s34, 1
      %s728 = smul.addr %s727, 8
      %s729 = smul.addr %s728, 8
      %s730 = scalar_lea.vmem %s20, %s729
      %p731 = scmp.lt.s32.totalorder %s34, 1
      %s732 = scalar_select %p731, %s34, 1
      %s733 = smul.addr %s732, 8
      %s734 = smul.addr %s733, 8
      %s735 = scalar_lea.vmem %s21, %s734
      %p736 = scmp.lt.s32.totalorder %s34, 1
      %s737 = scalar_select %p736, %s34, 1
      %s738 = smul.addr %s737, 8
      %s739 = smul.addr %s738, 8
      %s740 = scalar_lea.vmem %s22, %s739
      %v741 = vld [vmem:[%s715] sm:$0xff]
      %v742 = vld [vmem:[%s715 + $0x8] sm:$0xff]
      %v743 = vld [vmem:[%s720] sm:$0xff]
      %v744 = vld [vmem:[%s720 + $0x8] sm:$0xff]
      %v745 = vld [vmem:[%s720 + $0x10] sm:$0xff]
      %v746 = vld [vmem:[%s720 + $0x18] sm:$0xff]
      %v747 = vld [vmem:[%s2] sm:$0xff]
      %v748 = vld [vmem:[%s2 + $0x8] sm:$0xff]
      %v749 = vld [vmem:[%s2 + $0x10] sm:$0xff]
      %v750 = vld [vmem:[%s2 + $0x18] sm:$0xff]
      %v751 = vld [vmem:[%s3] sm:$0xff]
      %v752 = vld [vmem:[%s3 + $0x8] sm:$0xff]
      %v753 = vld [vmem:[%s3 + $0x10] sm:$0xff]
      %v754 = vld [vmem:[%s3 + $0x18] sm:$0xff]
      %v755 = vld [vmem:[%s4] sm:$0xff]
      %v756 = vld [vmem:[%s4 + $0x8] sm:$0xff]
      %v757 = vld [vmem:[%s4 + $0x10] sm:$0xff]
      %v758 = vld [vmem:[%s4 + $0x18] sm:$0xff]
      %760 = vset.pattern.permute.xlu0 0
      %761 = vperm.xlu0 %760, %v755
      %v762 = vpop.permute.xlu0 %761
      %765 = vset.pattern.permute.xlu0 0
      %766 = vperm.xlu0 %765, %v756
      %v767 = vpop.permute.xlu0 %766
      %770 = vset.pattern.permute.xlu0 0
      %771 = vperm.xlu0 %770, %v757
      %v772 = vpop.permute.xlu0 %771
      %775 = vset.pattern.permute.xlu0 0
      %776 = vperm.xlu0 %775, %v758
      %v777 = vpop.permute.xlu0 %776
      %vm779 = vcmask 130048
      %v781 = vsel %vm779, %v751, 0
      %v784 = vsel %vm779, %v752, 0
      %v787 = vsel %vm779, %v753, 0
      %v790 = vsel %vm779, %v754, 0
      %792 = vmatprep.subr.mxu0 0.0
      %793 = vmatpush1.msra.mxu0 %v741
      %794 = vmatprep.subr.mxu0 0.0
      %795 = vmatpush1.msra.mxu0 %v742
      %796 = vmatprep.subr.mxu0 0.0
      %797 = vmatpush1.msra.mxu0 0.0
      %798 = vmatprep.subr.mxu0 0.0
      %799 = vmatpush1.msra.mxu0 0.0
      %800 = vmatprep.subr.mxu0 0.0
      %801 = vmatpush1.msra.mxu0 0.0
      %802 = vmatprep.subr.mxu0 0.0
      %803 = vmatpush1.msra.mxu0 0.0
      %804 = vmatprep.subr.mxu0 0.0
      %805 = vmatpush1.msra.mxu0 0.0
      %806 = vmatprep.subr.mxu0 0.0
      %807 = vmatpush1.msra.mxu0 0.0
      %808 = vmatprep.subr.mxu0 0.0
      %809 = vmatpush1.msra.mxu0 0.0
      %810 = vmatprep.subr.mxu0 0.0
      %811 = vmatpush1.msra.mxu0 0.0
      %812 = vmatprep.subr.mxu0 0.0
      %813 = vmatpush1.msra.mxu0 0.0
      %814 = vmatprep.subr.mxu0 0.0
      %815 = vmatpush1.msra.mxu0 0.0
      %816 = vmatprep.subr.mxu0 0.0
      %817 = vmatpush1.msra.mxu0 0.0
      %818 = vmatprep.subr.mxu0 0.0
      %819 = vmatpush1.msra.mxu0 0.0
      %820 = vmatprep.subr.mxu0 0.0
      %821 = vmatpush1.msra.mxu0 0.0
      %822 = vmatprep.subr.mxu0 0.0
      %823 = vmatpush1.msra.mxu0 0.0
      %824 = vmatprep.subr.mxu0 0.0
      %825 = vmatpush1.msra.mxu0 0.0
      %826 = vmatprep.subr.mxu0 0.0
      %827 = vmatpush1.msra.mxu0 0.0
      %828 = vmatprep.subr.mxu0 0.0
      %829 = vmatpush1.msra.mxu0 0.0
      %830 = vmatprep.subr.mxu0 0.0
      %831 = vmatpush1.msra.mxu0 0.0
      %832 = vmatprep.subr.mxu0 0.0
      %833 = vmatpush1.msra.mxu0 0.0
      %834 = vmatprep.subr.mxu0 0.0
      %835 = vmatpush1.msra.mxu0 0.0
      %836 = vmatprep.subr.mxu0 0.0
      %837 = vmatpush1.msra.mxu0 0.0
      %838 = vmatprep.subr.mxu0 0.0
      %839 = vmatpush1.msra.mxu0 0.0
      %840 = vmatprep.subr.mxu0 0.0
      %841 = vmatpush1.msra.mxu0 0.0
      %842 = vmatprep.subr.mxu0 0.0
      %843 = vmatpush1.msra.mxu0 0.0
      %844 = vmatprep.subr.mxu0 0.0
      %845 = vmatpush1.msra.mxu0 0.0
      %846 = vmatprep.subr.mxu0 0.0
      %847 = vmatpush1.msra.mxu0 0.0
      %848 = vmatprep.subr.mxu0 0.0
      %849 = vmatpush1.msra.mxu0 0.0
      %850 = vmatprep.subr.mxu0 0.0
      %851 = vmatpush1.msra.mxu0 0.0
      %852 = vmatprep.subr.mxu0 0.0
      %853 = vmatpush1.msra.mxu0 0.0
      %854 = vmatprep.subr.mxu0 0.0
      %855 = vmatpush1.msra.mxu0 0.0
      %856 = vmatprep.mubr.f32.mxu0 0.0
      %857 = vmatmul.mubr.f32.gmra.mrb[0].mxu0 %v781
      %v858 = vpop.f32.mrb[0].mxu0
      %v859 = vadd.f32 %v762, %v858
      %v860 = vpop.f32.mrb[0].mxu0
      %861 = vmatprep.mubr.f32.mxu0 0.0
      %862 = vmatmul.mubr.f32.gmra.mrb[0].mxu0 %v784
      %v863 = vpop.f32.mrb[0].mxu0
      %v864 = vadd.f32 %v767, %v863
      %v865 = vpop.f32.mrb[0].mxu0
      %866 = vmatprep.mubr.f32.mxu0 0.0
      %867 = vmatmul.mubr.f32.gmra.mrb[0].mxu0 %v787
      %v868 = vpop.f32.mrb[0].mxu0
      %v869 = vadd.f32 %v772, %v868
      %v870 = vpop.f32.mrb[0].mxu0
      %871 = vmatprep.mubr.f32.mxu0 0.0
      %872 = vmatmul.mubr.f32.gmra.mrb[0].mxu0 %v790
      %v873 = vpop.f32.mrb[0].mxu0
      %v874 = vadd.f32 %v777, %v873
      %v875 = vpop.f32.mrb[0].mxu0
      %876 = vdwg.mxu0
      %v877 = vmax.f32 %v859, 0.0
      %v878 = vmax.f32 %v864, 0.0
      %v879 = vmax.f32 %v869, 0.0
      %v880 = vmax.f32 %v874, 0.0
      %v881 = vld [vmem:[%s5] sm:$0xff]
      %v882 = vld [vmem:[%s5 + $0x8] sm:$0xff]
      %v883 = vld [vmem:[%s6] sm:$0xff]
      %v884 = vld [vmem:[%s6 + $0x8] sm:$0xff]
      %886 = vset.pattern.permute.xlu0 0
      %887 = vperm.xlu0 %886, %v883
      %v888 = vpop.permute.xlu0 %887
      %891 = vset.pattern.permute.xlu0 0
      %892 = vperm.xlu0 %891, %v884
      %v893 = vpop.permute.xlu0 %892
      %vm895 = vcmask 261120
      %v897 = vsel %vm895, %v881, 0
      %v900 = vsel %vm895, %v882, 0
      %902 = vmatprep.subr.mxu0 0.0
      %903 = vmatpush1.msra.mxu0 %v877
      %904 = vmatprep.subr.mxu0 0.0
      %905 = vmatpush1.msra.mxu0 %v878
      %906 = vmatprep.subr.mxu0 0.0
      %907 = vmatpush1.msra.mxu0 %v879
      %908 = vmatprep.subr.mxu0 0.0
      %909 = vmatpush1.msra.mxu0 %v880
      %910 = vmatprep.subr.mxu0 0.0
      %911 = vmatpush1.msra.mxu0 0.0
      %912 = vmatprep.subr.mxu0 0.0
      %913 = vmatpush1.msra.mxu0 0.0
      %914 = vmatprep.subr.mxu0 0.0
      %915 = vmatpush1.msra.mxu0 0.0
      %916 = vmatprep.subr.mxu0 0.0
      %917 = vmatpush1.msra.mxu0 0.0
      %918 = vmatprep.subr.mxu0 0.0
      %919 = vmatpush1.msra.mxu0 0.0
      %920 = vmatprep.subr.mxu0 0.0
      %921 = vmatpush1.msra.mxu0 0.0
      %922 = vmatprep.subr.mxu0 0.0
      %923 = vmatpush1.msra.mxu0 0.0
      %924 = vmatprep.subr.mxu0 0.0
      %925 = vmatpush1.msra.mxu0 0.0
      %926 = vmatprep.subr.mxu0 0.0
      %927 = vmatpush1.msra.mxu0 0.0
      %928 = vmatprep.subr.mxu0 0.0
      %929 = vmatpush1.msra.mxu0 0.0
      %930 = vmatprep.subr.mxu0 0.0
      %931 = vmatpush1.msra.mxu0 0.0
      %932 = vmatprep.subr.mxu0 0.0
      %933 = vmatpush1.msra.mxu0 0.0
      %934 = vmatprep.subr.mxu0 0.0
      %935 = vmatpush1.msra.mxu0 0.0
      %936 = vmatprep.subr.mxu0 0.0
      %937 = vmatpush1.msra.mxu0 0.0
      %938 = vmatprep.subr.mxu0 0.0
      %939 = vmatpush1.msra.mxu0 0.0
      %940 = vmatprep.subr.mxu0 0.0
      %941 = vmatpush1.msra.mxu0 0.0
      %942 = vmatprep.subr.mxu0 0.0
      %943 = vmatpush1.msra.mxu0 0.0
      %944 = vmatprep.subr.mxu0 0.0
      %945 = vmatpush1.msra.mxu0 0.0
      %946 = vmatprep.subr.mxu0 0.0
      %947 = vmatpush1.msra.mxu0 0.0
      %948 = vmatprep.subr.mxu0 0.0
      %949 = vmatpush1.msra.mxu0 0.0
      %950 = vmatprep.subr.mxu0 0.0
      %951 = vmatpush1.msra.mxu0 0.0
      %952 = vmatprep.subr.mxu0 0.0
      %953 = vmatpush1.msra.mxu0 0.0
      %954 = vmatprep.subr.mxu0 0.0
      %955 = vmatpush1.msra.mxu0 0.0
      %956 = vmatprep.subr.mxu0 0.0
      %957 = vmatpush1.msra.mxu0 0.0
      %958 = vmatprep.subr.mxu0 0.0
      %959 = vmatpush1.msra.mxu0 0.0
      %960 = vmatprep.subr.mxu0 0.0
      %961 = vmatpush1.msra.mxu0 0.0
      %962 = vmatprep.subr.mxu0 0.0
      %963 = vmatpush1.msra.mxu0 0.0
      %964 = vmatprep.subr.mxu0 0.0
      %965 = vmatpush1.msra.mxu0 0.0
      %966 = vmatprep.mubr.f32.mxu0 0.0
      %967 = vmatmul.mubr.f32.gmra.mrb[0].mxu0 %v897
      %v968 = vpop.f32.mrb[0].mxu0
      %v969 = vadd.f32 %v888, %v968
      %v970 = vpop.f32.mrb[0].mxu0
      %971 = vmatprep.mubr.f32.mxu0 0.0
      %972 = vmatmul.mubr.f32.gmra.mrb[0].mxu0 %v900
      %v973 = vpop.f32.mrb[0].mxu0
      %v974 = vadd.f32 %v893, %v973
      %v975 = vpop.f32.mrb[0].mxu0
      %976 = vdwg.mxu0
      %v977 = vmax.f32 %v969, 0.0
      %v978 = vmax.f32 %v974, 0.0
      %v979 = vld [vmem:[%s7] sm:$0xff]
      %v980 = vld [vmem:[%s7 + $0x8] sm:$0xff]
      %v981 = vld [vmem:[%s7 + $0x10] sm:$0xff]
      %v982 = vld [vmem:[%s7 + $0x18] sm:$0xff]
      %v983 = vld [vmem:[%s8] sm:$0xff]
      %v984 = vld [vmem:[%s8 + $0x8] sm:$0xff]
      %v985 = vld [vmem:[%s8 + $0x10] sm:$0xff]
      %v986 = vld [vmem:[%s8 + $0x18] sm:$0xff]
      %988 = vset.pattern.permute.xlu0 0
      %989 = vperm.xlu0 %988, %v983
      %v990 = vpop.permute.xlu0 %989
      %993 = vset.pattern.permute.xlu0 0
      %994 = vperm.xlu0 %993, %v984
      %v995 = vpop.permute.xlu0 %994
      %998 = vset.pattern.permute.xlu0 0
      %999 = vperm.xlu0 %998, %v985
      %v1000 = vpop.permute.xlu0 %999
      %1003 = vset.pattern.permute.xlu0 0
      %1004 = vperm.xlu0 %1003, %v986
      %v1005 = vpop.permute.xlu0 %1004
      %v1008 = vsel %vm779, %v979, 0
      %v1011 = vsel %vm779, %v980, 0
      %v1014 = vsel %vm779, %v981, 0
      %v1017 = vsel %vm779, %v982, 0
      %1019 = vmatprep.subr.mxu0 0.0
      %1020 = vmatpush1.msra.mxu0 %v977
      %1021 = vmatprep.subr.mxu0 0.0
      %1022 = vmatpush1.msra.mxu0 %v978
      %1023 = vmatprep.subr.mxu0 0.0
      %1024 = vmatpush1.msra.mxu0 0.0
      %1025 = vmatprep.subr.mxu0 0.0
      %1026 = vmatpush1.msra.mxu0 0.0
      %1027 = vmatprep.subr.mxu0 0.0
      %1028 = vmatpush1.msra.mxu0 0.0
      %1029 = vmatprep.subr.mxu0 0.0
      %1030 = vmatpush1.msra.mxu0 0.0
      %1031 = vmatprep.subr.mxu0 0.0
      %1032 = vmatpush1.msra.mxu0 0.0
      %1033 = vmatprep.subr.mxu0 0.0
      %1034 = vmatpush1.msra.mxu0 0.0
      %1035 = vmatprep.subr.mxu0 0.0
      %1036 = vmatpush1.msra.mxu0 0.0
      %1037 = vmatprep.subr.mxu0 0.0
      %1038 = vmatpush1.msra.mxu0 0.0
      %1039 = vmatprep.subr.mxu0 0.0
      %1040 = vmatpush1.msra.mxu0 0.0
      %1041 = vmatprep.subr.mxu0 0.0
      %1042 = vmatpush1.msra.mxu0 0.0
      %1043 = vmatprep.subr.mxu0 0.0
      %1044 = vmatpush1.msra.mxu0 0.0
      %1045 = vmatprep.subr.mxu0 0.0
      %1046 = vmatpush1.msra.mxu0 0.0
      %1047 = vmatprep.subr.mxu0 0.0
      %1048 = vmatpush1.msra.mxu0 0.0
      %1049 = vmatprep.subr.mxu0 0.0
      %1050 = vmatpush1.msra.mxu0 0.0
      %1051 = vmatprep.subr.mxu0 0.0
      %1052 = vmatpush1.msra.mxu0 0.0
      %1053 = vmatprep.subr.mxu0 0.0
      %1054 = vmatpush1.msra.mxu0 0.0
      %1055 = vmatprep.subr.mxu0 0.0
      %1056 = vmatpush1.msra.mxu0 0.0
      %1057 = vmatprep.subr.mxu0 0.0
      %1058 = vmatpush1.msra.mxu0 0.0
      %1059 = vmatprep.subr.mxu0 0.0
      %1060 = vmatpush1.msra.mxu0 0.0
      %1061 = vmatprep.subr.mxu0 0.0
      %1062 = vmatpush1.msra.mxu0 0.0
      %1063 = vmatprep.subr.mxu0 0.0
      %1064 = vmatpush1.msra.mxu0 0.0
      %1065 = vmatprep.subr.mxu0 0.0
      %1066 = vmatpush1.msra.mxu0 0.0
      %1067 = vmatprep.subr.mxu0 0.0
      %1068 = vmatpush1.msra.mxu0 0.0
      %1069 = vmatprep.subr.mxu0 0.0
      %1070 = vmatpush1.msra.mxu0 0.0
      %1071 = vmatprep.subr.mxu0 0.0
      %1072 = vmatpush1.msra.mxu0 0.0
      %1073 = vmatprep.subr.mxu0 0.0
      %1074 = vmatpush1.msra.mxu0 0.0
      %1075 = vmatprep.subr.mxu0 0.0
      %1076 = vmatpush1.msra.mxu0 0.0
      %1077 = vmatprep.subr.mxu0 0.0
      %1078 = vmatpush1.msra.mxu0 0.0
      %1079 = vmatprep.subr.mxu0 0.0
      %1080 = vmatpush1.msra.mxu0 0.0
      %1081 = vmatprep.subr.mxu0 0.0
      %1082 = vmatpush1.msra.mxu0 0.0
      %1083 = vmatprep.mubr.f32.mxu0 0.0
      %1084 = vmatmul.mubr.f32.gmra.mrb[0].mxu0 %v1008
      %v1085 = vpop.f32.mrb[0].mxu0
      %v1086 = vadd.f32 %v990, %v1085
      %v1087 = vpop.f32.mrb[0].mxu0
      %1088 = vmatprep.mubr.f32.mxu0 0.0
      %1089 = vmatmul.mubr.f32.gmra.mrb[0].mxu0 %v1011
      %v1090 = vpop.f32.mrb[0].mxu0
      %v1091 = vadd.f32 %v995, %v1090
      %v1092 = vpop.f32.mrb[0].mxu0
      %1093 = vmatprep.mubr.f32.mxu0 0.0
      %1094 = vmatmul.mubr.f32.gmra.mrb[0].mxu0 %v1014
      %v1095 = vpop.f32.mrb[0].mxu0
      %v1096 = vadd.f32 %v1000, %v1095
      %v1097 = vpop.f32.mrb[0].mxu0
      %1098 = vmatprep.mubr.f32.mxu0 0.0
      %1099 = vmatmul.mubr.f32.gmra.mrb[0].mxu0 %v1017
      %v1100 = vpop.f32.mrb[0].mxu0
      %v1101 = vadd.f32 %v1005, %v1100
      %v1102 = vpop.f32.mrb[0].mxu0
      %1103 = vdwg.mxu0
      %v1104 = vmax.f32 %v1086, 0.0
      %v1105 = vmax.f32 %v1091, 0.0
      %v1106 = vmax.f32 %v1096, 0.0
      %v1107 = vmax.f32 %v1101, 0.0
      %v1108 = vld [vmem:[%s9] sm:$0xff]
      %v1109 = vld [vmem:[%s9 + $0x8] sm:$0xff]
      %v1110 = vld [vmem:[%s9 + $0x10] sm:$0xff]
      %v1111 = vld [vmem:[%s9 + $0x18] sm:$0xff]
      %v1112 = vld [vmem:[%s9 + $0x20] sm:$0xff]
      %v1113 = vld [vmem:[%s9 + $0x28] sm:$0xff]
      %v1114 = vld [vmem:[%s9 + $0x30] sm:$0xff]
      %v1115 = vld [vmem:[%s9 + $0x38] sm:$0xff]
      %v1116 = vld [vmem:[%s9 + $0x40] sm:$0xff]
      %v1117 = vld [vmem:[%s9 + $0x48] sm:$0xff]
      %v1118 = vld [vmem:[%s9 + $0x50] sm:$0xff]
      %v1119 = vld [vmem:[%s9 + $0x58] sm:$0xff]
      %v1120 = vld [vmem:[%s9 + $0x60] sm:$0xff]
      %v1121 = vld [vmem:[%s9 + $0x68] sm:$0xff]
      %v1122 = vld [vmem:[%s9 + $0x70] sm:$0xff]
      %v1123 = vld [vmem:[%s9 + $0x78] sm:$0xff]
      %v1124 = vld [vmem:[%s9 + $0x80] sm:$0xff]
      %v1125 = vld [vmem:[%s9 + $0x88] sm:$0xff]
      %v1126 = vld [vmem:[%s9 + $0x90] sm:$0xff]
      %v1127 = vld [vmem:[%s9 + $0x98] sm:$0xff]
      %v1128 = vld [vmem:[%s9 + $0xa0] sm:$0xff]
      %v1129 = vld [vmem:[%s9 + $0xa8] sm:$0xff]
      %v1130 = vld [vmem:[%s9 + $0xb0] sm:$0xff]
      %v1131 = vld [vmem:[%s9 + $0xb8] sm:$0xff]
      %v1132 = vld [vmem:[%s9 + $0xc0] sm:$0xff]
      %v1133 = vld [vmem:[%s9 + $0xc8] sm:$0xff]
      %v1134 = vld [vmem:[%s10] sm:$0xff]
      %v1135 = vld [vmem:[%s10 + $0x8] sm:$0xff]
      %v1136 = vld [vmem:[%s10 + $0x10] sm:$0xff]
      %v1137 = vld [vmem:[%s10 + $0x18] sm:$0xff]
      %v1138 = vld [vmem:[%s10 + $0x20] sm:$0xff]
      %v1139 = vld [vmem:[%s10 + $0x28] sm:$0xff]
      %v1140 = vld [vmem:[%s10 + $0x30] sm:$0xff]
      %v1141 = vld [vmem:[%s10 + $0x38] sm:$0xff]
      %v1142 = vld [vmem:[%s10 + $0x40] sm:$0xff]
      %v1143 = vld [vmem:[%s10 + $0x48] sm:$0xff]
      %v1144 = vld [vmem:[%s10 + $0x50] sm:$0xff]
      %v1145 = vld [vmem:[%s10 + $0x58] sm:$0xff]
      %v1146 = vld [vmem:[%s10 + $0x60] sm:$0xff]
      %v1147 = vld [vmem:[%s10 + $0x68] sm:$0xff]
      %v1148 = vld [vmem:[%s10 + $0x70] sm:$0xff]
      %v1149 = vld [vmem:[%s10 + $0x78] sm:$0xff]
      %v1150 = vld [vmem:[%s10 + $0x80] sm:$0xff]
      %v1151 = vld [vmem:[%s10 + $0x88] sm:$0xff]
      %v1152 = vld [vmem:[%s10 + $0x90] sm:$0xff]
      %v1153 = vld [vmem:[%s10 + $0x98] sm:$0xff]
      %v1154 = vld [vmem:[%s10 + $0xa0] sm:$0xff]
      %v1155 = vld [vmem:[%s10 + $0xa8] sm:$0xff]
      %v1156 = vld [vmem:[%s10 + $0xb0] sm:$0xff]
      %v1157 = vld [vmem:[%s10 + $0xb8] sm:$0xff]
      %v1158 = vld [vmem:[%s10 + $0xc0] sm:$0xff]
      %v1159 = vld [vmem:[%s10 + $0xc8] sm:$0xff]
      %1161 = vset.pattern.permute.xlu0 0
      %1162 = vperm.xlu0 %1161, %v1134
      %v1163 = vpop.permute.xlu0 %1162
      %1166 = vset.pattern.permute.xlu0 0
      %1167 = vperm.xlu0 %1166, %v1135
      %v1168 = vpop.permute.xlu0 %1167
      %1171 = vset.pattern.permute.xlu0 0
      %1172 = vperm.xlu0 %1171, %v1136
      %v1173 = vpop.permute.xlu0 %1172
      %1176 = vset.pattern.permute.xlu0 0
      %1177 = vperm.xlu0 %1176, %v1137
      %v1178 = vpop.permute.xlu0 %1177
      %1181 = vset.pattern.permute.xlu0 0
      %1182 = vperm.xlu0 %1181, %v1138
      %v1183 = vpop.permute.xlu0 %1182
      %1186 = vset.pattern.permute.xlu0 0
      %1187 = vperm.xlu0 %1186, %v1139
      %v1188 = vpop.permute.xlu0 %1187
      %1191 = vset.pattern.permute.xlu0 0
      %1192 = vperm.xlu0 %1191, %v1140
      %v1193 = vpop.permute.xlu0 %1192
      %1196 = vset.pattern.permute.xlu0 0
      %1197 = vperm.xlu0 %1196, %v1141
      %v1198 = vpop.permute.xlu0 %1197
      %1201 = vset.pattern.permute.xlu0 0
      %1202 = vperm.xlu0 %1201, %v1142
      %v1203 = vpop.permute.xlu0 %1202
      %1206 = vset.pattern.permute.xlu0 0
      %1207 = vperm.xlu0 %1206, %v1143
      %v1208 = vpop.permute.xlu0 %1207
      %1211 = vset.pattern.permute.xlu0 0
      %1212 = vperm.xlu0 %1211, %v1144
      %v1213 = vpop.permute.xlu0 %1212
      %1216 = vset.pattern.permute.xlu0 0
      %1217 = vperm.xlu0 %1216, %v1145
      %v1218 = vpop.permute.xlu0 %1217
      %1221 = vset.pattern.permute.xlu0 0
      %1222 = vperm.xlu0 %1221, %v1146
      %v1223 = vpop.permute.xlu0 %1222
      %1226 = vset.pattern.permute.xlu0 0
      %1227 = vperm.xlu0 %1226, %v1147
      %v1228 = vpop.permute.xlu0 %1227
      %1231 = vset.pattern.permute.xlu0 0
      %1232 = vperm.xlu0 %1231, %v1148
      %v1233 = vpop.permute.xlu0 %1232
      %1236 = vset.pattern.permute.xlu0 0
      %1237 = vperm.xlu0 %1236, %v1149
      %v1238 = vpop.permute.xlu0 %1237
      %1241 = vset.pattern.permute.xlu0 0
      %1242 = vperm.xlu0 %1241, %v1150
      %v1243 = vpop.permute.xlu0 %1242
      %1246 = vset.pattern.permute.xlu0 0
      %1247 = vperm.xlu0 %1246, %v1151
      %v1248 = vpop.permute.xlu0 %1247
      %1251 = vset.pattern.permute.xlu0 0
      %1252 = vperm.xlu0 %1251, %v1152
      %v1253 = vpop.permute.xlu0 %1252
      %1256 = vset.pattern.permute.xlu0 0
      %1257 = vperm.xlu0 %1256, %v1153
      %v1258 = vpop.permute.xlu0 %1257
      %1261 = vset.pattern.permute.xlu0 0
      %1262 = vperm.xlu0 %1261, %v1154
      %v1263 = vpop.permute.xlu0 %1262
      %1266 = vset.pattern.permute.xlu0 0
      %1267 = vperm.xlu0 %1266, %v1155
      %v1268 = vpop.permute.xlu0 %1267
      %1271 = vset.pattern.permute.xlu0 0
      %1272 = vperm.xlu0 %1271, %v1156
      %v1273 = vpop.permute.xlu0 %1272
      %1276 = vset.pattern.permute.xlu0 0
      %1277 = vperm.xlu0 %1276, %v1157
      %v1278 = vpop.permute.xlu0 %1277
      %1281 = vset.pattern.permute.xlu0 0
      %1282 = vperm.xlu0 %1281, %v1158
      %v1283 = vpop.permute.xlu0 %1282
      %1286 = vset.pattern.permute.xlu0 0
      %1287 = vperm.xlu0 %1286, %v1159
      %v1288 = vpop.permute.xlu0 %1287
      %v1291 = vsel %vm895, %v1108, 0
      %v1294 = vsel %vm895, %v1109, 0
      %v1297 = vsel %vm895, %v1110, 0
      %v1300 = vsel %vm895, %v1111, 0
      %v1303 = vsel %vm895, %v1112, 0
      %v1306 = vsel %vm895, %v1113, 0
      %v1309 = vsel %vm895, %v1114, 0
      %v1312 = vsel %vm895, %v1115, 0
      %v1315 = vsel %vm895, %v1116, 0
      %v1318 = vsel %vm895, %v1117, 0
      %v1321 = vsel %vm895, %v1118, 0
      %v1324 = vsel %vm895, %v1119, 0
      %v1327 = vsel %vm895, %v1120, 0
      %v1330 = vsel %vm895, %v1121, 0
      %v1333 = vsel %vm895, %v1122, 0
      %v1336 = vsel %vm895, %v1123, 0
      %v1339 = vsel %vm895, %v1124, 0
      %v1342 = vsel %vm895, %v1125, 0
      %v1345 = vsel %vm895, %v1126, 0
      %v1348 = vsel %vm895, %v1127, 0
      %v1351 = vsel %vm895, %v1128, 0
      %v1354 = vsel %vm895, %v1129, 0
      %v1357 = vsel %vm895, %v1130, 0
      %v1360 = vsel %vm895, %v1131, 0
      %v1363 = vsel %vm895, %v1132, 0
      %v1366 = vsel %vm895, %v1133, 0
      %1368 = vmatprep.subr.mxu0 0.0
      %1369 = vmatpush1.msra.mxu0 %v1104
      %1370 = vmatprep.subr.mxu0 0.0
      %1371 = vmatpush1.msra.mxu0 %v1105
      %1372 = vmatprep.subr.mxu0 0.0
      %1373 = vmatpush1.msra.mxu0 %v1106
      %1374 = vmatprep.subr.mxu0 0.0
      %1375 = vmatpush1.msra.mxu0 %v1107
      %1376 = vmatprep.subr.mxu0 0.0
      %1377 = vmatpush1.msra.mxu0 0.0
      %1378 = vmatprep.subr.mxu0 0.0
      %1379 = vmatpush1.msra.mxu0 0.0
      %1380 = vmatprep.subr.mxu0 0.0
      %1381 = vmatpush1.msra.mxu0 0.0
      %1382 = vmatprep.subr.mxu0 0.0
      %1383 = vmatpush1.msra.mxu0 0.0
      %1384 = vmatprep.subr.mxu0 0.0
      %1385 = vmatpush1.msra.mxu0 0.0
      %1386 = vmatprep.subr.mxu0 0.0
      %1387 = vmatpush1.msra.mxu0 0.0
      %1388 = vmatprep.subr.mxu0 0.0
      %1389 = vmatpush1.msra.mxu0 0.0
      %1390 = vmatprep.subr.mxu0 0.0
      %1391 = vmatpush1.msra.mxu0 0.0
      %1392 = vmatprep.subr.mxu0 0.0
      %1393 = vmatpush1.msra.mxu0 0.0
      %1394 = vmatprep.subr.mxu0 0.0
      %1395 = vmatpush1.msra.mxu0 0.0
      %1396 = vmatprep.subr.mxu0 0.0
      %1397 = vmatpush1.msra.mxu0 0.0
      %1398 = vmatprep.subr.mxu0 0.0
      %1399 = vmatpush1.msra.mxu0 0.0
      %1400 = vmatprep.subr.mxu0 0.0
      %1401 = vmatpush1.msra.mxu0 0.0
      %1402 = vmatprep.subr.mxu0 0.0
      %1403 = vmatpush1.msra.mxu0 0.0
      %1404 = vmatprep.subr.mxu0 0.0
      %1405 = vmatpush1.msra.mxu0 0.0
      %1406 = vmatprep.subr.mxu0 0.0
      %1407 = vmatpush1.msra.mxu0 0.0
      %1408 = vmatprep.subr.mxu0 0.0
      %1409 = vmatpush1.msra.mxu0 0.0
      %1410 = vmatprep.subr.mxu0 0.0
      %1411 = vmatpush1.msra.mxu0 0.0
      %1412 = vmatprep.subr.mxu0 0.0
      %1413 = vmatpush1.msra.mxu0 0.0
      %1414 = vmatprep.subr.mxu0 0.0
      %1415 = vmatpush1.msra.mxu0 0.0
      %1416 = vmatprep.subr.mxu0 0.0
      %1417 = vmatpush1.msra.mxu0 0.0
      %1418 = vmatprep.subr.mxu0 0.0
      %1419 = vmatpush1.msra.mxu0 0.0
      %1420 = vmatprep.subr.mxu0 0.0
      %1421 = vmatpush1.msra.mxu0 0.0
      %1422 = vmatprep.subr.mxu0 0.0
      %1423 = vmatpush1.msra.mxu0 0.0
      %1424 = vmatprep.subr.mxu0 0.0
      %1425 = vmatpush1.msra.mxu0 0.0
      %1426 = vmatprep.subr.mxu0 0.0
      %1427 = vmatpush1.msra.mxu0 0.0
      %1428 = vmatprep.subr.mxu0 0.0
      %1429 = vmatpush1.msra.mxu0 0.0
      %1430 = vmatprep.subr.mxu0 0.0
      %1431 = vmatpush1.msra.mxu0 0.0
      %1432 = vmatprep.mubr.f32.mxu0 0.0
      %1433 = vmatmul.mubr.f32.gmra.mrb[0].mxu0 %v1291
      %v1434 = vpop.f32.mrb[0].mxu0
      %v1435 = vadd.f32 %v1163, %v1434
      %v1436 = vpop.f32.mrb[0].mxu0
      %1437 = vmatprep.mubr.f32.mxu0 0.0
      %1438 = vmatmul.mubr.f32.gmra.mrb[0].mxu0 %v1294
      %v1439 = vpop.f32.mrb[0].mxu0
      %v1440 = vadd.f32 %v1168, %v1439
      %v1441 = vpop.f32.mrb[0].mxu0
      %1442 = vmatprep.mubr.f32.mxu0 0.0
      %1443 = vmatmul.mubr.f32.gmra.mrb[0].mxu0 %v1297
      %v1444 = vpop.f32.mrb[0].mxu0
      %v1445 = vadd.f32 %v1173, %v1444
      %v1446 = vpop.f32.mrb[0].mxu0
      %1447 = vmatprep.mubr.f32.mxu0 0.0
      %1448 = vmatmul.mubr.f32.gmra.mrb[0].mxu0 %v1300
      %v1449 = vpop.f32.mrb[0].mxu0
      %v1450 = vadd.f32 %v1178, %v1449
      %v1451 = vpop.f32.mrb[0].mxu0
      %1452 = vmatprep.mubr.f32.mxu0 0.0
      %1453 = vmatmul.mubr.f32.gmra.mrb[0].mxu0 %v1303
      %v1454 = vpop.f32.mrb[0].mxu0
      %v1455 = vadd.f32 %v1183, %v1454
      %v1456 = vpop.f32.mrb[0].mxu0
      %1457 = vmatprep.mubr.f32.mxu0 0.0
      %1458 = vmatmul.mubr.f32.gmra.mrb[0].mxu0 %v1306
      %v1459 = vpop.f32.mrb[0].mxu0
      %v1460 = vadd.f32 %v1188, %v1459
      %v1461 = vpop.f32.mrb[0].mxu0
      %1462 = vmatprep.mubr.f32.mxu0 0.0
      %1463 = vmatmul.mubr.f32.gmra.mrb[0].mxu0 %v1309
      %v1464 = vpop.f32.mrb[0].mxu0
      %v1465 = vadd.f32 %v1193, %v1464
      %v1466 = vpop.f32.mrb[0].mxu0
      %1467 = vmatprep.mubr.f32.mxu0 0.0
      %1468 = vmatmul.mubr.f32.gmra.mrb[0].mxu0 %v1312
      %v1469 = vpop.f32.mrb[0].mxu0
      %v1470 = vadd.f32 %v1198, %v1469
      %v1471 = vpop.f32.mrb[0].mxu0
      %1472 = vmatprep.mubr.f32.mxu0 0.0
      %1473 = vmatmul.mubr.f32.gmra.mrb[0].mxu0 %v1315
      %v1474 = vpop.f32.mrb[0].mxu0
      %v1475 = vadd.f32 %v1203, %v1474
      %v1476 = vpop.f32.mrb[0].mxu0
      %1477 = vmatprep.mubr.f32.mxu0 0.0
      %1478 = vmatmul.mubr.f32.gmra.mrb[0].mxu0 %v1318
      %v1479 = vpop.f32.mrb[0].mxu0
      %v1480 = vadd.f32 %v1208, %v1479
      %v1481 = vpop.f32.mrb[0].mxu0
      %1482 = vmatprep.mubr.f32.mxu0 0.0
      %1483 = vmatmul.mubr.f32.gmra.mrb[0].mxu0 %v1321
      %v1484 = vpop.f32.mrb[0].mxu0
      %v1485 = vadd.f32 %v1213, %v1484
      %v1486 = vpop.f32.mrb[0].mxu0
      %1487 = vmatprep.mubr.f32.mxu0 0.0
      %1488 = vmatmul.mubr.f32.gmra.mrb[0].mxu0 %v1324
      %v1489 = vpop.f32.mrb[0].mxu0
      %v1490 = vadd.f32 %v1218, %v1489
      %v1491 = vpop.f32.mrb[0].mxu0
      %1492 = vmatprep.mubr.f32.mxu0 0.0
      %1493 = vmatmul.mubr.f32.gmra.mrb[0].mxu0 %v1327
      %v1494 = vpop.f32.mrb[0].mxu0
      %v1495 = vadd.f32 %v1223, %v1494
      %v1496 = vpop.f32.mrb[0].mxu0
      %1497 = vmatprep.mubr.f32.mxu0 0.0
      %1498 = vmatmul.mubr.f32.gmra.mrb[0].mxu0 %v1330
      %v1499 = vpop.f32.mrb[0].mxu0
      %v1500 = vadd.f32 %v1228, %v1499
      %v1501 = vpop.f32.mrb[0].mxu0
      %1502 = vmatprep.mubr.f32.mxu0 0.0
      %1503 = vmatmul.mubr.f32.gmra.mrb[0].mxu0 %v1333
      %v1504 = vpop.f32.mrb[0].mxu0
      %v1505 = vadd.f32 %v1233, %v1504
      %v1506 = vpop.f32.mrb[0].mxu0
      %1507 = vmatprep.mubr.f32.mxu0 0.0
      %1508 = vmatmul.mubr.f32.gmra.mrb[0].mxu0 %v1336
      %v1509 = vpop.f32.mrb[0].mxu0
      %v1510 = vadd.f32 %v1238, %v1509
      %v1511 = vpop.f32.mrb[0].mxu0
      %1512 = vmatprep.mubr.f32.mxu0 0.0
      %1513 = vmatmul.mubr.f32.gmra.mrb[0].mxu0 %v1339
      %v1514 = vpop.f32.mrb[0].mxu0
      %v1515 = vadd.f32 %v1243, %v1514
      %v1516 = vpop.f32.mrb[0].mxu0
      %1517 = vmatprep.mubr.f32.mxu0 0.0
      %1518 = vmatmul.mubr.f32.gmra.mrb[0].mxu0 %v1342
      %v1519 = vpop.f32.mrb[0].mxu0
      %v1520 = vadd.f32 %v1248, %v1519
      %v1521 = vpop.f32.mrb[0].mxu0
      %1522 = vmatprep.mubr.f32.mxu0 0.0
      %1523 = vmatmul.mubr.f32.gmra.mrb[0].mxu0 %v1345
      %v1524 = vpop.f32.mrb[0].mxu0
      %v1525 = vadd.f32 %v1253, %v1524
      %v1526 = vpop.f32.mrb[0].mxu0
      %1527 = vmatprep.mubr.f32.mxu0 0.0
      %1528 = vmatmul.mubr.f32.gmra.mrb[0].mxu0 %v1348
      %v1529 = vpop.f32.mrb[0].mxu0
      %v1530 = vadd.f32 %v1258, %v1529
      %v1531 = vpop.f32.mrb[0].mxu0
      %1532 = vmatprep.mubr.f32.mxu0 0.0
      %1533 = vmatmul.mubr.f32.gmra.mrb[0].mxu0 %v1351
      %v1534 = vpop.f32.mrb[0].mxu0
      %v1535 = vadd.f32 %v1263, %v1534
      %v1536 = vpop.f32.mrb[0].mxu0
      %1537 = vmatprep.mubr.f32.mxu0 0.0
      %1538 = vmatmul.mubr.f32.gmra.mrb[0].mxu0 %v1354
      %v1539 = vpop.f32.mrb[0].mxu0
      %v1540 = vadd.f32 %v1268, %v1539
      %v1541 = vpop.f32.mrb[0].mxu0
      %1542 = vmatprep.mubr.f32.mxu0 0.0
      %1543 = vmatmul.mubr.f32.gmra.mrb[0].mxu0 %v1357
      %v1544 = vpop.f32.mrb[0].mxu0
      %v1545 = vadd.f32 %v1273, %v1544
      %v1546 = vpop.f32.mrb[0].mxu0
      %1547 = vmatprep.mubr.f32.mxu0 0.0
      %1548 = vmatmul.mubr.f32.gmra.mrb[0].mxu0 %v1360
      %v1549 = vpop.f32.mrb[0].mxu0
      %v1550 = vadd.f32 %v1278, %v1549
      %v1551 = vpop.f32.mrb[0].mxu0
      %1552 = vmatprep.mubr.f32.mxu0 0.0
      %1553 = vmatmul.mubr.f32.gmra.mrb[0].mxu0 %v1363
      %v1554 = vpop.f32.mrb[0].mxu0
      %v1555 = vadd.f32 %v1283, %v1554
      %v1556 = vpop.f32.mrb[0].mxu0
      %1557 = vmatprep.mubr.f32.mxu0 0.0
      %1558 = vmatmul.mubr.f32.gmra.mrb[0].mxu0 %v1366
      %v1559 = vpop.f32.mrb[0].mxu0
      %v1560 = vadd.f32 %v1288, %v1559
      %v1561 = vpop.f32.mrb[0].mxu0
      %1562 = vdwg.mxu0
      %1565 = vrot.lane.b32.xlu0 %v745, 8
      %v1566 = vpop.permute.xlu0 %1565
      %1567 = vrot.lane.b32.xlu0 %v746, 8
      %v1568 = vpop.permute.xlu0 %1567
      %vm1571 = vcmask 64512
      %v1572 = vsel %vm1571, %v743, %v1566
      %v1573 = vsel %vm1571, %v744, %v1568
      %v1575 = vsel %vm779, %v747, 0
      %v1578 = vsel %vm779, %v748, 0
      %v1581 = vsel %vm779, %v749, 0
      %v1584 = vsel %vm779, %v750, 0
      %1586 = vmatprep.subr.mxu0 0.0
      %1587 = vmatpush1.msra.mxu0 %v1572
      %1588 = vmatprep.subr.mxu0 0.0
      %1589 = vmatpush1.msra.mxu0 %v1573
      %1590 = vmatprep.subr.mxu0 0.0
      %1591 = vmatpush1.msra.mxu0 0.0
      %1592 = vmatprep.subr.mxu0 0.0
      %1593 = vmatpush1.msra.mxu0 0.0
      %1594 = vmatprep.subr.mxu0 0.0
      %1595 = vmatpush1.msra.mxu0 0.0
      %1596 = vmatprep.subr.mxu0 0.0
      %1597 = vmatpush1.msra.mxu0 0.0
      %1598 = vmatprep.subr.mxu0 0.0
      %1599 = vmatpush1.msra.mxu0 0.0
      %1600 = vmatprep.subr.mxu0 0.0
      %1601 = vmatpush1.msra.mxu0 0.0
      %1602 = vmatprep.subr.mxu0 0.0
      %1603 = vmatpush1.msra.mxu0 0.0
      %1604 = vmatprep.subr.mxu0 0.0
      %1605 = vmatpush1.msra.mxu0 0.0
      %1606 = vmatprep.subr.mxu0 0.0
      %1607 = vmatpush1.msra.mxu0 0.0
      %1608 = vmatprep.subr.mxu0 0.0
      %1609 = vmatpush1.msra.mxu0 0.0
      %1610 = vmatprep.subr.mxu0 0.0
      %1611 = vmatpush1.msra.mxu0 0.0
      %1612 = vmatprep.subr.mxu0 0.0
      %1613 = vmatpush1.msra.mxu0 0.0
      %1614 = vmatprep.subr.mxu0 0.0
      %1615 = vmatpush1.msra.mxu0 0.0
      %1616 = vmatprep.subr.mxu0 0.0
      %1617 = vmatpush1.msra.mxu0 0.0
      %1618 = vmatprep.subr.mxu0 0.0
      %1619 = vmatpush1.msra.mxu0 0.0
      %1620 = vmatprep.subr.mxu0 0.0
      %1621 = vmatpush1.msra.mxu0 0.0
      %1622 = vmatprep.subr.mxu0 0.0
      %1623 = vmatpush1.msra.mxu0 0.0
      %1624 = vmatprep.subr.mxu0 0.0
      %1625 = vmatpush1.msra.mxu0 0.0
      %1626 = vmatprep.subr.mxu0 0.0
      %1627 = vmatpush1.msra.mxu0 0.0
      %1628 = vmatprep.subr.mxu0 0.0
      %1629 = vmatpush1.msra.mxu0 0.0
      %1630 = vmatprep.subr.mxu0 0.0
      %1631 = vmatpush1.msra.mxu0 0.0
      %1632 = vmatprep.subr.mxu0 0.0
      %1633 = vmatpush1.msra.mxu0 0.0
      %1634 = vmatprep.subr.mxu0 0.0
      %1635 = vmatpush1.msra.mxu0 0.0
      %1636 = vmatprep.subr.mxu0 0.0
      %1637 = vmatpush1.msra.mxu0 0.0
      %1638 = vmatprep.subr.mxu0 0.0
      %1639 = vmatpush1.msra.mxu0 0.0
      %1640 = vmatprep.subr.mxu0 0.0
      %1641 = vmatpush1.msra.mxu0 0.0
      %1642 = vmatprep.subr.mxu0 0.0
      %1643 = vmatpush1.msra.mxu0 0.0
      %1644 = vmatprep.subr.mxu0 0.0
      %1645 = vmatpush1.msra.mxu0 0.0
      %1646 = vmatprep.subr.mxu0 0.0
      %1647 = vmatpush1.msra.mxu0 0.0
      %1648 = vmatprep.subr.mxu0 0.0
      %1649 = vmatpush1.msra.mxu0 0.0
      %1650 = vmatprep.mubr.f32.mxu0 0.0
      %1651 = vmatmul.mubr.f32.gmra.mrb[0].mxu0 %v1575
      %v1652 = vpop.f32.mrb[0].mxu0
      %v1653 = vadd.f32 0.0, %v1652
      %v1654 = vpop.f32.mrb[0].mxu0
      %1655 = vmatprep.mubr.f32.mxu0 0.0
      %1656 = vmatmul.mubr.f32.gmra.mrb[0].mxu0 %v1578
      %v1657 = vpop.f32.mrb[0].mxu0
      %v1658 = vadd.f32 0.0, %v1657
      %v1659 = vpop.f32.mrb[0].mxu0
      %1660 = vmatprep.mubr.f32.mxu0 0.0
      %1661 = vmatmul.mubr.f32.gmra.mrb[0].mxu0 %v1581
      %v1662 = vpop.f32.mrb[0].mxu0
      %v1663 = vadd.f32 0.0, %v1662
      %v1664 = vpop.f32.mrb[0].mxu0
      %1665 = vmatprep.mubr.f32.mxu0 0.0
      %1666 = vmatmul.mubr.f32.gmra.mrb[0].mxu0 %v1584
      %v1667 = vpop.f32.mrb[0].mxu0
      %v1668 = vadd.f32 0.0, %v1667
      %v1669 = vpop.f32.mrb[0].mxu0
      %1670 = vdwg.mxu0
      %1673 = vrot.lane.b32.xlu0 %v1653, 8
      %v1674 = vpop.permute.xlu0 %1673
      %1675 = vrot.lane.b32.xlu0 %v1658, 8
      %v1676 = vpop.permute.xlu0 %1675
      %1681 = vrot.lane.b32.xlu0 %v1663, 16
      %v1682 = vpop.permute.xlu0 %1681
      %1683 = vrot.lane.b32.xlu0 %v1668, 16
      %v1684 = vpop.permute.xlu0 %1683
      %v1687 = vsel %vm1571, %v743, %v1674
      %v1688 = vsel %vm1571, %v744, %v1676
      %v1689 = vsel %vm779, %v1687, %v1682
      %v1690 = vsel %vm779, %v1688, %v1684
      %1691 = vrot.lane.b32.xlu0 %v1663, 8
      %v1692 = vpop.permute.xlu0 %1691
      %1693 = vrot.lane.b32.xlu0 %v1668, 8
      %v1694 = vpop.permute.xlu0 %1693
      %v1697 = vsel %vm1571, %v745, %v1653
      %v1698 = vsel %vm1571, %v746, %v1658
      %v1699 = vsel %vm779, %v1697, %v1692
      %v1700 = vsel %vm779, %v1698, %v1694
      %v1701 = vld [vmem:[%s11] sm:$0xff]
      %v1702 = vld [vmem:[%s11 + $0x8] sm:$0xff]
      %v1703 = vld [vmem:[%s11 + $0x10] sm:$0xff]
      %v1704 = vld [vmem:[%s12] sm:$0x1]
      %v1706 = vlaneseq
      %v1707 = vshrl.u32 %v1706, 7
      %v1708 = vsub.s32 0, %v1707
      %v1709 = vrot.slane %v1704, %v1708
      %vm1711 = vcmask 195584
      %v1713 = vsel %vm1711, %v1689, 0
      %v1716 = vsel %vm1711, %v1690, 0
      %v1719 = vsel %vm1711, %v1699, 0
      %v1722 = vsel %vm1711, %v1700, 0
      %1724 = vmatprep.subr.mxu0 0.0
      %1725 = vmatpush1.msra.mxu0 %v1701
      %1726 = vmatprep.subr.mxu0 0.0
      %1727 = vmatpush1.msra.mxu0 %v1702
      %1728 = vmatprep.subr.mxu0 0.0
      %1729 = vmatpush1.msra.mxu0 %v1703
      %1730 = vmatprep.subr.mxu0 0.0
      %1731 = vmatpush1.msra.mxu0 0.0
      %1732 = vmatprep.subr.mxu0 0.0
      %1733 = vmatpush1.msra.mxu0 0.0
      %1734 = vmatprep.subr.mxu0 0.0
      %1735 = vmatpush1.msra.mxu0 0.0
      %1736 = vmatprep.subr.mxu0 0.0
      %1737 = vmatpush1.msra.mxu0 0.0
      %1738 = vmatprep.subr.mxu0 0.0
      %1739 = vmatpush1.msra.mxu0 0.0
      %1740 = vmatprep.subr.mxu0 0.0
      %1741 = vmatpush1.msra.mxu0 0.0
      %1742 = vmatprep.subr.mxu0 0.0
      %1743 = vmatpush1.msra.mxu0 0.0
      %1744 = vmatprep.subr.mxu0 0.0
      %1745 = vmatpush1.msra.mxu0 0.0
      %1746 = vmatprep.subr.mxu0 0.0
      %1747 = vmatpush1.msra.mxu0 0.0
      %1748 = vmatprep.subr.mxu0 0.0
      %1749 = vmatpush1.msra.mxu0 0.0
      %1750 = vmatprep.subr.mxu0 0.0
      %1751 = vmatpush1.msra.mxu0 0.0
      %1752 = vmatprep.subr.mxu0 0.0
      %1753 = vmatpush1.msra.mxu0 0.0
      %1754 = vmatprep.subr.mxu0 0.0
      %1755 = vmatpush1.msra.mxu0 0.0
      %1756 = vmatprep.subr.mxu0 0.0
      %1757 = vmatpush1.msra.mxu0 0.0
      %1758 = vmatprep.subr.mxu0 0.0
      %1759 = vmatpush1.msra.mxu0 0.0
      %1760 = vmatprep.subr.mxu0 0.0
      %1761 = vmatpush1.msra.mxu0 0.0
      %1762 = vmatprep.subr.mxu0 0.0
      %1763 = vmatpush1.msra.mxu0 0.0
      %1764 = vmatprep.subr.mxu0 0.0
      %1765 = vmatpush1.msra.mxu0 0.0
      %1766 = vmatprep.subr.mxu0 0.0
      %1767 = vmatpush1.msra.mxu0 0.0
      %1768 = vmatprep.subr.mxu0 0.0
      %1769 = vmatpush1.msra.mxu0 0.0
      %1770 = vmatprep.subr.mxu0 0.0
      %1771 = vmatpush1.msra.mxu0 0.0
      %1772 = vmatprep.subr.mxu0 0.0
      %1773 = vmatpush1.msra.mxu0 0.0
      %1774 = vmatprep.subr.mxu0 0.0
      %1775 = vmatpush1.msra.mxu0 0.0
      %1776 = vmatprep.subr.mxu0 0.0
      %1777 = vmatpush1.msra.mxu0 0.0
      %1778 = vmatprep.subr.mxu0 0.0
      %1779 = vmatpush1.msra.mxu0 0.0
      %1780 = vmatprep.subr.mxu0 0.0
      %1781 = vmatpush1.msra.mxu0 0.0
      %1782 = vmatprep.subr.mxu0 0.0
      %1783 = vmatpush1.msra.mxu0 0.0
      %1784 = vmatprep.subr.mxu0 0.0
      %1785 = vmatpush1.msra.mxu0 0.0
      %1786 = vmatprep.subr.mxu0 0.0
      %1787 = vmatpush1.msra.mxu0 0.0
      %1788 = vmatprep.mubr.f32.mxu0 0.0
      %1789 = vmatmul.mubr.f32.gmra.mrb[0].mxu0 %v1713
      %v1790 = vpop.f32.mrb[0].mxu0
      %v1791 = vadd.f32 %v1709, %v1790
      %v1792 = vpop.f32.mrb[0].mxu0
      %1793 = vmatprep.mubr.f32.mxu0 0.0
      %1794 = vmatmul.mubr.f32.gmra.mrb[0].mxu0 %v1716
      %v1795 = vpop.f32.mrb[0].mxu0
      %v1796 = vadd.f32 %v1709, %v1795
      %v1797 = vpop.f32.mrb[0].mxu0
      %1798 = vmatprep.mubr.f32.mxu0 0.0
      %1799 = vmatmul.mubr.f32.gmra.mrb[0].mxu0 %v1719
      %v1800 = vpop.f32.mrb[0].mxu0
      %v1801 = vadd.f32 %v1709, %v1800
      %v1802 = vpop.f32.mrb[0].mxu0
      %1803 = vmatprep.mubr.f32.mxu0 0.0
      %1804 = vmatmul.mubr.f32.gmra.mrb[0].mxu0 %v1722
      %v1805 = vpop.f32.mrb[0].mxu0
      %v1806 = vadd.f32 %v1709, %v1805
      %v1807 = vpop.f32.mrb[0].mxu0
      %1808 = vdwg.mxu0
      %v1809 = vmax.f32 %v1791, 0.0
      %v1810 = vmax.f32 %v1796, 0.0
      %v1811 = vmax.f32 %v1801, 0.0
      %v1812 = vmax.f32 %v1806, 0.0
      %1815 = vrot.lane.b32.xlu0 %v1811, 32
      %v1816 = vpop.permute.xlu0 %1815
      %1817 = vrot.lane.b32.xlu0 %v1812, 32
      %v1818 = vpop.permute.xlu0 %1817
      %v1821 = vsel %vm895, %v1809, %v1816
      %v1822 = vsel %vm895, %v1810, %v1818
      %1823 = vmatprep.subr.mxu0 0.0
      %1824 = vmatpush1.msra.mxu0 %v1821
      %1825 = vmatprep.subr.mxu0 0.0
      %1826 = vmatpush1.msra.mxu0 %v1822
      %1827 = vmatprep.subr.mxu0 0.0
      %1828 = vmatpush1.msra.mxu0 0.0
      %1829 = vmatprep.subr.mxu0 0.0
      %1830 = vmatpush1.msra.mxu0 0.0
      %1831 = vmatprep.subr.mxu0 0.0
      %1832 = vmatpush1.msra.mxu0 0.0
      %1833 = vmatprep.subr.mxu0 0.0
      %1834 = vmatpush1.msra.mxu0 0.0
      %1835 = vmatprep.subr.mxu0 0.0
      %1836 = vmatpush1.msra.mxu0 0.0
      %1837 = vmatprep.subr.mxu0 0.0
      %1838 = vmatpush1.msra.mxu0 0.0
      %1839 = vmatprep.subr.mxu0 0.0
      %1840 = vmatpush1.msra.mxu0 0.0
      %1841 = vmatprep.subr.mxu0 0.0
      %1842 = vmatpush1.msra.mxu0 0.0
      %1843 = vmatprep.subr.mxu0 0.0
      %1844 = vmatpush1.msra.mxu0 0.0
      %1845 = vmatprep.subr.mxu0 0.0
      %1846 = vmatpush1.msra.mxu0 0.0
      %1847 = vmatprep.subr.mxu0 0.0
      %1848 = vmatpush1.msra.mxu0 0.0
      %1849 = vmatprep.subr.mxu0 0.0
      %1850 = vmatpush1.msra.mxu0 0.0
      %1851 = vmatprep.subr.mxu0 0.0
      %1852 = vmatpush1.msra.mxu0 0.0
      %1853 = vmatprep.subr.mxu0 0.0
      %1854 = vmatpush1.msra.mxu0 0.0
      %1855 = vmatprep.subr.mxu0 0.0
      %1856 = vmatpush1.msra.mxu0 0.0
      %1857 = vmatprep.subr.mxu0 0.0
      %1858 = vmatpush1.msra.mxu0 0.0
      %1859 = vmatprep.subr.mxu0 0.0
      %1860 = vmatpush1.msra.mxu0 0.0
      %1861 = vmatprep.subr.mxu0 0.0
      %1862 = vmatpush1.msra.mxu0 0.0
      %1863 = vmatprep.subr.mxu0 0.0
      %1864 = vmatpush1.msra.mxu0 0.0
      %1865 = vmatprep.subr.mxu0 0.0
      %1866 = vmatpush1.msra.mxu0 0.0
      %1867 = vmatprep.subr.mxu0 0.0
      %1868 = vmatpush1.msra.mxu0 0.0
      %1869 = vmatprep.subr.mxu0 0.0
      %1870 = vmatpush1.msra.mxu0 0.0
      %1871 = vmatprep.subr.mxu0 0.0
      %1872 = vmatpush1.msra.mxu0 0.0
      %1873 = vmatprep.subr.mxu0 0.0
      %1874 = vmatpush1.msra.mxu0 0.0
      %1875 = vmatprep.subr.mxu0 0.0
      %1876 = vmatpush1.msra.mxu0 0.0
      %1877 = vmatprep.subr.mxu0 0.0
      %1878 = vmatpush1.msra.mxu0 0.0
      %1879 = vmatprep.subr.mxu0 0.0
      %1880 = vmatpush1.msra.mxu0 0.0
      %1881 = vmatprep.subr.mxu0 0.0
      %1882 = vmatpush1.msra.mxu0 0.0
      %1883 = vmatprep.subr.mxu0 0.0
      %1884 = vmatpush1.msra.mxu0 0.0
      %1885 = vmatprep.subr.mxu0 0.0
      %1886 = vmatpush1.msra.mxu0 0.0
      %1887 = vmatprep.mubr.f32.mxu0 0.0
      %1888 = vmatmul.mubr.f32.gmra.mrb[0].mxu0 %v1575
      %v1889 = vpop.f32.mrb[0].mxu0
      %v1890 = vadd.f32 0.0, %v1889
      %v1891 = vpop.f32.mrb[0].mxu0
      %1892 = vmatprep.mubr.f32.mxu0 0.0
      %1893 = vmatmul.mubr.f32.gmra.mrb[0].mxu0 %v1578
      %v1894 = vpop.f32.mrb[0].mxu0
      %v1895 = vadd.f32 0.0, %v1894
      %v1896 = vpop.f32.mrb[0].mxu0
      %1897 = vmatprep.mubr.f32.mxu0 0.0
      %1898 = vmatmul.mubr.f32.gmra.mrb[0].mxu0 %v1581
      %v1899 = vpop.f32.mrb[0].mxu0
      %v1900 = vadd.f32 0.0, %v1899
      %v1901 = vpop.f32.mrb[0].mxu0
      %1902 = vmatprep.mubr.f32.mxu0 0.0
      %1903 = vmatmul.mubr.f32.gmra.mrb[0].mxu0 %v1584
      %v1904 = vpop.f32.mrb[0].mxu0
      %v1905 = vadd.f32 0.0, %v1904
      %v1906 = vpop.f32.mrb[0].mxu0
      %1907 = vdwg.mxu0
      %1910 = vrot.lane.b32.xlu0 %v1890, 32
      %v1911 = vpop.permute.xlu0 %1910
      %1912 = vrot.lane.b32.xlu0 %v1895, 32
      %v1913 = vpop.permute.xlu0 %1912
      %1918 = vrot.lane.b32.xlu0 %v1900, 64
      %v1919 = vpop.permute.xlu0 %1918
      %1920 = vrot.lane.b32.xlu0 %v1905, 64
      %v1921 = vpop.permute.xlu0 %1920
      %v1924 = vsel %vm895, %v1809, %v1911
      %v1925 = vsel %vm895, %v1810, %v1913
      %vm1926 = vcmask 523264
      %v1927 = vsel %vm1926, %v1924, %v1919
      %v1928 = vsel %vm1926, %v1925, %v1921
      %1929 = vrot.lane.b32.xlu0 %v1900, 32
      %v1930 = vpop.permute.xlu0 %1929
      %1931 = vrot.lane.b32.xlu0 %v1905, 32
      %v1932 = vpop.permute.xlu0 %1931
      %v1935 = vsel %vm895, %v1811, %v1890
      %v1936 = vsel %vm895, %v1812, %v1895
      %v1937 = vsel %vm1926, %v1935, %v1930
      %v1938 = vsel %vm1926, %v1936, %v1932
      %v1939 = vld [vmem:[%s13] sm:$0xff]
      %v1940 = vld [vmem:[%s13 + $0x8] sm:$0xff]
      %v1941 = vld [vmem:[%s13 + $0x10] sm:$0xff]
      %v1942 = vld [vmem:[%s13 + $0x18] sm:$0xff]
      %v1943 = vld [vmem:[%s13 + $0x20] sm:$0xff]
      %v1944 = vld [vmem:[%s13 + $0x28] sm:$0xff]
      %v1945 = vld [vmem:[%s13 + $0x30] sm:$0xff]
      %v1946 = vld [vmem:[%s13 + $0x38] sm:$0xff]
      %v1947 = vld [vmem:[%s13 + $0x40] sm:$0xff]
      %v1948 = vld [vmem:[%s13 + $0x48] sm:$0xff]
      %v1949 = vld [vmem:[%s13 + $0x50] sm:$0xff]
      %v1950 = vld [vmem:[%s13 + $0x58] sm:$0xff]
      %v1951 = vld [vmem:[%s14] sm:$0x1]
      %v1953 = vlaneseq
      %v1954 = vshrl.u32 %v1953, 7
      %v1955 = vsub.s32 0, %v1954
      %v1956 = vrot.slane %v1951, %v1955
      %vm1958 = vcmask 785408
      %v1960 = vsel %vm1958, %v1927, 0
      %v1963 = vsel %vm1958, %v1928, 0
      %v1966 = vsel %vm1958, %v1937, 0
      %v1969 = vsel %vm1958, %v1938, 0
      %1971 = vmatprep.subr.mxu0 0.0
      %1972 = vmatpush1.msra.mxu0 %v1939
      %1973 = vmatprep.subr.mxu0 0.0
      %1974 = vmatpush1.msra.mxu0 %v1940
      %1975 = vmatprep.subr.mxu0 0.0
      %1976 = vmatpush1.msra.mxu0 %v1941
      %1977 = vmatprep.subr.mxu0 0.0
      %1978 = vmatpush1.msra.mxu0 %v1942
      %1979 = vmatprep.subr.mxu0 0.0
      %1980 = vmatpush1.msra.mxu0 %v1943
      %1981 = vmatprep.subr.mxu0 0.0
      %1982 = vmatpush1.msra.mxu0 %v1944
      %1983 = vmatprep.subr.mxu0 0.0
      %1984 = vmatpush1.msra.mxu0 %v1945
      %1985 = vmatprep.subr.mxu0 0.0
      %1986 = vmatpush1.msra.mxu0 %v1946
      %1987 = vmatprep.subr.mxu0 0.0
      %1988 = vmatpush1.msra.mxu0 %v1947
      %1989 = vmatprep.subr.mxu0 0.0
      %1990 = vmatpush1.msra.mxu0 %v1948
      %1991 = vmatprep.subr.mxu0 0.0
      %1992 = vmatpush1.msra.mxu0 %v1949
      %1993 = vmatprep.subr.mxu0 0.0
      %1994 = vmatpush1.msra.mxu0 %v1950
      %1995 = vmatprep.subr.mxu0 0.0
      %1996 = vmatpush1.msra.mxu0 0.0
      %1997 = vmatprep.subr.mxu0 0.0
      %1998 = vmatpush1.msra.mxu0 0.0
      %1999 = vmatprep.subr.mxu0 0.0
      %2000 = vmatpush1.msra.mxu0 0.0
      %2001 = vmatprep.subr.mxu0 0.0
      %2002 = vmatpush1.msra.mxu0 0.0
      %2003 = vmatprep.subr.mxu0 0.0
      %2004 = vmatpush1.msra.mxu0 0.0
      %2005 = vmatprep.subr.mxu0 0.0
      %2006 = vmatpush1.msra.mxu0 0.0
      %2007 = vmatprep.subr.mxu0 0.0
      %2008 = vmatpush1.msra.mxu0 0.0
      %2009 = vmatprep.subr.mxu0 0.0
      %2010 = vmatpush1.msra.mxu0 0.0
      %2011 = vmatprep.subr.mxu0 0.0
      %2012 = vmatpush1.msra.mxu0 0.0
      %2013 = vmatprep.subr.mxu0 0.0
      %2014 = vmatpush1.msra.mxu0 0.0
      %2015 = vmatprep.subr.mxu0 0.0
      %2016 = vmatpush1.msra.mxu0 0.0
      %2017 = vmatprep.subr.mxu0 0.0
      %2018 = vmatpush1.msra.mxu0 0.0
      %2019 = vmatprep.subr.mxu0 0.0
      %2020 = vmatpush1.msra.mxu0 0.0
      %2021 = vmatprep.subr.mxu0 0.0
      %2022 = vmatpush1.msra.mxu0 0.0
      %2023 = vmatprep.subr.mxu0 0.0
      %2024 = vmatpush1.msra.mxu0 0.0
      %2025 = vmatprep.subr.mxu0 0.0
      %2026 = vmatpush1.msra.mxu0 0.0
      %2027 = vmatprep.subr.mxu0 0.0
      %2028 = vmatpush1.msra.mxu0 0.0
      %2029 = vmatprep.subr.mxu0 0.0
      %2030 = vmatpush1.msra.mxu0 0.0
      %2031 = vmatprep.subr.mxu0 0.0
      %2032 = vmatpush1.msra.mxu0 0.0
      %2033 = vmatprep.subr.mxu0 0.0
      %2034 = vmatpush1.msra.mxu0 0.0
      %2035 = vmatprep.mubr.f32.mxu0 0.0
      %2036 = vmatmul.mubr.f32.gmra.mrb[0].mxu0 %v1960
      %v2037 = vpop.f32.mrb[0].mxu0
      %v2038 = vadd.f32 %v1956, %v2037
      %v2039 = vpop.f32.mrb[0].mxu0
      %2040 = vmatprep.mubr.f32.mxu0 0.0
      %2041 = vmatmul.mubr.f32.gmra.mrb[0].mxu0 %v1963
      %v2042 = vpop.f32.mrb[0].mxu0
      %v2043 = vadd.f32 %v1956, %v2042
      %v2044 = vpop.f32.mrb[0].mxu0
      %2045 = vmatprep.mubr.f32.mxu0 0.0
      %2046 = vmatmul.mubr.f32.gmra.mrb[0].mxu0 %v1966
      %v2047 = vpop.f32.mrb[0].mxu0
      %v2048 = vadd.f32 %v1956, %v2047
      %v2049 = vpop.f32.mrb[0].mxu0
      %2050 = vmatprep.mubr.f32.mxu0 0.0
      %2051 = vmatmul.mubr.f32.gmra.mrb[0].mxu0 %v1969
      %v2052 = vpop.f32.mrb[0].mxu0
      %v2053 = vadd.f32 %v1956, %v2052
      %v2054 = vpop.f32.mrb[0].mxu0
      %2055 = vdwg.mxu0
      %v2056 = vmax.f32 %v2038, 0.0
      %v2057 = vmax.f32 %v2043, 0.0
      %v2058 = vmax.f32 %v2048, 0.0
      %v2059 = vmax.f32 %v2053, 0.0
      %2062 = vrot.lane.b32.xlu0 %v2058, 16
      %v2063 = vpop.permute.xlu0 %2062
      %2064 = vrot.lane.b32.xlu0 %v2059, 16
      %v2065 = vpop.permute.xlu0 %2064
      %v2068 = vsel %vm779, %v2056, %v2063
      %v2069 = vsel %vm779, %v2057, %v2065
      %2070 = vmatprep.subr.mxu0 0.0
      %2071 = vmatpush1.msra.mxu0 %v2068
      %2072 = vmatprep.subr.mxu0 0.0
      %2073 = vmatpush1.msra.mxu0 %v2069
      %2074 = vmatprep.subr.mxu0 0.0
      %2075 = vmatpush1.msra.mxu0 0.0
      %2076 = vmatprep.subr.mxu0 0.0
      %2077 = vmatpush1.msra.mxu0 0.0
      %2078 = vmatprep.subr.mxu0 0.0
      %2079 = vmatpush1.msra.mxu0 0.0
      %2080 = vmatprep.subr.mxu0 0.0
      %2081 = vmatpush1.msra.mxu0 0.0
      %2082 = vmatprep.subr.mxu0 0.0
      %2083 = vmatpush1.msra.mxu0 0.0
      %2084 = vmatprep.subr.mxu0 0.0
      %2085 = vmatpush1.msra.mxu0 0.0
      %2086 = vmatprep.subr.mxu0 0.0
      %2087 = vmatpush1.msra.mxu0 0.0
      %2088 = vmatprep.subr.mxu0 0.0
      %2089 = vmatpush1.msra.mxu0 0.0
      %2090 = vmatprep.subr.mxu0 0.0
      %2091 = vmatpush1.msra.mxu0 0.0
      %2092 = vmatprep.subr.mxu0 0.0
      %2093 = vmatpush1.msra.mxu0 0.0
      %2094 = vmatprep.subr.mxu0 0.0
      %2095 = vmatpush1.msra.mxu0 0.0
      %2096 = vmatprep.subr.mxu0 0.0
      %2097 = vmatpush1.msra.mxu0 0.0
      %2098 = vmatprep.subr.mxu0 0.0
      %2099 = vmatpush1.msra.mxu0 0.0
      %2100 = vmatprep.subr.mxu0 0.0
      %2101 = vmatpush1.msra.mxu0 0.0
      %2102 = vmatprep.subr.mxu0 0.0
      %2103 = vmatpush1.msra.mxu0 0.0
      %2104 = vmatprep.subr.mxu0 0.0
      %2105 = vmatpush1.msra.mxu0 0.0
      %2106 = vmatprep.subr.mxu0 0.0
      %2107 = vmatpush1.msra.mxu0 0.0
      %2108 = vmatprep.subr.mxu0 0.0
      %2109 = vmatpush1.msra.mxu0 0.0
      %2110 = vmatprep.subr.mxu0 0.0
      %2111 = vmatpush1.msra.mxu0 0.0
      %2112 = vmatprep.subr.mxu0 0.0
      %2113 = vmatpush1.msra.mxu0 0.0
      %2114 = vmatprep.subr.mxu0 0.0
      %2115 = vmatpush1.msra.mxu0 0.0
      %2116 = vmatprep.subr.mxu0 0.0
      %2117 = vmatpush1.msra.mxu0 0.0
      %2118 = vmatprep.subr.mxu0 0.0
      %2119 = vmatpush1.msra.mxu0 0.0
      %2120 = vmatprep.subr.mxu0 0.0
      %2121 = vmatpush1.msra.mxu0 0.0
      %2122 = vmatprep.subr.mxu0 0.0
      %2123 = vmatpush1.msra.mxu0 0.0
      %2124 = vmatprep.subr.mxu0 0.0
      %2125 = vmatpush1.msra.mxu0 0.0
      %2126 = vmatprep.subr.mxu0 0.0
      %2127 = vmatpush1.msra.mxu0 0.0
      %2128 = vmatprep.subr.mxu0 0.0
      %2129 = vmatpush1.msra.mxu0 0.0
      %2130 = vmatprep.subr.mxu0 0.0
      %2131 = vmatpush1.msra.mxu0 0.0
      %2132 = vmatprep.subr.mxu0 0.0
      %2133 = vmatpush1.msra.mxu0 0.0
      %2134 = vmatprep.mubr.f32.mxu0 0.0
      %2135 = vmatmul.mubr.f32.gmra.mrb[0].mxu0 %v1575
      %v2136 = vpop.f32.mrb[0].mxu0
      %v2137 = vadd.f32 0.0, %v2136
      %v2138 = vpop.f32.mrb[0].mxu0
      %2139 = vmatprep.mubr.f32.mxu0 0.0
      %2140 = vmatmul.mubr.f32.gmra.mrb[0].mxu0 %v1578
      %v2141 = vpop.f32.mrb[0].mxu0
      %v2142 = vadd.f32 0.0, %v2141
      %v2143 = vpop.f32.mrb[0].mxu0
      %2144 = vmatprep.mubr.f32.mxu0 0.0
      %2145 = vmatmul.mubr.f32.gmra.mrb[0].mxu0 %v1581
      %v2146 = vpop.f32.mrb[0].mxu0
      %v2147 = vadd.f32 0.0, %v2146
      %v2148 = vpop.f32.mrb[0].mxu0
      %2149 = vmatprep.mubr.f32.mxu0 0.0
      %2150 = vmatmul.mubr.f32.gmra.mrb[0].mxu0 %v1584
      %v2151 = vpop.f32.mrb[0].mxu0
      %v2152 = vadd.f32 0.0, %v2151
      %v2153 = vpop.f32.mrb[0].mxu0
      %2154 = vdwg.mxu0
      %2157 = vrot.lane.b32.xlu0 %v2137, 16
      %v2158 = vpop.permute.xlu0 %2157
      %2159 = vrot.lane.b32.xlu0 %v2142, 16
      %v2160 = vpop.permute.xlu0 %2159
      %2165 = vrot.lane.b32.xlu0 %v2147, 32
      %v2166 = vpop.permute.xlu0 %2165
      %2167 = vrot.lane.b32.xlu0 %v2152, 32
      %v2168 = vpop.permute.xlu0 %2167
      %v2171 = vsel %vm779, %v2056, %v2158
      %v2172 = vsel %vm779, %v2057, %v2160
      %v2173 = vsel %vm895, %v2171, %v2166
      %v2174 = vsel %vm895, %v2172, %v2168
      %2175 = vrot.lane.b32.xlu0 %v2147, 16
      %v2176 = vpop.permute.xlu0 %2175
      %2177 = vrot.lane.b32.xlu0 %v2152, 16
      %v2178 = vpop.permute.xlu0 %2177
      %v2181 = vsel %vm779, %v2058, %v2137
      %v2182 = vsel %vm779, %v2059, %v2142
      %v2183 = vsel %vm895, %v2181, %v2176
      %v2184 = vsel %vm895, %v2182, %v2178
      %v2185 = vld [vmem:[%s15] sm:$0xff]
      %v2186 = vld [vmem:[%s15 + $0x8] sm:$0xff]
      %v2187 = vld [vmem:[%s15 + $0x10] sm:$0xff]
      %v2188 = vld [vmem:[%s15 + $0x18] sm:$0xff]
      %v2189 = vld [vmem:[%s15 + $0x20] sm:$0xff]
      %v2190 = vld [vmem:[%s15 + $0x28] sm:$0xff]
      %v2191 = vld [vmem:[%s16] sm:$0x1]
      %v2193 = vlaneseq
      %v2194 = vshrl.u32 %v2193, 7
      %v2195 = vsub.s32 0, %v2194
      %v2196 = vrot.slane %v2191, %v2195
      %vm2198 = vcmask 392192
      %v2200 = vsel %vm2198, %v2173, 0
      %v2203 = vsel %vm2198, %v2174, 0
      %v2206 = vsel %vm2198, %v2183, 0
      %v2209 = vsel %vm2198, %v2184, 0
      %2211 = vmatprep.subr.mxu0 0.0
      %2212 = vmatpush1.msra.mxu0 %v2185
      %2213 = vmatprep.subr.mxu0 0.0
      %2214 = vmatpush1.msra.mxu0 %v2186
      %2215 = vmatprep.subr.mxu0 0.0
      %2216 = vmatpush1.msra.mxu0 %v2187
      %2217 = vmatprep.subr.mxu0 0.0
      %2218 = vmatpush1.msra.mxu0 %v2188
      %2219 = vmatprep.subr.mxu0 0.0
      %2220 = vmatpush1.msra.mxu0 %v2189
      %2221 = vmatprep.subr.mxu0 0.0
      %2222 = vmatpush1.msra.mxu0 %v2190
      %2223 = vmatprep.subr.mxu0 0.0
      %2224 = vmatpush1.msra.mxu0 0.0
      %2225 = vmatprep.subr.mxu0 0.0
      %2226 = vmatpush1.msra.mxu0 0.0
      %2227 = vmatprep.subr.mxu0 0.0
      %2228 = vmatpush1.msra.mxu0 0.0
      %2229 = vmatprep.subr.mxu0 0.0
      %2230 = vmatpush1.msra.mxu0 0.0
      %2231 = vmatprep.subr.mxu0 0.0
      %2232 = vmatpush1.msra.mxu0 0.0
      %2233 = vmatprep.subr.mxu0 0.0
      %2234 = vmatpush1.msra.mxu0 0.0
      %2235 = vmatprep.subr.mxu0 0.0
      %2236 = vmatpush1.msra.mxu0 0.0
      %2237 = vmatprep.subr.mxu0 0.0
      %2238 = vmatpush1.msra.mxu0 0.0
      %2239 = vmatprep.subr.mxu0 0.0
      %2240 = vmatpush1.msra.mxu0 0.0
      %2241 = vmatprep.subr.mxu0 0.0
      %2242 = vmatpush1.msra.mxu0 0.0
      %2243 = vmatprep.subr.mxu0 0.0
      %2244 = vmatpush1.msra.mxu0 0.0
      %2245 = vmatprep.subr.mxu0 0.0
      %2246 = vmatpush1.msra.mxu0 0.0
      %2247 = vmatprep.subr.mxu0 0.0
      %2248 = vmatpush1.msra.mxu0 0.0
      %2249 = vmatprep.subr.mxu0 0.0
      %2250 = vmatpush1.msra.mxu0 0.0
      %2251 = vmatprep.subr.mxu0 0.0
      %2252 = vmatpush1.msra.mxu0 0.0
      %2253 = vmatprep.subr.mxu0 0.0
      %2254 = vmatpush1.msra.mxu0 0.0
      %2255 = vmatprep.subr.mxu0 0.0
      %2256 = vmatpush1.msra.mxu0 0.0
      %2257 = vmatprep.subr.mxu0 0.0
      %2258 = vmatpush1.msra.mxu0 0.0
      %2259 = vmatprep.subr.mxu0 0.0
      %2260 = vmatpush1.msra.mxu0 0.0
      %2261 = vmatprep.subr.mxu0 0.0
      %2262 = vmatpush1.msra.mxu0 0.0
      %2263 = vmatprep.subr.mxu0 0.0
      %2264 = vmatpush1.msra.mxu0 0.0
      %2265 = vmatprep.subr.mxu0 0.0
      %2266 = vmatpush1.msra.mxu0 0.0
      %2267 = vmatprep.subr.mxu0 0.0
      %2268 = vmatpush1.msra.mxu0 0.0
      %2269 = vmatprep.subr.mxu0 0.0
      %2270 = vmatpush1.msra.mxu0 0.0
      %2271 = vmatprep.subr.mxu0 0.0
      %2272 = vmatpush1.msra.mxu0 0.0
      %2273 = vmatprep.subr.mxu0 0.0
      %2274 = vmatpush1.msra.mxu0 0.0
      %2275 = vmatprep.mubr.f32.mxu0 0.0
      %2276 = vmatmul.mubr.f32.gmra.mrb[0].mxu0 %v2200
      %v2277 = vpop.f32.mrb[0].mxu0
      %v2278 = vadd.f32 %v2196, %v2277
      %v2279 = vpop.f32.mrb[0].mxu0
      %2280 = vmatprep.mubr.f32.mxu0 0.0
      %2281 = vmatmul.mubr.f32.gmra.mrb[0].mxu0 %v2203
      %v2282 = vpop.f32.mrb[0].mxu0
      %v2283 = vadd.f32 %v2196, %v2282
      %v2284 = vpop.f32.mrb[0].mxu0
      %2285 = vmatprep.mubr.f32.mxu0 0.0
      %2286 = vmatmul.mubr.f32.gmra.mrb[0].mxu0 %v2206
      %v2287 = vpop.f32.mrb[0].mxu0
      %v2288 = vadd.f32 %v2196, %v2287
      %v2289 = vpop.f32.mrb[0].mxu0
      %2290 = vmatprep.mubr.f32.mxu0 0.0
      %2291 = vmatmul.mubr.f32.gmra.mrb[0].mxu0 %v2209
      %v2292 = vpop.f32.mrb[0].mxu0
      %v2293 = vadd.f32 %v2196, %v2292
      %v2294 = vpop.f32.mrb[0].mxu0
      %2295 = vdwg.mxu0
      %v2296 = vmax.f32 %v2278, 0.0
      %v2297 = vmax.f32 %v2283, 0.0
      %v2298 = vmax.f32 %v2288, 0.0
      %v2299 = vmax.f32 %v2293, 0.0
      %v2300 = vld [vmem:[%s17] sm:$0xff]
      %v2301 = vld [vmem:[%s17 + $0x8] sm:$0xff]
      %v2302 = vld [vmem:[%s17 + $0x10] sm:$0xff]
      %v2303 = vld [vmem:[%s17 + $0x18] sm:$0xff]
      %v2304 = vld [vmem:[%s18] sm:$0x1]
      %v2306 = vlaneseq
      %v2307 = vshrl.u32 %v2306, 7
      %v2308 = vsub.s32 0, %v2307
      %v2309 = vrot.slane %v2304, %v2308
      %v2312 = vsel %vm895, %v2296, 0
      %v2315 = vsel %vm895, %v2297, 0
      %v2318 = vsel %vm895, %v2298, 0
      %v2321 = vsel %vm895, %v2299, 0
      %2323 = vmatprep.subr.mxu0 0.0
      %2324 = vmatpush1.msra.mxu0 %v2300
      %2325 = vmatprep.subr.mxu0 0.0
      %2326 = vmatpush1.msra.mxu0 %v2301
      %2327 = vmatprep.subr.mxu0 0.0
      %2328 = vmatpush1.msra.mxu0 %v2302
      %2329 = vmatprep.subr.mxu0 0.0
      %2330 = vmatpush1.msra.mxu0 %v2303
      %2331 = vmatprep.subr.mxu0 0.0
      %2332 = vmatpush1.msra.mxu0 0.0
      %2333 = vmatprep.subr.mxu0 0.0
      %2334 = vmatpush1.msra.mxu0 0.0
      %2335 = vmatprep.subr.mxu0 0.0
      %2336 = vmatpush1.msra.mxu0 0.0
      %2337 = vmatprep.subr.mxu0 0.0
      %2338 = vmatpush1.msra.mxu0 0.0
      %2339 = vmatprep.subr.mxu0 0.0
      %2340 = vmatpush1.msra.mxu0 0.0
      %2341 = vmatprep.subr.mxu0 0.0
      %2342 = vmatpush1.msra.mxu0 0.0
      %2343 = vmatprep.subr.mxu0 0.0
      %2344 = vmatpush1.msra.mxu0 0.0
      %2345 = vmatprep.subr.mxu0 0.0
      %2346 = vmatpush1.msra.mxu0 0.0
      %2347 = vmatprep.subr.mxu0 0.0
      %2348 = vmatpush1.msra.mxu0 0.0
      %2349 = vmatprep.subr.mxu0 0.0
      %2350 = vmatpush1.msra.mxu0 0.0
      %2351 = vmatprep.subr.mxu0 0.0
      %2352 = vmatpush1.msra.mxu0 0.0
      %2353 = vmatprep.subr.mxu0 0.0
      %2354 = vmatpush1.msra.mxu0 0.0
      %2355 = vmatprep.subr.mxu0 0.0
      %2356 = vmatpush1.msra.mxu0 0.0
      %2357 = vmatprep.subr.mxu0 0.0
      %2358 = vmatpush1.msra.mxu0 0.0
      %2359 = vmatprep.subr.mxu0 0.0
      %2360 = vmatpush1.msra.mxu0 0.0
      %2361 = vmatprep.subr.mxu0 0.0
      %2362 = vmatpush1.msra.mxu0 0.0
      %2363 = vmatprep.subr.mxu0 0.0
      %2364 = vmatpush1.msra.mxu0 0.0
      %2365 = vmatprep.subr.mxu0 0.0
      %2366 = vmatpush1.msra.mxu0 0.0
      %2367 = vmatprep.subr.mxu0 0.0
      %2368 = vmatpush1.msra.mxu0 0.0
      %2369 = vmatprep.subr.mxu0 0.0
      %2370 = vmatpush1.msra.mxu0 0.0
      %2371 = vmatprep.subr.mxu0 0.0
      %2372 = vmatpush1.msra.mxu0 0.0
      %2373 = vmatprep.subr.mxu0 0.0
      %2374 = vmatpush1.msra.mxu0 0.0
      %2375 = vmatprep.subr.mxu0 0.0
      %2376 = vmatpush1.msra.mxu0 0.0
      %2377 = vmatprep.subr.mxu0 0.0
      %2378 = vmatpush1.msra.mxu0 0.0
      %2379 = vmatprep.subr.mxu0 0.0
      %2380 = vmatpush1.msra.mxu0 0.0
      %2381 = vmatprep.subr.mxu0 0.0
      %2382 = vmatpush1.msra.mxu0 0.0
      %2383 = vmatprep.subr.mxu0 0.0
      %2384 = vmatpush1.msra.mxu0 0.0
      %2385 = vmatprep.subr.mxu0 0.0
      %2386 = vmatpush1.msra.mxu0 0.0
      %2387 = vmatprep.mubr.f32.mxu0 0.0
      %2388 = vmatmul.mubr.f32.gmra.mrb[0].mxu0 %v2312
      %v2389 = vpop.f32.mrb[0].mxu0
      %v2390 = vadd.f32 %v2309, %v2389
      %v2391 = vpop.f32.mrb[0].mxu0
      %2392 = vmatprep.mubr.f32.mxu0 0.0
      %2393 = vmatmul.mubr.f32.gmra.mrb[0].mxu0 %v2315
      %v2394 = vpop.f32.mrb[0].mxu0
      %v2395 = vadd.f32 %v2309, %v2394
      %v2396 = vpop.f32.mrb[0].mxu0
      %2397 = vmatprep.mubr.f32.mxu0 0.0
      %2398 = vmatmul.mubr.f32.gmra.mrb[0].mxu0 %v2318
      %v2399 = vpop.f32.mrb[0].mxu0
      %v2400 = vadd.f32 %v2309, %v2399
      %v2401 = vpop.f32.mrb[0].mxu0
      %2402 = vmatprep.mubr.f32.mxu0 0.0
      %2403 = vmatmul.mubr.f32.gmra.mrb[0].mxu0 %v2321
      %v2404 = vpop.f32.mrb[0].mxu0
      %v2405 = vadd.f32 %v2309, %v2404
      %v2406 = vpop.f32.mrb[0].mxu0
      %2407 = vdwg.mxu0
      %2410 = vrot.lane.b32.xlu0 %v2400, 8
      %v2411 = vpop.permute.xlu0 %2410
      %2412 = vrot.lane.b32.xlu0 %v2405, 8
      %v2413 = vpop.permute.xlu0 %2412
      %v2416 = vsel %vm1571, %v2390, %v2411
      %v2417 = vsel %vm1571, %v2395, %v2413
      %v2418 = vmul.f32 %v1435, %v2416
      %v2419 = vmul.f32 %v1440, %v2417
      %v2420 = vand.u32 2147483647, %v2418
      %v2421 = vand.u32 2147483647, %v2419
      %v2422 = vsub.f32 0.0, %v2420
      %v2423 = vsub.f32 0.0, %v2421
      %v2424 = vmul.f32 %v2422, 1.442695
      %v2425 = vpow.pop %v2424
      %v2426 = vmul.f32 %v2423, 1.442695
      %v2427 = vpow.pop %v2426
      %v2428 = vadd.f32 %v2425, 1.0
      %v2429 = vadd.f32 %v2427, 1.0
      %v2430 = vrcp.pop %v2428
      %v2431 = vrcp.pop %v2429
      %vm2432 = vcmp.ge.f32.partialorder %v2418, 0.0
      %vm2433 = vcmp.ge.f32.partialorder %v2419, 0.0
      %v2434 = vmul.f32 %v2425, %v2430
      %v2435 = vmul.f32 %v2427, %v2431
      %v2436 = vsel %vm2432, %v2430, %v2434
      %v2437 = vsel %vm2433, %v2431, %v2435
      %2438 = vst.msk [vmem:[%s725] sm:$0xff] %vm779, %v2436
      %2439 = vst.msk [vmem:[%s725 + $0x8] sm:$0xff] %vm779, %v2437
      %2442 = vrot.lane.b32.xlu0 %v2390, 120
      %v2443 = vpop.permute.xlu0 %2442
      %2444 = vrot.lane.b32.xlu0 %v2395, 120
      %v2445 = vpop.permute.xlu0 %2444
      %v2448 = vsel %vm1571, %v2443, %v2400
      %v2449 = vsel %vm1571, %v2445, %v2405
      %2450 = vrot.lane.b32.xlu0 %v2390, 112
      %v2451 = vpop.permute.xlu0 %2450
      %2452 = vrot.lane.b32.xlu0 %v2395, 112
      %v2453 = vpop.permute.xlu0 %2452
      %2456 = vrot.lane.b32.xlu0 %v2400, 120
      %v2457 = vpop.permute.xlu0 %2456
      %2458 = vrot.lane.b32.xlu0 %v2405, 120
      %v2459 = vpop.permute.xlu0 %2458
      %v2462 = vsel %vm1571, %v2451, %v2457
      %v2463 = vsel %vm1571, %v2453, %v2459
      %2464 = vrot.lane.b32.xlu0 %v2390, 104
      %v2465 = vpop.permute.xlu0 %2464
      %2466 = vrot.lane.b32.xlu0 %v2395, 104
      %v2467 = vpop.permute.xlu0 %2466
      %2470 = vrot.lane.b32.xlu0 %v2400, 112
      %v2471 = vpop.permute.xlu0 %2470
      %2472 = vrot.lane.b32.xlu0 %v2405, 112
      %v2473 = vpop.permute.xlu0 %2472
      %v2476 = vsel %vm1571, %v2465, %v2471
      %v2477 = vsel %vm1571, %v2467, %v2473
      %2478 = vrot.lane.b32.xlu0 %v2390, 96
      %v2479 = vpop.permute.xlu0 %2478
      %2480 = vrot.lane.b32.xlu0 %v2395, 96
      %v2481 = vpop.permute.xlu0 %2480
      %2484 = vrot.lane.b32.xlu0 %v2400, 104
      %v2485 = vpop.permute.xlu0 %2484
      %2486 = vrot.lane.b32.xlu0 %v2405, 104
      %v2487 = vpop.permute.xlu0 %2486
      %v2490 = vsel %vm1571, %v2479, %v2485
      %v2491 = vsel %vm1571, %v2481, %v2487
      %v2492 = vmul.f32 %v1445, %v2448
      %v2493 = vmul.f32 %v1450, %v2449
      %v2494 = vmul.f32 %v1455, %v2462
      %v2495 = vmul.f32 %v1460, %v2463
      %v2496 = vmul.f32 %v1465, %v2476
      %v2497 = vmul.f32 %v1470, %v2477
      %v2498 = vmul.f32 %v1475, %v2490
      %v2499 = vmul.f32 %v1480, %v2491
      %v2500 = vmax.f32 %v2492, %v2494
      %v2501 = vmax.f32 %v2493, %v2495
      %v2502 = vmax.f32 %v2500, %v2496
      %v2503 = vmax.f32 %v2501, %v2497
      %v2504 = vmax.f32 %v2502, %v2498
      %v2505 = vmax.f32 %v2503, %v2499
      %v2506 = vsub.f32 %v2492, %v2504
      %v2507 = vsub.f32 %v2493, %v2505
      %v2508 = vmul.f32 %v2506, 1.442695
      %v2509 = vpow.pop %v2508
      %v2510 = vmul.f32 %v2507, 1.442695
      %v2511 = vpow.pop %v2510
      %v2512 = vsub.f32 %v2494, %v2504
      %v2513 = vsub.f32 %v2495, %v2505
      %v2514 = vmul.f32 %v2512, 1.442695
      %v2515 = vpow.pop %v2514
      %v2516 = vmul.f32 %v2513, 1.442695
      %v2517 = vpow.pop %v2516
      %v2518 = vsub.f32 %v2496, %v2504
      %v2519 = vsub.f32 %v2497, %v2505
      %v2520 = vmul.f32 %v2518, 1.442695
      %v2521 = vpow.pop %v2520
      %v2522 = vmul.f32 %v2519, 1.442695
      %v2523 = vpow.pop %v2522
      %v2524 = vsub.f32 %v2498, %v2504
      %v2525 = vsub.f32 %v2499, %v2505
      %v2526 = vmul.f32 %v2524, 1.442695
      %v2527 = vpow.pop %v2526
      %v2528 = vmul.f32 %v2525, 1.442695
      %v2529 = vpow.pop %v2528
      %v2530 = vadd.f32 %v2509, %v2515
      %v2531 = vadd.f32 %v2511, %v2517
      %v2532 = vadd.f32 %v2530, %v2521
      %v2533 = vadd.f32 %v2531, %v2523
      %v2534 = vadd.f32 %v2532, %v2527
      %v2535 = vadd.f32 %v2533, %v2529
      %v2536 = vrcp.pop %v2534
      %v2537 = vrcp.pop %v2535
      %v2538 = vmul.f32 %v2509, %v2536
      %v2539 = vmul.f32 %v2511, %v2537
      %v2540 = vmul.f32 %v2515, %v2536
      %v2541 = vmul.f32 %v2517, %v2537
      %v2542 = vmul.f32 %v2521, %v2536
      %v2543 = vmul.f32 %v2523, %v2537
      %v2544 = vmul.f32 %v2527, %v2536
      %v2545 = vmul.f32 %v2529, %v2537
      %2546 = vst.msk [vmem:[%s730] sm:$0xff] %vm779, %v2538
      %2547 = vst.msk [vmem:[%s730 + $0x8] sm:$0xff] %vm779, %v2539
      %2548 = vst.msk [vmem:[%s730 + $0x10] sm:$0xff] %vm779, %v2540
      %2549 = vst.msk [vmem:[%s730 + $0x18] sm:$0xff] %vm779, %v2541
      %2550 = vst.msk [vmem:[%s730 + $0x20] sm:$0xff] %vm779, %v2542
      %2551 = vst.msk [vmem:[%s730 + $0x28] sm:$0xff] %vm779, %v2543
      %2552 = vst.msk [vmem:[%s730 + $0x30] sm:$0xff] %vm779, %v2544
      %2553 = vst.msk [vmem:[%s730 + $0x38] sm:$0xff] %vm779, %v2545
      %2554 = vrot.lane.b32.xlu0 %v2390, 88
      %v2555 = vpop.permute.xlu0 %2554
      %2556 = vrot.lane.b32.xlu0 %v2395, 88
      %v2557 = vpop.permute.xlu0 %2556
      %2560 = vrot.lane.b32.xlu0 %v2400, 96
      %v2561 = vpop.permute.xlu0 %2560
      %2562 = vrot.lane.b32.xlu0 %v2405, 96
      %v2563 = vpop.permute.xlu0 %2562
      %v2566 = vsel %vm1571, %v2555, %v2561
      %v2567 = vsel %vm1571, %v2557, %v2563
      %2568 = vrot.lane.b32.xlu0 %v2390, 80
      %v2569 = vpop.permute.xlu0 %2568
      %2570 = vrot.lane.b32.xlu0 %v2395, 80
      %v2571 = vpop.permute.xlu0 %2570
      %2574 = vrot.lane.b32.xlu0 %v2400, 88
      %v2575 = vpop.permute.xlu0 %2574
      %2576 = vrot.lane.b32.xlu0 %v2405, 88
      %v2577 = vpop.permute.xlu0 %2576
      %v2580 = vsel %vm1571, %v2569, %v2575
      %v2581 = vsel %vm1571, %v2571, %v2577
      %2582 = vrot.lane.b32.xlu0 %v2390, 72
      %v2583 = vpop.permute.xlu0 %2582
      %2584 = vrot.lane.b32.xlu0 %v2395, 72
      %v2585 = vpop.permute.xlu0 %2584
      %2588 = vrot.lane.b32.xlu0 %v2400, 80
      %v2589 = vpop.permute.xlu0 %2588
      %2590 = vrot.lane.b32.xlu0 %v2405, 80
      %v2591 = vpop.permute.xlu0 %2590
      %v2594 = vsel %vm1571, %v2583, %v2589
      %v2595 = vsel %vm1571, %v2585, %v2591
      %2596 = vrot.lane.b32.xlu0 %v2390, 64
      %v2597 = vpop.permute.xlu0 %2596
      %2598 = vrot.lane.b32.xlu0 %v2395, 64
      %v2599 = vpop.permute.xlu0 %2598
      %2602 = vrot.lane.b32.xlu0 %v2400, 72
      %v2603 = vpop.permute.xlu0 %2602
      %2604 = vrot.lane.b32.xlu0 %v2405, 72
      %v2605 = vpop.permute.xlu0 %2604
      %v2608 = vsel %vm1571, %v2597, %v2603
      %v2609 = vsel %vm1571, %v2599, %v2605
      %v2610 = vmul.f32 %v1485, %v2566
      %v2611 = vmul.f32 %v1490, %v2567
      %v2612 = vmul.f32 %v1495, %v2580
      %v2613 = vmul.f32 %v1500, %v2581
      %v2614 = vmul.f32 %v1505, %v2594
      %v2615 = vmul.f32 %v1510, %v2595
      %v2616 = vmul.f32 %v1515, %v2608
      %v2617 = vmul.f32 %v1520, %v2609
      %2618 = vst.msk [vmem:[%s735] sm:$0xff] %vm779, %v2610
      %2619 = vst.msk [vmem:[%s735 + $0x8] sm:$0xff] %vm779, %v2611
      %2620 = vst.msk [vmem:[%s735 + $0x10] sm:$0xff] %vm779, %v2612
      %2621 = vst.msk [vmem:[%s735 + $0x18] sm:$0xff] %vm779, %v2613
      %2622 = vst.msk [vmem:[%s735 + $0x20] sm:$0xff] %vm779, %v2614
      %2623 = vst.msk [vmem:[%s735 + $0x28] sm:$0xff] %vm779, %v2615
      %2624 = vst.msk [vmem:[%s735 + $0x30] sm:$0xff] %vm779, %v2616
      %2625 = vst.msk [vmem:[%s735 + $0x38] sm:$0xff] %vm779, %v2617
      %2626 = vrot.lane.b32.xlu0 %v2390, 56
      %v2627 = vpop.permute.xlu0 %2626
      %2628 = vrot.lane.b32.xlu0 %v2395, 56
      %v2629 = vpop.permute.xlu0 %2628
      %2632 = vrot.lane.b32.xlu0 %v2400, 64
      %v2633 = vpop.permute.xlu0 %2632
      %2634 = vrot.lane.b32.xlu0 %v2405, 64
      %v2635 = vpop.permute.xlu0 %2634
      %v2638 = vsel %vm1571, %v2627, %v2633
      %v2639 = vsel %vm1571, %v2629, %v2635
      %2640 = vrot.lane.b32.xlu0 %v2390, 48
      %v2641 = vpop.permute.xlu0 %2640
      %2642 = vrot.lane.b32.xlu0 %v2395, 48
      %v2643 = vpop.permute.xlu0 %2642
      %2646 = vrot.lane.b32.xlu0 %v2400, 56
      %v2647 = vpop.permute.xlu0 %2646
      %2648 = vrot.lane.b32.xlu0 %v2405, 56
      %v2649 = vpop.permute.xlu0 %2648
      %v2652 = vsel %vm1571, %v2641, %v2647
      %v2653 = vsel %vm1571, %v2643, %v2649
      %2654 = vrot.lane.b32.xlu0 %v2390, 40
      %v2655 = vpop.permute.xlu0 %2654
      %2656 = vrot.lane.b32.xlu0 %v2395, 40
      %v2657 = vpop.permute.xlu0 %2656
      %2660 = vrot.lane.b32.xlu0 %v2400, 48
      %v2661 = vpop.permute.xlu0 %2660
      %2662 = vrot.lane.b32.xlu0 %v2405, 48
      %v2663 = vpop.permute.xlu0 %2662
      %v2666 = vsel %vm1571, %v2655, %v2661
      %v2667 = vsel %vm1571, %v2657, %v2663
      %2668 = vrot.lane.b32.xlu0 %v2390, 32
      %v2669 = vpop.permute.xlu0 %2668
      %2670 = vrot.lane.b32.xlu0 %v2395, 32
      %v2671 = vpop.permute.xlu0 %2670
      %2674 = vrot.lane.b32.xlu0 %v2400, 40
      %v2675 = vpop.permute.xlu0 %2674
      %2676 = vrot.lane.b32.xlu0 %v2405, 40
      %v2677 = vpop.permute.xlu0 %2676
      %v2680 = vsel %vm1571, %v2669, %v2675
      %v2681 = vsel %vm1571, %v2671, %v2677
      %v2682 = vmax.f32 %v1525, 0.0
      %v2683 = vmax.f32 %v1530, 0.0
      %v2684 = vand.u32 2147483647, %v1525
      %v2685 = vand.u32 2147483647, %v1530
      %v2686 = vsub.f32 0.0, %v2684
      %v2687 = vsub.f32 0.0, %v2685
      %v2688 = vmul.f32 %v2686, 1.442695
      %v2689 = vpow.pop %v2688
      %v2690 = vmul.f32 %v2687, 1.442695
      %v2691 = vpow.pop %v2690
      %v2692 = vadd.f32 %v2689, 1.0
      %v2693 = vlog2.pop %v2692
      %v2694 = vmul.f32 %v2693, 0.6931472
      %v2695 = vmul.f32 -0.5, %v2689
      %v2696 = vadd.f32 %v2695, 1.0
      %v2697 = vmul.f32 %v2696, %v2689
      %v2698 = vand.u32 2147483647, %v2689
      %vm2699 = vcmp.lt.f32.partialorder %v2698, 0.0004427343
      %v2700 = vsel %vm2699, %v2697, %v2694
      %v2701 = vadd.f32 %v2691, 1.0
      %v2702 = vlog2.pop %v2701
      %v2703 = vmul.f32 %v2702, 0.6931472
      %v2704 = vmul.f32 -0.5, %v2691
      %v2705 = vadd.f32 %v2704, 1.0
      %v2706 = vmul.f32 %v2705, %v2691
      %v2707 = vand.u32 2147483647, %v2691
      %vm2708 = vcmp.lt.f32.partialorder %v2707, 0.0004427343
      %v2709 = vsel %vm2708, %v2706, %v2703
      %v2710 = vadd.f32 %v2682, %v2700
      %v2711 = vadd.f32 %v2683, %v2709
      %v2712 = vmax.f32 %v2638, 0.0
      %v2713 = vmax.f32 %v2639, 0.0
      %v2714 = vand.u32 2147483647, %v2638
      %v2715 = vand.u32 2147483647, %v2639
      %v2716 = vsub.f32 0.0, %v2714
      %v2717 = vsub.f32 0.0, %v2715
      %v2718 = vmul.f32 %v2716, 1.442695
      %v2719 = vpow.pop %v2718
      %v2720 = vmul.f32 %v2717, 1.442695
      %v2721 = vpow.pop %v2720
      %v2722 = vadd.f32 %v2719, 1.0
      %v2723 = vlog2.pop %v2722
      %v2724 = vmul.f32 %v2723, 0.6931472
      %v2725 = vmul.f32 -0.5, %v2719
      %v2726 = vadd.f32 %v2725, 1.0
      %v2727 = vmul.f32 %v2726, %v2719
      %v2728 = vand.u32 2147483647, %v2719
      %vm2729 = vcmp.lt.f32.partialorder %v2728, 0.0004427343
      %v2730 = vsel %vm2729, %v2727, %v2724
      %v2731 = vadd.f32 %v2721, 1.0
      %v2732 = vlog2.pop %v2731
      %v2733 = vmul.f32 %v2732, 0.6931472
      %v2734 = vmul.f32 -0.5, %v2721
      %v2735 = vadd.f32 %v2734, 1.0
      %v2736 = vmul.f32 %v2735, %v2721
      %v2737 = vand.u32 2147483647, %v2721
      %vm2738 = vcmp.lt.f32.partialorder %v2737, 0.0004427343
      %v2739 = vsel %vm2738, %v2736, %v2733
      %v2740 = vadd.f32 %v2712, %v2730
      %v2741 = vadd.f32 %v2713, %v2739
      %v2742 = vmul.f32 %v2710, %v2740
      %v2743 = vmul.f32 %v2711, %v2741
      %v2744 = vadd.f32 %v2742, 1e-06
      %v2745 = vadd.f32 %v2743, 1e-06
      %v2746 = vmax.f32 %v1535, 0.0
      %v2747 = vmax.f32 %v1540, 0.0
      %v2748 = vand.u32 2147483647, %v1535
      %v2749 = vand.u32 2147483647, %v1540
      %v2750 = vsub.f32 0.0, %v2748
      %v2751 = vsub.f32 0.0, %v2749
      %v2752 = vmul.f32 %v2750, 1.442695
      %v2753 = vpow.pop %v2752
      %v2754 = vmul.f32 %v2751, 1.442695
      %v2755 = vpow.pop %v2754
      %v2756 = vadd.f32 %v2753, 1.0
      %v2757 = vlog2.pop %v2756
      %v2758 = vmul.f32 %v2757, 0.6931472
      %v2759 = vmul.f32 -0.5, %v2753
      %v2760 = vadd.f32 %v2759, 1.0
      %v2761 = vmul.f32 %v2760, %v2753
      %v2762 = vand.u32 2147483647, %v2753
      %vm2763 = vcmp.lt.f32.partialorder %v2762, 0.0004427343
      %v2764 = vsel %vm2763, %v2761, %v2758
      %v2765 = vadd.f32 %v2755, 1.0
      %v2766 = vlog2.pop %v2765
      %v2767 = vmul.f32 %v2766, 0.6931472
      %v2768 = vmul.f32 -0.5, %v2755
      %v2769 = vadd.f32 %v2768, 1.0
      %v2770 = vmul.f32 %v2769, %v2755
      %v2771 = vand.u32 2147483647, %v2755
      %vm2772 = vcmp.lt.f32.partialorder %v2771, 0.0004427343
      %v2773 = vsel %vm2772, %v2770, %v2767
      %v2774 = vadd.f32 %v2746, %v2764
      %v2775 = vadd.f32 %v2747, %v2773
      %v2776 = vmax.f32 %v2652, 0.0
      %v2777 = vmax.f32 %v2653, 0.0
      %v2778 = vand.u32 2147483647, %v2652
      %v2779 = vand.u32 2147483647, %v2653
      %v2780 = vsub.f32 0.0, %v2778
      %v2781 = vsub.f32 0.0, %v2779
      %v2782 = vmul.f32 %v2780, 1.442695
      %v2783 = vpow.pop %v2782
      %v2784 = vmul.f32 %v2781, 1.442695
      %v2785 = vpow.pop %v2784
      %v2786 = vadd.f32 %v2783, 1.0
      %v2787 = vlog2.pop %v2786
      %v2788 = vmul.f32 %v2787, 0.6931472
      %v2789 = vmul.f32 -0.5, %v2783
      %v2790 = vadd.f32 %v2789, 1.0
      %v2791 = vmul.f32 %v2790, %v2783
      %v2792 = vand.u32 2147483647, %v2783
      %vm2793 = vcmp.lt.f32.partialorder %v2792, 0.0004427343
      %v2794 = vsel %vm2793, %v2791, %v2788
      %v2795 = vadd.f32 %v2785, 1.0
      %v2796 = vlog2.pop %v2795
      %v2797 = vmul.f32 %v2796, 0.6931472
      %v2798 = vmul.f32 -0.5, %v2785
      %v2799 = vadd.f32 %v2798, 1.0
      %v2800 = vmul.f32 %v2799, %v2785
      %v2801 = vand.u32 2147483647, %v2785
      %vm2802 = vcmp.lt.f32.partialorder %v2801, 0.0004427343
      %v2803 = vsel %vm2802, %v2800, %v2797
      %v2804 = vadd.f32 %v2776, %v2794
      %v2805 = vadd.f32 %v2777, %v2803
      %v2806 = vmul.f32 %v2774, %v2804
      %v2807 = vmul.f32 %v2775, %v2805
      %v2808 = vadd.f32 %v2806, 1e-06
      %v2809 = vadd.f32 %v2807, 1e-06
      %v2810 = vmax.f32 %v1545, 0.0
      %v2811 = vmax.f32 %v1550, 0.0
      %v2812 = vand.u32 2147483647, %v1545
      %v2813 = vand.u32 2147483647, %v1550
      %v2814 = vsub.f32 0.0, %v2812
      %v2815 = vsub.f32 0.0, %v2813
      %v2816 = vmul.f32 %v2814, 1.442695
      %v2817 = vpow.pop %v2816
      %v2818 = vmul.f32 %v2815, 1.442695
      %v2819 = vpow.pop %v2818
      %v2820 = vadd.f32 %v2817, 1.0
      %v2821 = vlog2.pop %v2820
      %v2822 = vmul.f32 %v2821, 0.6931472
      %v2823 = vmul.f32 -0.5, %v2817
      %v2824 = vadd.f32 %v2823, 1.0
      %v2825 = vmul.f32 %v2824, %v2817
      %v2826 = vand.u32 2147483647, %v2817
      %vm2827 = vcmp.lt.f32.partialorder %v2826, 0.0004427343
      %v2828 = vsel %vm2827, %v2825, %v2822
      %v2829 = vadd.f32 %v2819, 1.0
      %v2830 = vlog2.pop %v2829
      %v2831 = vmul.f32 %v2830, 0.6931472
      %v2832 = vmul.f32 -0.5, %v2819
      %v2833 = vadd.f32 %v2832, 1.0
      %v2834 = vmul.f32 %v2833, %v2819
      %v2835 = vand.u32 2147483647, %v2819
      %vm2836 = vcmp.lt.f32.partialorder %v2835, 0.0004427343
      %v2837 = vsel %vm2836, %v2834, %v2831
      %v2838 = vadd.f32 %v2810, %v2828
      %v2839 = vadd.f32 %v2811, %v2837
      %v2840 = vmax.f32 %v2666, 0.0
      %v2841 = vmax.f32 %v2667, 0.0
      %v2842 = vand.u32 2147483647, %v2666
      %v2843 = vand.u32 2147483647, %v2667
      %v2844 = vsub.f32 0.0, %v2842
      %v2845 = vsub.f32 0.0, %v2843
      %v2846 = vmul.f32 %v2844, 1.442695
      %v2847 = vpow.pop %v2846
      %v2848 = vmul.f32 %v2845, 1.442695
      %v2849 = vpow.pop %v2848
      %v2850 = vadd.f32 %v2847, 1.0
      %v2851 = vlog2.pop %v2850
      %v2852 = vmul.f32 %v2851, 0.6931472
      %v2853 = vmul.f32 -0.5, %v2847
      %v2854 = vadd.f32 %v2853, 1.0
      %v2855 = vmul.f32 %v2854, %v2847
      %v2856 = vand.u32 2147483647, %v2847
      %vm2857 = vcmp.lt.f32.partialorder %v2856, 0.0004427343
      %v2858 = vsel %vm2857, %v2855, %v2852
      %v2859 = vadd.f32 %v2849, 1.0
      %v2860 = vlog2.pop %v2859
      %v2861 = vmul.f32 %v2860, 0.6931472
      %v2862 = vmul.f32 -0.5, %v2849
      %v2863 = vadd.f32 %v2862, 1.0
      %v2864 = vmul.f32 %v2863, %v2849
      %v2865 = vand.u32 2147483647, %v2849
      %vm2866 = vcmp.lt.f32.partialorder %v2865, 0.0004427343
      %v2867 = vsel %vm2866, %v2864, %v2861
      %v2868 = vadd.f32 %v2840, %v2858
      %v2869 = vadd.f32 %v2841, %v2867
      %v2870 = vmul.f32 %v2838, %v2868
      %v2871 = vmul.f32 %v2839, %v2869
      %v2872 = vadd.f32 %v2870, 1e-06
      %v2873 = vadd.f32 %v2871, 1e-06
      %v2874 = vmax.f32 %v1555, 0.0
      %v2875 = vmax.f32 %v1560, 0.0
      %v2876 = vand.u32 2147483647, %v1555
      %v2877 = vand.u32 2147483647, %v1560
      %v2878 = vsub.f32 0.0, %v2876
      %v2879 = vsub.f32 0.0, %v2877
      %v2880 = vmul.f32 %v2878, 1.442695
      %v2881 = vpow.pop %v2880
      %v2882 = vmul.f32 %v2879, 1.442695
      %v2883 = vpow.pop %v2882
      %v2884 = vadd.f32 %v2881, 1.0
      %v2885 = vlog2.pop %v2884
      %v2886 = vmul.f32 %v2885, 0.6931472
      %v2887 = vmul.f32 -0.5, %v2881
      %v2888 = vadd.f32 %v2887, 1.0
      %v2889 = vmul.f32 %v2888, %v2881
      %v2890 = vand.u32 2147483647, %v2881
      %vm2891 = vcmp.lt.f32.partialorder %v2890, 0.0004427343
      %v2892 = vsel %vm2891, %v2889, %v2886
      %v2893 = vadd.f32 %v2883, 1.0
      %v2894 = vlog2.pop %v2893
      %v2895 = vmul.f32 %v2894, 0.6931472
      %v2896 = vmul.f32 -0.5, %v2883
      %v2897 = vadd.f32 %v2896, 1.0
      %v2898 = vmul.f32 %v2897, %v2883
      %v2899 = vand.u32 2147483647, %v2883
      %vm2900 = vcmp.lt.f32.partialorder %v2899, 0.0004427343
      %v2901 = vsel %vm2900, %v2898, %v2895
      %v2902 = vadd.f32 %v2874, %v2892
      %v2903 = vadd.f32 %v2875, %v2901
      %v2904 = vmax.f32 %v2680, 0.0
      %v2905 = vmax.f32 %v2681, 0.0
      %v2906 = vand.u32 2147483647, %v2680
      %v2907 = vand.u32 2147483647, %v2681
      %v2908 = vsub.f32 0.0, %v2906
      %v2909 = vsub.f32 0.0, %v2907
      %v2910 = vmul.f32 %v2908, 1.442695
      %v2911 = vpow.pop %v2910
      %v2912 = vmul.f32 %v2909, 1.442695
      %v2913 = vpow.pop %v2912
      %v2914 = vadd.f32 %v2911, 1.0
      %v2915 = vlog2.pop %v2914
      %v2916 = vmul.f32 %v2915, 0.6931472
      %v2917 = vmul.f32 -0.5, %v2911
      %v2918 = vadd.f32 %v2917, 1.0
      %v2919 = vmul.f32 %v2918, %v2911
      %v2920 = vand.u32 2147483647, %v2911
      %vm2921 = vcmp.lt.f32.partialorder %v2920, 0.0004427343
      %v2922 = vsel %vm2921, %v2919, %v2916
      %v2923 = vadd.f32 %v2913, 1.0
      %v2924 = vlog2.pop %v2923
      %v2925 = vmul.f32 %v2924, 0.6931472
      %v2926 = vmul.f32 -0.5, %v2913
      %v2927 = vadd.f32 %v2926, 1.0
      %v2928 = vmul.f32 %v2927, %v2913
      %v2929 = vand.u32 2147483647, %v2913
      %vm2930 = vcmp.lt.f32.partialorder %v2929, 0.0004427343
      %v2931 = vsel %vm2930, %v2928, %v2925
      %v2932 = vadd.f32 %v2904, %v2922
      %v2933 = vadd.f32 %v2905, %v2931
      %v2934 = vmul.f32 %v2902, %v2932
      %v2935 = vmul.f32 %v2903, %v2933
      %v2936 = vadd.f32 %v2934, 1e-06
      %v2937 = vadd.f32 %v2935, 1e-06
      %2938 = vst.msk [vmem:[%s740] sm:$0xff] %vm779, %v2744
      %2939 = vst.msk [vmem:[%s740 + $0x8] sm:$0xff] %vm779, %v2745
      %2940 = vst.msk [vmem:[%s740 + $0x10] sm:$0xff] %vm779, %v2808
      %2941 = vst.msk [vmem:[%s740 + $0x18] sm:$0xff] %vm779, %v2809
      %2942 = vst.msk [vmem:[%s740 + $0x20] sm:$0xff] %vm779, %v2872
      %2943 = vst.msk [vmem:[%s740 + $0x28] sm:$0xff] %vm779, %v2873
      %2944 = vst.msk [vmem:[%s740 + $0x30] sm:$0xff] %vm779, %v2936
      %2945 = vst.msk [vmem:[%s740 + $0x38] sm:$0xff] %vm779, %v2937
      %p2946 = scmp.lt.s32.totalorder %s34, 1
      %s2947 = scalar_select %p2946, %s34, 1
      %s2948 = smul.addr %s2947, 2
      %s2949 = smul.addr %s2948, 8
      %s2950 = scalar_lea.vmem %s19, %s2949
      %p2951 = scmp.lt.s32.totalorder %s34, 1
      %s2952 = scalar_select %p2951, %s34, 1
      %s2953 = smul.addr %s2952, 8
      %s2954 = smul.addr %s2953, 8
      %s2955 = scalar_lea.vmem %s20, %s2954
      %p2956 = scmp.lt.s32.totalorder %s34, 1
      %s2957 = scalar_select %p2956, %s34, 1
      %s2958 = smul.addr %s2957, 8
      %s2959 = smul.addr %s2958, 8
      %s2960 = scalar_lea.vmem %s21, %s2959
      %p2961 = scmp.lt.s32.totalorder %s34, 1
      %s2962 = scalar_select %p2961, %s34, 1
      %s2963 = smul.addr %s2962, 8
      %s2964 = smul.addr %s2963, 8
      %s2965 = scalar_lea.vmem %s22, %s2964
      // Predicated region
      $region97: #{st_mdn_forward.1} parent=95 // pred_check
        %p2966 = pneg %p461
      $region98: #{st_mdn_forward.1} parent=95 // pred_check_branch
        %2968 = sbr.rel (%p2966) target = $region100
      $region99: #{st_mdn_forward.1} parent=95 // pred_region
        _
      $region100: #{st_mdn_forward.1} parent=95 // pred_fallthru
        _
      // Predicated region
      $region101: #{st_mdn_forward.1} parent=95 // pred_check
        %p2969 = pneg %p487
      $region102: #{st_mdn_forward.1} parent=95 // pred_check_branch
        %2971 = sbr.rel (%p2969) target = $region104
      $region103: #{st_mdn_forward.1} parent=95 // pred_region
        _
      $region104: #{st_mdn_forward.1} parent=95 // pred_fallthru
        _
      // Predicated region
      $region105: #{st_mdn_forward.1} parent=95 // pred_check
        %p2972 = pneg %p513
      $region106: #{st_mdn_forward.1} parent=95 // pred_check_branch
        %2974 = sbr.rel (%p2972) target = $region108
      $region107: #{st_mdn_forward.1} parent=95 // pred_region
        _
      $region108: #{st_mdn_forward.1} parent=95 // pred_fallthru
        _
      // Predicated region
      $region109: #{st_mdn_forward.1} parent=95 // pred_check
        %p2975 = pneg %p539
      $region110: #{st_mdn_forward.1} parent=95 // pred_check_branch
        %2977 = sbr.rel (%p2975) target = $region112
      $region111: #{st_mdn_forward.1} parent=95 // pred_region
        _
      $region112: #{st_mdn_forward.1} parent=95 // pred_fallthru
        _
    $region96: #{st_mdn_forward.1} parent=5 // pred_fallthru
      _
    %p2978 = scmp.le.s32.totalorder 2, %s29
    // Predicated region
    $region113: #{st_mdn_forward.1} parent=5 // pred_check
      %p2979 = pneg %p2978
    $region114: #{st_mdn_forward.1} parent=5 // pred_check_branch
      %2981 = sbr.rel (%p2979) target = $region116
    $region115: #{st_mdn_forward.1} parent=5 // pred_region
      %s2982 = ssub.s32 %s29, 2
      // Predicated region
      $region117: #{st_mdn_forward.1} parent=115 // pred_check
        %p2983 = pneg %p467
      $region118: #{st_mdn_forward.1} parent=115 // pred_check_branch
        %2985 = sbr.rel (%p2983) target = $region120
      $region119: #{st_mdn_forward.1} parent=115 // pred_region
        %p2986 = scmp.lt.s32.totalorder %s35, 1
        %s2987 = scalar_select %p2986, %s35, 1
        %s2988 = smul.addr %s2987, 2
        %s2989 = smul.addr %s2988, 8
        %s2990 = scalar_lea.vmem %s19, %s2989
      $region120: #{st_mdn_forward.1} parent=115 // pred_fallthru
        _
      // Predicated region
      $region121: #{st_mdn_forward.1} parent=115 // pred_check
        %p2991 = pneg %p493
      $region122: #{st_mdn_forward.1} parent=115 // pred_check_branch
        %2993 = sbr.rel (%p2991) target = $region124
      $region123: #{st_mdn_forward.1} parent=115 // pred_region
        %p2994 = scmp.lt.s32.totalorder %s35, 1
        %s2995 = scalar_select %p2994, %s35, 1
        %s2996 = smul.addr %s2995, 8
        %s2997 = smul.addr %s2996, 8
        %s2998 = scalar_lea.vmem %s20, %s2997
      $region124: #{st_mdn_forward.1} parent=115 // pred_fallthru
        _
      // Predicated region
      $region125: #{st_mdn_forward.1} parent=115 // pred_check
        %p2999 = pneg %p519
      $region126: #{st_mdn_forward.1} parent=115 // pred_check_branch
        %3001 = sbr.rel (%p2999) target = $region128
      $region127: #{st_mdn_forward.1} parent=115 // pred_region
        %p3002 = scmp.lt.s32.totalorder %s35, 1
        %s3003 = scalar_select %p3002, %s35, 1
        %s3004 = smul.addr %s3003, 8
        %s3005 = smul.addr %s3004, 8
        %s3006 = scalar_lea.vmem %s21, %s3005
      $region128: #{st_mdn_forward.1} parent=115 // pred_fallthru
        _
      // Predicated region
      $region129: #{st_mdn_forward.1} parent=115 // pred_check
        %p3007 = pneg %p545
      $region130: #{st_mdn_forward.1} parent=115 // pred_check_branch
        %3009 = sbr.rel (%p3007) target = $region132
      $region131: #{st_mdn_forward.1} parent=115 // pred_region
        %p3010 = scmp.lt.s32.totalorder %s35, 1
        %s3011 = scalar_select %p3010, %s35, 1
        %s3012 = smul.addr %s3011, 8
        %s3013 = smul.addr %s3012, 8
        %s3014 = scalar_lea.vmem %s22, %s3013
      $region132: #{st_mdn_forward.1} parent=115 // pred_fallthru
        _
    $region116: #{st_mdn_forward.1} parent=5 // pred_fallthru
      _
  $region6: #{st_mdn_forward.1} parent=0 // loop_footer
    %s33 = sadd.s32 1, %s29
  $region7: #{st_mdn_forward.1} parent=0 // loop_footer_branch
    %28 = sbr.rel target = $region3
  $region8: #{st_mdn_forward.1} parent=0 // loop_exit
    _

</llo_original>
